<compile_context>
chip_gen: v6e
topology: v6e:2x2x1
jax: 0.10.0
libtpu: 0.0.40
codegen_flags: <defaults>
</compile_context>

<pallas_src>
import jax
import jax.numpy as jnp
from jax.experimental import pallas as pl
from jax.experimental.pallas import tpu as pltpu

F_IN = 29
F_PAD = 32                      # input feature dim padded for sublane alignment
H1, H2, H3, H4 = 256, 128, 64, 32

# lane-aligned offsets inside the packed constants slab (1, CONST_W)
_OFF_B1, _OFF_C2, _OFF_C3, _OFF_C4, _OFF_WFC, _OFF_BFC = 0, 256, 384, 512, 640, 768
CONST_W = 896


def gnn_forward_kernel(A_ref, P_ref, x_ref, w1_ref, w2_ref, w3_ref, w4_ref,
                       c_ref, o_ref):
  f32, bf16 = jnp.float32, jnp.bfloat16
  A = A_ref[...]                 # (M, M) bf16, block-diag over packed graphs
  x = x_ref[...]                 # (M, F_PAD) bf16 (zero-padded 29 -> 32)

  # conv1 (29 -> 256, F_out > F_in): (A@x) @ W1r + x @ W1s + b1, relu.
  # W1r / W1s are stacked in one resident (2*F_PAD, 256) slab.
  agg = jnp.dot(A, x, preferred_element_type=f32).astype(bf16)
  h = (jnp.dot(agg, w1_ref[0:F_PAD, :], preferred_element_type=f32)
       + jnp.dot(x, w1_ref[F_PAD:2 * F_PAD, :], preferred_element_type=f32)
       + c_ref[:, _OFF_B1:_OFF_B1 + H1])
  h = jnp.maximum(h, 0.0)

  def conv_shrink(h, w_ref, c, fout):
    # One fused dot against [Wr' | Ws'] (eval-BN scale folded in), split the
    # result, then reassociate (F_out < F_in):  A @ (h @ Wr') + h @ Ws' + c'.
    hw = jnp.dot(h.astype(bf16), w_ref[...], preferred_element_type=f32)
    hr = hw[:, :fout].astype(bf16)
    hs = hw[:, fout:]
    out = jnp.dot(A, hr, preferred_element_type=f32) + hs + c
    return jnp.maximum(out, 0.0)

  # conv2->bn1->relu ; conv3->bn2->relu ; conv4->bn3->relu (dropout = identity)
  h = conv_shrink(h, w2_ref, c_ref[:, _OFF_C2:_OFF_C2 + H2], H2)
  h = conv_shrink(h, w3_ref, c_ref[:, _OFF_C3:_OFF_C3 + H3], H3)
  h = conv_shrink(h, w4_ref, c_ref[:, _OFF_C4:_OFF_C4 + H4], H4)

  # global_mean_pool over the packed graphs (block-diag pooling matrix).
  g = jnp.dot(P_ref[...], h.astype(bf16), preferred_element_type=f32)  # (GB,32)

  # Final FC on the VPU (broadcast-mul + lane reduce) + sigmoid on the EUP.
  wfc = c_ref[:, _OFF_WFC:_OFF_WFC + H4]          # (1, 32)
  bfc = c_ref[:, _OFF_BFC:_OFF_BFC + 1]           # (1, 1)
  logits = jnp.sum(g * wfc, axis=-1, keepdims=True) + bfc
  o_ref[...] = pl.reciprocal(1.0 + jnp.exp(-logits), approx=True)


def fold_params(params):
  """Fold bias + eval-BatchNorm into the GraphConv weights, fuse Wr/Ws per
  layer into one slab (bf16), and pack all row-vector constants into a single
  lane-aligned f32 slab."""
  (w1r, w1s, b1, w2r, w2s, b2, bn1s, bn1t, w3r, w3s, b3, bn2s, bn2t,
   w4r, w4s, b4, bn3s, bn3t, wfc, bfc) = params
  bf16 = jnp.bfloat16

  pad = ((0, F_PAD - w1r.shape[0]), (0, 0))
  w1_cat = jnp.concatenate([jnp.pad(w1r, pad), jnp.pad(w1s, pad)],
                           axis=0).astype(bf16)                   # (64, 256)

  # (conv(h)) * s + t == A @ (h @ (Wr*s)) + h @ (Ws*s) + (b*s + t)
  def fold(wr, ws, b, s, t):
    return jnp.concatenate([wr * s, ws * s], axis=1).astype(bf16), b * s + t

  w2_cat, c2 = fold(w2r, w2s, b2, bn1s, bn1t)                     # (256,256),(1,128)
  w3_cat, c3 = fold(w3r, w3s, b3, bn2s, bn2t)                     # (128,128),(1,64)
  w4_cat, c4 = fold(w4r, w4s, b4, bn3s, bn3t)                     # (64,64), (1,32)

  consts = jnp.zeros((1, CONST_W), jnp.float32)
  consts = consts.at[:, _OFF_B1:_OFF_B1 + H1].set(b1)
  consts = consts.at[:, _OFF_C2:_OFF_C2 + H2].set(c2)
  consts = consts.at[:, _OFF_C3:_OFF_C3 + H3].set(c3)
  consts = consts.at[:, _OFF_C4:_OFF_C4 + H4].set(c4)
  consts = consts.at[:, _OFF_WFC:_OFF_WFC + H4].set(wfc.T)
  consts = consts.at[:, _OFF_BFC:_OFF_BFC + 1].set(bfc)
  return w1_cat, w2_cat, w3_cat, w4_cat, consts


def gnn_forward(A, P, x, params, graphs_per_step=4):
  """A: (G, N, N) dense adjacency, P: (G, B, N) mean-pool, x: (G, N, 29).

  graphs_per_step: 4 -> M=256 rows/step (v6e/v7x MXU width); use 2 on v5e."""
  G, N, _ = A.shape
  B = P.shape[1]
  Gs = min(graphs_per_step, G)
  while G % Gs:                       # fall back to a divisor of G
    Gs -= 1
  S, M, GB = G // Gs, Gs * N, Gs * B

  w1_cat, w2_cat, w3_cat, w4_cat, consts = fold_params(params)

  bf16 = jnp.bfloat16
  x_pack = jnp.pad(x, ((0, 0), (0, 0), (0, F_PAD - x.shape[-1]))
                   ).astype(bf16).reshape(S, M, F_PAD)

  # Block-diagonal packing of Gs graphs per grid step (fills the MXU M-dim
  # without mixing nodes across graphs).
  eye = jnp.eye(Gs, dtype=jnp.float32)
  A_bd = (A.reshape(S, Gs, N, N)[:, :, :, None, :]
          * eye[None, :, None, :, None]).reshape(S, M, M).astype(bf16)
  P_bd = (P.reshape(S, Gs, B, N)[:, :, :, None, :]
          * eye[None, :, None, :, None]).reshape(S, GB, M).astype(bf16)

  def per_step_spec(arr):
    nd = arr.ndim
    return pl.BlockSpec((None,) + arr.shape[1:],
                        lambda s, _nd=nd: (s,) + (0,) * (_nd - 1))

  def resident_spec(arr):
    nd = arr.ndim
    return pl.BlockSpec(arr.shape, lambda s, _nd=nd: (0,) * _nd)

  weights = (w1_cat, w2_cat, w3_cat, w4_cat, consts)
  out = pl.pallas_call(
      gnn_forward_kernel,
      out_shape=jax.ShapeDtypeStruct((S, GB, 1), jnp.float32),
      grid=(S,),
      in_specs=[per_step_spec(A_bd), per_step_spec(P_bd), per_step_spec(x_pack)]
               + [resident_spec(w) for w in weights],
      out_specs=pl.BlockSpec((None, GB, 1), lambda s: (s, 0, 0)),
      compiler_params=pltpu.CompilerParams(
          dimension_semantics=("parallel",)),
  )(A_bd, P_bd, x_pack, *weights)
  return out.reshape(G, B, 1)


def make_params(key):
  """Deterministic synthetic parameters matching the module's shapes."""
  ks = jax.random.split(key, 32)
  it = iter(range(32))

  def lin(kin, kout):
    return (jax.random.normal(ks[next(it)], (kin, kout), jnp.float32)
            * (1.0 / jnp.sqrt(jnp.float32(kin))))

  def bias(kout):
    return jax.random.normal(ks[next(it)], (1, kout), jnp.float32) * 0.01

  def bn(dim, eps=1e-5):
    gamma = jax.random.uniform(ks[next(it)], (1, dim), jnp.float32, 0.5, 1.5)
    beta = jax.random.normal(ks[next(it)], (1, dim), jnp.float32) * 0.1
    rmean = jax.random.normal(ks[next(it)], (1, dim), jnp.float32) * 0.1
    rvar = jax.random.uniform(ks[next(it)], (1, dim), jnp.float32, 0.5, 1.5)
    scale = gamma / jnp.sqrt(rvar + eps)
    shift = beta - rmean * scale
    return scale, shift

  w1r, w1s, b1 = lin(29, 256), lin(29, 256), bias(256)
  w2r, w2s, b2 = lin(256, 128), lin(256, 128), bias(128)
  bn1s, bn1t = bn(128)
  w3r, w3s, b3 = lin(128, 64), lin(128, 64), bias(64)
  bn2s, bn2t = bn(64)
  w4r, w4s, b4 = lin(64, 32), lin(64, 32), bias(32)
  bn3s, bn3t = bn(32)
  wfc, bfc = lin(32, 1), bias(1)
  # TODO(synk): conv5 (32->16) and bn4 exist in __init__ but are unused in forward.
  return (w1r, w1s, b1,
          w2r, w2s, b2, bn1s, bn1t,
          w3r, w3s, b3, bn2s, bn2t,
          w4r, w4s, b4, bn3s, bn3t,
          wfc, bfc)


def reference_forward(A, P, x, params):
  """All-f32 pure-JAX reference of the eval-mode PyTorch forward."""
  (w1r, w1s, b1, w2r, w2s, b2, bn1s, bn1t, w3r, w3s, b3, bn2s, bn2t,
   w4r, w4s, b4, bn3s, bn3t, wfc, bfc) = params

  def single(Ag, Pg, xg):
    def conv(h, wr, ws, b):
      return (Ag @ h) @ wr + b + h @ ws
    h = jax.nn.relu(conv(xg, w1r, w1s, b1))
    h = jax.nn.relu(conv(h, w2r, w2s, b2) * bn1s + bn1t)
    h = jax.nn.relu(conv(h, w3r, w3s, b3) * bn2s + bn2t)
    h = jax.nn.relu(conv(h, w4r, w4s, b4) * bn3s + bn3t)
    g = Pg @ h
    return jax.nn.sigmoid(g @ wfc + bfc)

  return jax.vmap(single)(A, P, x)


if __name__ == "__main__":
  key = jax.random.PRNGKey(0)
  G, N, B, E = 8, 64, 2, 256   # G graphs, N nodes, B pooled graphs/instance, E edges
  ks = jax.random.split(key, 6)

  # Synthetic graph data (= data.x, data.edge_index, data.edge_attr, data.batch)
  x = jax.random.normal(ks[0], (G, N, F_IN), jnp.float32)
  src = jax.random.randint(ks[1], (G, E), 0, N)           # edge_index[0]
  dst = jax.random.randint(ks[2], (G, E), 0, N)           # edge_index[1]
  edge_weight = jax.random.uniform(ks[3], (G, E), jnp.float32, 0.1, 1.0)
  batch = jnp.concatenate([jnp.zeros(N // 2, jnp.int32),
                           jnp.ones(N - N // 2, jnp.int32)])

  # Glue: dense adjacency (scatter-add of edge weights) and mean-pool matrix.
  def build_adj(s, d, w):
    return jnp.zeros((N, N), jnp.float32).at[d, s].add(w)
  A = jax.vmap(build_adj)(src, dst, edge_weight)
  onehot = (batch[None, :] == jnp.arange(B)[:, None]).astype(jnp.float32)
  Pm = onehot / jnp.maximum(onehot.sum(axis=1, keepdims=True), 1.0)
  P = jnp.tile(Pm[None], (G, 1, 1))

  params = make_params(ks[4])

  out = jax.block_until_ready(gnn_forward(A, P, x, params))
  ref = reference_forward(A, P, x, params)

  assert out.shape == (G, B, 1), out.shape
  assert bool(jnp.all(jnp.isfinite(out)))
  # bf16 MXU operands (f32 accumulate) vs. all-f32 reference: allow ~1e-2
  # absolute drift on the post-sigmoid outputs.
  assert bool(jnp.allclose(out, ref, atol=2e-2)), (out, ref)
  print("KERNEL_OK")
</pallas_src>

<mosaic_0001>
module attributes {stable_mosaic.version = 11 : i64} {
  func.func @gnn_forward_kernel(%arg0: i32, %arg1: memref<1x256x256xbf16, #tpu.memory_space<vmem>>, %arg2: memref<1x8x256xbf16, #tpu.memory_space<vmem>>, %arg3: memref<1x256x32xbf16, #tpu.memory_space<vmem>>, %arg4: memref<64x256xbf16, #tpu.memory_space<vmem>>, %arg5: memref<256x256xbf16, #tpu.memory_space<vmem>>, %arg6: memref<128x128xbf16, #tpu.memory_space<vmem>>, %arg7: memref<64x64xbf16, #tpu.memory_space<vmem>>, %arg8: memref<1x896xf32, #tpu.memory_space<vmem>>, %arg9: memref<1x8x1xf32, #tpu.memory_space<vmem>>) attributes {dimension_semantics = [#tpu.dimension_semantics<parallel>], iteration_bounds = array<i64: 2>, scalar_prefetch = 0 : i64, scratch_operands = 0 : i64, tpu.core_type = #tpu.core_type<tc>, window_params = [{transform_indices = @transform_0, window_bounds = array<i64: 1, 256, 256>}, {transform_indices = @transform_1, window_bounds = array<i64: 1, 8, 256>}, {transform_indices = @transform_2, window_bounds = array<i64: 1, 256, 32>}, {pipeline_mode = #tpu.pipeline_mode<synchronous>, transform_indices = @transform_3, window_bounds = array<i64: 64, 256>}, {pipeline_mode = #tpu.pipeline_mode<synchronous>, transform_indices = @transform_4, window_bounds = array<i64: 256, 256>}, {pipeline_mode = #tpu.pipeline_mode<synchronous>, transform_indices = @transform_5, window_bounds = array<i64: 128, 128>}, {pipeline_mode = #tpu.pipeline_mode<synchronous>, transform_indices = @transform_6, window_bounds = array<i64: 64, 64>}, {pipeline_mode = #tpu.pipeline_mode<synchronous>, transform_indices = @transform_7, window_bounds = array<i64: 1, 896>}, {transform_indices = @transform_8, window_bounds = array<i64: 1, 8, 1>}]} {
    %c0 = arith.constant 0 : index
    %c0_0 = arith.constant 0 : index
    %c0_1 = arith.constant 0 : index
    %0 = vector.load %arg1[%c0, %c0_0, %c0_1] : memref<1x256x256xbf16, #tpu.memory_space<vmem>>, vector<1x256x256xbf16>
    %1 = vector.shape_cast %0 : vector<1x256x256xbf16> to vector<256x256xbf16>
    %c0_2 = arith.constant 0 : index
    %c0_3 = arith.constant 0 : index
    %c0_4 = arith.constant 0 : index
    %2 = vector.load %arg3[%c0_2, %c0_3, %c0_4] : memref<1x256x32xbf16, #tpu.memory_space<vmem>>, vector<1x256x32xbf16>
    %3 = vector.shape_cast %2 : vector<1x256x32xbf16> to vector<256x32xbf16>
    %cst = arith.constant dense<0.000000e+00> : vector<256x32xf32>
    %4 = tpu.matmul %1, %3, %cst {dimension_numbers = #tpu.dot_dimension_numbers<[1], [0], [0], [1], [0, 0, 1, 1], [], []>} : vector<256x256xbf16>, vector<256x32xbf16>, vector<256x32xf32> -> vector<256x32xf32>
    %5 = arith.truncf %4 : vector<256x32xf32> to vector<256x32xbf16>
    %c0_5 = arith.constant 0 : index
    %c0_6 = arith.constant 0 : index
    %6 = vector.load %arg4[%c0_5, %c0_6] : memref<64x256xbf16, #tpu.memory_space<vmem>>, vector<32x256xbf16>
    %cst_7 = arith.constant dense<0.000000e+00> : vector<256x256xf32>
    %7 = tpu.matmul %5, %6, %cst_7 {dimension_numbers = #tpu.dot_dimension_numbers<[1], [0], [0], [1], [0, 0, 1, 1], [], []>} : vector<256x32xbf16>, vector<32x256xbf16>, vector<256x256xf32> -> vector<256x256xf32>
    %c32 = arith.constant 32 : index
    %c0_8 = arith.constant 0 : index
    %8 = vector.load %arg4[%c32, %c0_8] : memref<64x256xbf16, #tpu.memory_space<vmem>>, vector<32x256xbf16>
    %cst_9 = arith.constant dense<0.000000e+00> : vector<256x256xf32>
    %9 = tpu.matmul %3, %8, %cst_9 {dimension_numbers = #tpu.dot_dimension_numbers<[1], [0], [0], [1], [0, 0, 1, 1], [], []>} : vector<256x32xbf16>, vector<32x256xbf16>, vector<256x256xf32> -> vector<256x256xf32>
    %10 = arith.addf %7, %9 : vector<256x256xf32>
    %c0_10 = arith.constant 0 : index
    %c0_11 = arith.constant 0 : index
    %11 = vector.load %arg8[%c0_10, %c0_11] : memref<1x896xf32, #tpu.memory_space<vmem>>, vector<1x256xf32>
    %12 = vector.broadcast %11 : vector<1x256xf32> to vector<256x256xf32>
    %13 = arith.addf %10, %12 : vector<256x256xf32>
    %cst_12 = arith.constant 0.000000e+00 : f32
    %14 = vector.broadcast %cst_12 : f32 to vector<256x256xf32>
    %15 = arith.maximumf %13, %14 : vector<256x256xf32>
    %c0_13 = arith.constant 0 : index
    %c256 = arith.constant 256 : index
    %16 = vector.load %arg8[%c0_13, %c256] : memref<1x896xf32, #tpu.memory_space<vmem>>, vector<1x128xf32>
    %17 = arith.truncf %15 : vector<256x256xf32> to vector<256x256xbf16>
    %c0_14 = arith.constant 0 : index
    %c0_15 = arith.constant 0 : index
    %18 = vector.load %arg5[%c0_14, %c0_15] : memref<256x256xbf16, #tpu.memory_space<vmem>>, vector<256x256xbf16>
    %cst_16 = arith.constant dense<0.000000e+00> : vector<256x256xf32>
    %19 = tpu.matmul %17, %18, %cst_16 {dimension_numbers = #tpu.dot_dimension_numbers<[1], [0], [0], [1], [0, 0, 1, 1], [], []>} : vector<256x256xbf16>, vector<256x256xbf16>, vector<256x256xf32> -> vector<256x256xf32>
    %20 = vector.extract_strided_slice %19 {offsets = [0, 0], sizes = [256, 128], strides = [1, 1]} : vector<256x256xf32> to vector<256x128xf32>
    %21 = arith.truncf %20 : vector<256x128xf32> to vector<256x128xbf16>
    %22 = vector.extract_strided_slice %19 {offsets = [0, 128], sizes = [256, 128], strides = [1, 1]} : vector<256x256xf32> to vector<256x128xf32>
    %cst_17 = arith.constant dense<0.000000e+00> : vector<256x128xf32>
    %23 = tpu.matmul %1, %21, %cst_17 {dimension_numbers = #tpu.dot_dimension_numbers<[1], [0], [0], [1], [0, 0, 1, 1], [], []>} : vector<256x256xbf16>, vector<256x128xbf16>, vector<256x128xf32> -> vector<256x128xf32>
    %24 = arith.addf %23, %22 : vector<256x128xf32>
    %25 = vector.broadcast %16 : vector<1x128xf32> to vector<256x128xf32>
    %26 = arith.addf %24, %25 : vector<256x128xf32>
    %cst_18 = arith.constant 0.000000e+00 : f32
    %27 = vector.broadcast %cst_18 : f32 to vector<256x128xf32>
    %28 = arith.maximumf %26, %27 : vector<256x128xf32>
    %c0_19 = arith.constant 0 : index
    %c384 = arith.constant 384 : index
    %29 = vector.load %arg8[%c0_19, %c384] : memref<1x896xf32, #tpu.memory_space<vmem>>, vector<1x64xf32>
    %30 = arith.truncf %28 : vector<256x128xf32> to vector<256x128xbf16>
    %c0_20 = arith.constant 0 : index
    %c0_21 = arith.constant 0 : index
    %31 = vector.load %arg6[%c0_20, %c0_21] : memref<128x128xbf16, #tpu.memory_space<vmem>>, vector<128x128xbf16>
    %cst_22 = arith.constant dense<0.000000e+00> : vector<256x128xf32>
    %32 = tpu.matmul %30, %31, %cst_22 {dimension_numbers = #tpu.dot_dimension_numbers<[1], [0], [0], [1], [0, 0, 1, 1], [], []>} : vector<256x128xbf16>, vector<128x128xbf16>, vector<256x128xf32> -> vector<256x128xf32>
    %33 = vector.extract_strided_slice %32 {offsets = [0, 0], sizes = [256, 64], strides = [1, 1]} : vector<256x128xf32> to vector<256x64xf32>
    %34 = arith.truncf %33 : vector<256x64xf32> to vector<256x64xbf16>
    %35 = vector.extract_strided_slice %32 {offsets = [0, 64], sizes = [256, 64], strides = [1, 1]} : vector<256x128xf32> to vector<256x64xf32>
    %cst_23 = arith.constant dense<0.000000e+00> : vector<256x64xf32>
    %36 = tpu.matmul %1, %34, %cst_23 {dimension_numbers = #tpu.dot_dimension_numbers<[1], [0], [0], [1], [0, 0, 1, 1], [], []>} : vector<256x256xbf16>, vector<256x64xbf16>, vector<256x64xf32> -> vector<256x64xf32>
    %37 = arith.addf %36, %35 : vector<256x64xf32>
    %38 = vector.broadcast %29 : vector<1x64xf32> to vector<256x64xf32>
    %39 = arith.addf %37, %38 : vector<256x64xf32>
    %cst_24 = arith.constant 0.000000e+00 : f32
    %40 = vector.broadcast %cst_24 : f32 to vector<256x64xf32>
    %41 = arith.maximumf %39, %40 : vector<256x64xf32>
    %c0_25 = arith.constant 0 : index
    %c512 = arith.constant 512 : index
    %42 = vector.load %arg8[%c0_25, %c512] : memref<1x896xf32, #tpu.memory_space<vmem>>, vector<1x32xf32>
    %43 = arith.truncf %41 : vector<256x64xf32> to vector<256x64xbf16>
    %c0_26 = arith.constant 0 : index
    %c0_27 = arith.constant 0 : index
    %44 = vector.load %arg7[%c0_26, %c0_27] : memref<64x64xbf16, #tpu.memory_space<vmem>>, vector<64x64xbf16>
    %cst_28 = arith.constant dense<0.000000e+00> : vector<256x64xf32>
    %45 = tpu.matmul %43, %44, %cst_28 {dimension_numbers = #tpu.dot_dimension_numbers<[1], [0], [0], [1], [0, 0, 1, 1], [], []>} : vector<256x64xbf16>, vector<64x64xbf16>, vector<256x64xf32> -> vector<256x64xf32>
    %46 = vector.extract_strided_slice %45 {offsets = [0, 0], sizes = [256, 32], strides = [1, 1]} : vector<256x64xf32> to vector<256x32xf32>
    %47 = arith.truncf %46 : vector<256x32xf32> to vector<256x32xbf16>
    %48 = vector.extract_strided_slice %45 {offsets = [0, 32], sizes = [256, 32], strides = [1, 1]} : vector<256x64xf32> to vector<256x32xf32>
    %cst_29 = arith.constant dense<0.000000e+00> : vector<256x32xf32>
    %49 = tpu.matmul %1, %47, %cst_29 {dimension_numbers = #tpu.dot_dimension_numbers<[1], [0], [0], [1], [0, 0, 1, 1], [], []>} : vector<256x256xbf16>, vector<256x32xbf16>, vector<256x32xf32> -> vector<256x32xf32>
    %50 = arith.addf %49, %48 : vector<256x32xf32>
    %51 = vector.broadcast %42 : vector<1x32xf32> to vector<256x32xf32>
    %52 = arith.addf %50, %51 : vector<256x32xf32>
    %cst_30 = arith.constant 0.000000e+00 : f32
    %53 = vector.broadcast %cst_30 : f32 to vector<256x32xf32>
    %54 = arith.maximumf %52, %53 : vector<256x32xf32>
    %c0_31 = arith.constant 0 : index
    %c0_32 = arith.constant 0 : index
    %c0_33 = arith.constant 0 : index
    %55 = vector.load %arg2[%c0_31, %c0_32, %c0_33] : memref<1x8x256xbf16, #tpu.memory_space<vmem>>, vector<1x8x256xbf16>
    %56 = vector.shape_cast %55 : vector<1x8x256xbf16> to vector<8x256xbf16>
    %57 = arith.truncf %54 : vector<256x32xf32> to vector<256x32xbf16>
    %cst_34 = arith.constant dense<0.000000e+00> : vector<8x32xf32>
    %58 = tpu.matmul %56, %57, %cst_34 {dimension_numbers = #tpu.dot_dimension_numbers<[1], [0], [0], [1], [0, 0, 1, 1], [], []>} : vector<8x256xbf16>, vector<256x32xbf16>, vector<8x32xf32> -> vector<8x32xf32>
    %c0_35 = arith.constant 0 : index
    %c640 = arith.constant 640 : index
    %59 = vector.load %arg8[%c0_35, %c640] : memref<1x896xf32, #tpu.memory_space<vmem>>, vector<1x32xf32>
    %c0_36 = arith.constant 0 : index
    %c768 = arith.constant 768 : index
    %60 = vector.load %arg8[%c0_36, %c768] : memref<1x896xf32, #tpu.memory_space<vmem>>, vector<1x1xf32>
    %61 = vector.broadcast %59 : vector<1x32xf32> to vector<8x32xf32>
    %62 = arith.mulf %58, %61 : vector<8x32xf32>
    %cst_37 = arith.constant dense<0.000000e+00> : vector<8xf32>
    %63 = vector.multi_reduction <add>, %62, %cst_37 [1] : vector<8x32xf32> to vector<8xf32>
    %64 = vector.shape_cast %63 : vector<8xf32> to vector<8x1xf32>
    %65 = vector.broadcast %60 : vector<1x1xf32> to vector<8x1xf32>
    %66 = arith.addf %64, %65 : vector<8x1xf32>
    %cst_38 = arith.constant 0.000000e+00 : f32
    %67 = vector.broadcast %cst_38 : f32 to vector<8x1xf32>
    %68 = arith.subf %67, %66 : vector<8x1xf32>
    %69 = math.exp %68 : vector<8x1xf32>
    %cst_39 = arith.constant 1.000000e+00 : f32
    %70 = vector.broadcast %cst_39 : f32 to vector<8x1xf32>
    %71 = arith.addf %70, %69 : vector<8x1xf32>
    %72 = tpu.reciprocal %71 {approx = true} : vector<8x1xf32> -> vector<8x1xf32>
    %c0_40 = arith.constant 0 : index
    %c0_41 = arith.constant 0 : index
    %c0_42 = arith.constant 0 : index
    %73 = vector.load %arg9[%c0_40, %c0_41, %c0_42] : memref<1x8x1xf32, #tpu.memory_space<vmem>>, vector<1x8x1xf32>
    %74 = vector.shape_cast %73 : vector<1x8x1xf32> to vector<8x1xf32>
    %75 = vector.shape_cast %72 : vector<8x1xf32> to vector<1x8x1xf32>
    tpu.vector_store %arg9[%c0_40, %c0_41, %c0_42], %75 {strides = array<i32>} : memref<1x8x1xf32, #tpu.memory_space<vmem>>, vector<1x8x1xf32>,
    return
  }
  func.func @transform_0(%arg0: i32) -> (i32, i32, i32) {
    %c0_i32 = arith.constant 0 : i32
    %c0_i32_0 = arith.constant 0 : i32
    %c0_i32_1 = arith.constant 0 : i32
    return %arg0, %c0_i32, %c0_i32_0 : i32, i32, i32
  }
  func.func @transform_1(%arg0: i32) -> (i32, i32, i32) {
    %c0_i32 = arith.constant 0 : i32
    %c0_i32_0 = arith.constant 0 : i32
    %c0_i32_1 = arith.constant 0 : i32
    return %arg0, %c0_i32, %c0_i32_0 : i32, i32, i32
  }
  func.func @transform_2(%arg0: i32) -> (i32, i32, i32) {
    %c0_i32 = arith.constant 0 : i32
    %c0_i32_0 = arith.constant 0 : i32
    %c0_i32_1 = arith.constant 0 : i32
    return %arg0, %c0_i32, %c0_i32_0 : i32, i32, i32
  }
  func.func @transform_3(%arg0: i32) -> (i32, i32) {
    %c0_i32 = arith.constant 0 : i32
    %c0_i32_0 = arith.constant 0 : i32
    %c0_i32_1 = arith.constant 0 : i32
    return %c0_i32, %c0_i32_0 : i32, i32
  }
  func.func @transform_4(%arg0: i32) -> (i32, i32) {
    %c0_i32 = arith.constant 0 : i32
    %c0_i32_0 = arith.constant 0 : i32
    %c0_i32_1 = arith.constant 0 : i32
    return %c0_i32, %c0_i32_0 : i32, i32
  }
  func.func @transform_5(%arg0: i32) -> (i32, i32) {
    %c0_i32 = arith.constant 0 : i32
    %c0_i32_0 = arith.constant 0 : i32
    %c0_i32_1 = arith.constant 0 : i32
    return %c0_i32, %c0_i32_0 : i32, i32
  }
  func.func @transform_6(%arg0: i32) -> (i32, i32) {
    %c0_i32 = arith.constant 0 : i32
    %c0_i32_0 = arith.constant 0 : i32
    %c0_i32_1 = arith.constant 0 : i32
    return %c0_i32, %c0_i32_0 : i32, i32
  }
  func.func @transform_7(%arg0: i32) -> (i32, i32) {
    %c0_i32 = arith.constant 0 : i32
    %c0_i32_0 = arith.constant 0 : i32
    %c0_i32_1 = arith.constant 0 : i32
    return %c0_i32, %c0_i32_0 : i32, i32
  }
  func.func @transform_8(%arg0: i32) -> (i32, i32, i32) {
    %c0_i32 = arith.constant 0 : i32
    %c0_i32_0 = arith.constant 0 : i32
    %c0_i32_1 = arith.constant 0 : i32
    return %arg0, %c0_i32, %c0_i32_0 : i32, i32, i32
  }
}

</mosaic_0001>

<llo_original>
// kernel: tpu_custom_call.1
$region0: #{tpu_custom_call.1}
  #allocation0 [shape = 'u32[]', space=smem, size = 0x4, offset = 0x4, fixed_abs, tag = 'smem constant byte address 0x4 - core index']
  #allocation1 [shape = 'u32[144,128]{1,0:T(1,128)}', space=vmem, size = 0x12000, scoped, tag = 'internal scratch']
  %s0 = inlined_call_operand.hbm [shape: bf16[2,256,256], index: 0, kind: input, shape index: {}]
  %s1 = inlined_call_operand.hbm [shape: bf16[2,8,256], index: 1, kind: input, shape index: {}]
  %s2 = inlined_call_operand.vmem [shape: bf16[2,256,32], index: 2, kind: input, shape index: {}]
  %s3 = inlined_call_operand.vmem [shape: bf16[64,256], index: 3, kind: input, shape index: {}]
  %s4 = inlined_call_operand.vmem [shape: bf16[256,256], index: 4, kind: input, shape index: {}]
  %s5 = inlined_call_operand.hbm [shape: bf16[128,128], index: 5, kind: input, shape index: {}]
  %s6 = inlined_call_operand.hbm [shape: bf16[64,64], index: 6, kind: input, shape index: {}]
  %s7 = inlined_call_operand.vmem [shape: f32[1,896], index: 7, kind: input, shape index: {}]
  %s8 = inlined_call_operand.vmem [shape: f32[2,8,1], index: 8, kind: output, shape index: {}]
  %s9 = sld [smem:[#allocation0]]
  $region81: #{tpu_custom_call.1} parent=0
    _
  %s11 = ssub.s32 1, %s9
  %s12 = scalar_select 0, %s11, %s9
  $region1: #{tpu_custom_call.1} parent=0
    #allocation2 [shape = 'u8[262144]{0}', space=vmem, size = 0x40000, scoped, tag = 'input window, operand 0']
    #allocation3 [shape = 's32[2]{0}', space=sflag, size = 0x8, scoped, tag = 'scoped memory for tpu_custom_call.1']
    #allocation4 [shape = 'u8[8192]{0}', space=vmem, size = 0x2000, scoped, tag = 'input window, operand 1']
    #allocation5 [shape = 's32[2]{0}', space=sflag, size = 0x8, scoped, tag = 'scoped memory for tpu_custom_call.1']
    #allocation6 [shape = 'u8[32768]{0}', space=vmem, size = 0x8000, scoped, tag = 'input window, operand 5, single buffered']
    #allocation7 [shape = 'u8[16384]{0}', space=vmem, size = 0x4000, scoped, tag = 'input window, operand 6, single buffered']
    #allocation8 [shape = 's32[1]{0}', space=sflag, size = 0x4, scoped, tag = 'scoped memory for tpu_custom_call.1']
    %13 = vsyncpa [#allocation3], 0
    %s14 = scalar_lea.sflag [#allocation3], 1
    %15 = vsyncpa %s14, 0
    %16 = vsyncpa [#allocation5], 0
    %s17 = scalar_lea.sflag [#allocation5], 1
    %18 = vsyncpa %s17, 0
    %19 = vsyncpa [#allocation8], 0
    loop: start=0, step=1, limit=4
    $region2: #{tpu_custom_call.1} parent=1 // loop_pre_header
      _
    $region3: #{tpu_custom_call.1} parent=1 // loop_header
      %s21 = sphi 0, %s25
      %p22 = scmp.ge.s32.totalorder %s21, 4
      %s31 = sphi 0, %s33
      %s34 = sphi 0, %s31
      %s35 = sphi 0, %s34
      %s51 = sphi 0, %s35
      %s57 = sphi 0, %s59
      %s60 = sphi 0, %s57
      %s61 = sphi 0, %s60
      %s77 = sphi 0, %s61
      %s83 = sphi 0, %s85
      %s86 = sphi 0, %s83
      %s87 = sphi 0, %s86
      %s103 = sphi 0, %s87
      %s107 = sphi 0, %s107
      %s109 = sphi 0, %s107
      %s110 = sphi 0, %s109
      %s124 = sphi 0, %s110
      %s128 = sphi 0, %s128
      %s130 = sphi 0, %s128
      %s131 = sphi 0, %s130
      %s145 = sphi 0, %s131
      %s149 = sphi 0, %s149
      %s151 = sphi 0, %s149
      %s152 = sphi 0, %s151
      %s166 = sphi 0, %s152
      %s170 = sphi 0, %s170
      %s172 = sphi 0, %s170
      %s173 = sphi 0, %s172
      %s187 = sphi 0, %s173
      %s191 = sphi 0, %s191
      %s193 = sphi 0, %s191
      %s194 = sphi 0, %s193
      %s208 = sphi 0, %s194
      %s214 = sphi 0, %s216
      %s217 = sphi 0, %s214
      %s218 = sphi 0, %s217
      %s234 = sphi 0, %s218
    $region4: #{tpu_custom_call.1} parent=1 // loop_header_branch
      %24 = sbr.rel (%p22) target = $region8
    $region5: #{tpu_custom_call.1} parent=1 // loop_body
      %s26 = ssub.s32 %s21, 1
      %s27 = ssub.s32 %s21, 2
      %s28 = sadd.s32 %s21, 1
      %s29 = ssub.s32 %s21, %s28
      %p30 = scmp.eq.s32.totalorder %s29, 0
      %s32 = sadd.s32 %s31, 1
      %s33 = scalar_select %p30, %s31, %s32
      %p36 = pneg %p30
      %p37 = scmp.eq.s32.totalorder %s21, 1
      %p38 = por %p36, %p37
      %p39 = scmp.ne.s32.totalorder %s31, %s34
      %p40 = scmp.eq.s32.totalorder %s21, 0
      %p41 = por %p39, %p40
      %p42 = scmp.ne.s32.totalorder %s31, %s34
      %p43 = scmp.eq.s32.totalorder %s26, 1
      %p44 = por %p42, %p43
      %p45 = scmp.ne.s32.totalorder %s34, %s35
      %p46 = scmp.eq.s32.totalorder %s26, 0
      %p47 = por %p45, %p46
      %p48 = scmp.ne.s32.totalorder %s34, %s35
      %p49 = scmp.eq.s32.totalorder %s27, 1
      %p50 = por %p48, %p49
      %p52 = scmp.ne.s32.totalorder %s35, %s51
      %p53 = scmp.eq.s32.totalorder %s27, 0
      %p54 = por %p52, %p53
      %s55 = ssub.s32 %s21, %s28
      %p56 = scmp.eq.s32.totalorder %s55, 0
      %s58 = sadd.s32 %s57, 1
      %s59 = scalar_select %p56, %s57, %s58
      %p62 = pneg %p56
      %p63 = scmp.eq.s32.totalorder %s21, 1
      %p64 = por %p62, %p63
      %p65 = scmp.ne.s32.totalorder %s57, %s60
      %p66 = scmp.eq.s32.totalorder %s21, 0
      %p67 = por %p65, %p66
      %p68 = scmp.ne.s32.totalorder %s57, %s60
      %p69 = scmp.eq.s32.totalorder %s26, 1
      %p70 = por %p68, %p69
      %p71 = scmp.ne.s32.totalorder %s60, %s61
      %p72 = scmp.eq.s32.totalorder %s26, 0
      %p73 = por %p71, %p72
      %p74 = scmp.ne.s32.totalorder %s60, %s61
      %p75 = scmp.eq.s32.totalorder %s27, 1
      %p76 = por %p74, %p75
      %p78 = scmp.ne.s32.totalorder %s61, %s77
      %p79 = scmp.eq.s32.totalorder %s27, 0
      %p80 = por %p78, %p79
      %s81 = ssub.s32 %s21, %s28
      %p82 = scmp.eq.s32.totalorder %s81, 0
      %s84 = sadd.s32 %s83, 1
      %s85 = scalar_select %p82, %s83, %s84
      %p88 = pneg %p82
      %p89 = scmp.eq.s32.totalorder %s21, 1
      %p90 = por %p88, %p89
      %p91 = scmp.ne.s32.totalorder %s83, %s86
      %p92 = scmp.eq.s32.totalorder %s21, 0
      %p93 = por %p91, %p92
      %p94 = scmp.ne.s32.totalorder %s83, %s86
      %p95 = scmp.eq.s32.totalorder %s26, 1
      %p96 = por %p94, %p95
      %p97 = scmp.ne.s32.totalorder %s86, %s87
      %p98 = scmp.eq.s32.totalorder %s26, 0
      %p99 = por %p97, %p98
      %p100 = scmp.ne.s32.totalorder %s86, %s87
      %p101 = scmp.eq.s32.totalorder %s27, 1
      %p102 = por %p100, %p101
      %p104 = scmp.ne.s32.totalorder %s87, %s103
      %p105 = scmp.eq.s32.totalorder %s27, 0
      %p106 = por %p104, %p105
      %s108 = sadd.s32 %s107, 1
      %p111 = scmp.eq.s32.totalorder %s21, 1
      %p112 = scmp.ne.s32.totalorder %s107, %s109
      %p113 = scmp.eq.s32.totalorder %s21, 0
      %p114 = por %p112, %p113
      %p115 = scmp.ne.s32.totalorder %s107, %s109
      %p116 = scmp.eq.s32.totalorder %s26, 1
      %p117 = por %p115, %p116
      %p118 = scmp.ne.s32.totalorder %s109, %s110
      %p119 = scmp.eq.s32.totalorder %s26, 0
      %p120 = por %p118, %p119
      %p121 = scmp.ne.s32.totalorder %s109, %s110
      %p122 = scmp.eq.s32.totalorder %s27, 1
      %p123 = por %p121, %p122
      %p125 = scmp.ne.s32.totalorder %s110, %s124
      %p126 = scmp.eq.s32.totalorder %s27, 0
      %p127 = por %p125, %p126
      %s129 = sadd.s32 %s128, 1
      %p132 = scmp.eq.s32.totalorder %s21, 1
      %p133 = scmp.ne.s32.totalorder %s128, %s130
      %p134 = scmp.eq.s32.totalorder %s21, 0
      %p135 = por %p133, %p134
      %p136 = scmp.ne.s32.totalorder %s128, %s130
      %p137 = scmp.eq.s32.totalorder %s26, 1
      %p138 = por %p136, %p137
      %p139 = scmp.ne.s32.totalorder %s130, %s131
      %p140 = scmp.eq.s32.totalorder %s26, 0
      %p141 = por %p139, %p140
      %p142 = scmp.ne.s32.totalorder %s130, %s131
      %p143 = scmp.eq.s32.totalorder %s27, 1
      %p144 = por %p142, %p143
      %p146 = scmp.ne.s32.totalorder %s131, %s145
      %p147 = scmp.eq.s32.totalorder %s27, 0
      %p148 = por %p146, %p147
      %s150 = sadd.s32 %s149, 1
      %p153 = scmp.eq.s32.totalorder %s21, 1
      %p154 = scmp.ne.s32.totalorder %s149, %s151
      %p155 = scmp.eq.s32.totalorder %s21, 0
      %p156 = por %p154, %p155
      %p157 = scmp.ne.s32.totalorder %s149, %s151
      %p158 = scmp.eq.s32.totalorder %s26, 1
      %p159 = por %p157, %p158
      %p160 = scmp.ne.s32.totalorder %s151, %s152
      %p161 = scmp.eq.s32.totalorder %s26, 0
      %p162 = por %p160, %p161
      %p163 = scmp.ne.s32.totalorder %s151, %s152
      %p164 = scmp.eq.s32.totalorder %s27, 1
      %p165 = por %p163, %p164
      %p167 = scmp.ne.s32.totalorder %s152, %s166
      %p168 = scmp.eq.s32.totalorder %s27, 0
      %p169 = por %p167, %p168
      %s171 = sadd.s32 %s170, 1
      %p174 = scmp.eq.s32.totalorder %s21, 1
      %p175 = scmp.ne.s32.totalorder %s170, %s172
      %p176 = scmp.eq.s32.totalorder %s21, 0
      %p177 = por %p175, %p176
      %p178 = scmp.ne.s32.totalorder %s170, %s172
      %p179 = scmp.eq.s32.totalorder %s26, 1
      %p180 = por %p178, %p179
      %p181 = scmp.ne.s32.totalorder %s172, %s173
      %p182 = scmp.eq.s32.totalorder %s26, 0
      %p183 = por %p181, %p182
      %p184 = scmp.ne.s32.totalorder %s172, %s173
      %p185 = scmp.eq.s32.totalorder %s27, 1
      %p186 = por %p184, %p185
      %p188 = scmp.ne.s32.totalorder %s173, %s187
      %p189 = scmp.eq.s32.totalorder %s27, 0
      %p190 = por %p188, %p189
      %s192 = sadd.s32 %s191, 1
      %p195 = scmp.eq.s32.totalorder %s21, 1
      %p196 = scmp.ne.s32.totalorder %s191, %s193
      %p197 = scmp.eq.s32.totalorder %s21, 0
      %p198 = por %p196, %p197
      %p199 = scmp.ne.s32.totalorder %s191, %s193
      %p200 = scmp.eq.s32.totalorder %s26, 1
      %p201 = por %p199, %p200
      %p202 = scmp.ne.s32.totalorder %s193, %s194
      %p203 = scmp.eq.s32.totalorder %s26, 0
      %p204 = por %p202, %p203
      %p205 = scmp.ne.s32.totalorder %s193, %s194
      %p206 = scmp.eq.s32.totalorder %s27, 1
      %p207 = por %p205, %p206
      %p209 = scmp.ne.s32.totalorder %s194, %s208
      %p210 = scmp.eq.s32.totalorder %s27, 0
      %p211 = por %p209, %p210
      %s212 = ssub.s32 %s21, %s28
      %p213 = scmp.eq.s32.totalorder %s212, 0
      %s215 = sadd.s32 %s214, 1
      %s216 = scalar_select %p213, %s214, %s215
      %p219 = pneg %p213
      %p220 = scmp.eq.s32.totalorder %s21, 1
      %p221 = por %p219, %p220
      %p222 = scmp.ne.s32.totalorder %s214, %s217
      %p223 = scmp.eq.s32.totalorder %s21, 0
      %p224 = por %p222, %p223
      %p225 = scmp.ne.s32.totalorder %s214, %s217
      %p226 = scmp.eq.s32.totalorder %s26, 1
      %p227 = por %p225, %p226
      %p228 = scmp.ne.s32.totalorder %s217, %s218
      %p229 = scmp.eq.s32.totalorder %s26, 0
      %p230 = por %p228, %p229
      %p231 = scmp.ne.s32.totalorder %s217, %s218
      %p232 = scmp.eq.s32.totalorder %s27, 1
      %p233 = por %p231, %p232
      %p235 = scmp.ne.s32.totalorder %s218, %s234
      %p236 = scmp.eq.s32.totalorder %s27, 0
      %p237 = por %p235, %p236
      %p238 = scmp.le.s32.totalorder 1, %s21
      %p239 = scmp.lt.s32.totalorder %s21, 3
      %p240 = pnand %p238, %p239
      %p241 = pneg %p240
      // Predicated region
      $region9: #{tpu_custom_call.1} parent=5 // pred_check
        _
      $region10: #{tpu_custom_call.1} parent=5 // pred_check_branch
        %243 = sbr.rel (%p240) target = $region12
      $region11: #{tpu_custom_call.1} parent=5 // pred_region
        %s244 = ssub.s32 %s21, 1
        // Predicated region
        $region13: #{tpu_custom_call.1} parent=11 // pred_check
          %p245 = pneg %p120
        $region14: #{tpu_custom_call.1} parent=11 // pred_check_branch
          %247 = sbr.rel (%p245) target = $region16
        $region15: #{tpu_custom_call.1} parent=11 // pred_region
          _
        $region16: #{tpu_custom_call.1} parent=11 // pred_fallthru
          _
        // Predicated region
        $region17: #{tpu_custom_call.1} parent=11 // pred_check
          %p248 = pneg %p141
        $region18: #{tpu_custom_call.1} parent=11 // pred_check_branch
          %250 = sbr.rel (%p248) target = $region20
        $region19: #{tpu_custom_call.1} parent=11 // pred_region
          _
        $region20: #{tpu_custom_call.1} parent=11 // pred_fallthru
          _
        // Predicated region
        $region21: #{tpu_custom_call.1} parent=11 // pred_check
          %p251 = pneg %p162
        $region22: #{tpu_custom_call.1} parent=11 // pred_check_branch
          %253 = sbr.rel (%p251) target = $region24
        $region23: #{tpu_custom_call.1} parent=11 // pred_region
          %s255 = ssub.s32 1024, 1024
          %256 = vsyncadd [#allocation5], %s255
          %s257 = sshll.u32 [#allocation6], 4
          %s258 = int_to_ptr.vmem [resolvable:$true] %s257
          %263 = dma.hbm_to_vmem [thread:$0]  %s5, 1024, %s258, [#allocation5], 64, 64, 4
        $region24: #{tpu_custom_call.1} parent=11 // pred_fallthru
          _
        // Predicated region
        $region25: #{tpu_custom_call.1} parent=11 // pred_check
          %p264 = pneg %p183
        $region26: #{tpu_custom_call.1} parent=11 // pred_check_branch
          %266 = sbr.rel (%p264) target = $region28
        $region27: #{tpu_custom_call.1} parent=11 // pred_region
          %s268 = ssub.s32 512, 512
          %269 = vsyncadd [#allocation8], %s268
          %s270 = sshll.u32 [#allocation7], 4
          %s271 = int_to_ptr.vmem [resolvable:$true] %s270
          %276 = dma.hbm_to_vmem [thread:$0]  %s6, 512, %s271, [#allocation8], 64, 64, 4
        $region28: #{tpu_custom_call.1} parent=11 // pred_fallthru
          _
        // Predicated region
        $region29: #{tpu_custom_call.1} parent=11 // pred_check
          %p277 = pneg %p204
        $region30: #{tpu_custom_call.1} parent=11 // pred_check_branch
          %279 = sbr.rel (%p277) target = $region32
        $region31: #{tpu_custom_call.1} parent=11 // pred_region
          _
        $region32: #{tpu_custom_call.1} parent=11 // pred_fallthru
          _
      $region12: #{tpu_custom_call.1} parent=5 // pred_fallthru
        _
      %p280 = scmp.lt.s32.totalorder %s21, 2
      // Predicated region
      $region33: #{tpu_custom_call.1} parent=5 // pred_check
        %p281 = pneg %p280
      $region34: #{tpu_custom_call.1} parent=5 // pred_check_branch
        %283 = sbr.rel (%p281) target = $region36
      $region35: #{tpu_custom_call.1} parent=5 // pred_region
        // Predicated region
        $region37: #{tpu_custom_call.1} parent=35 // pred_check
          %p284 = pneg %p41
        $region38: #{tpu_custom_call.1} parent=35 // pred_check_branch
          %286 = sbr.rel (%p284) target = $region40
        $region39: #{tpu_custom_call.1} parent=35 // pred_region
          %s287 = sand.u32 %s31, 1
          %s288 = scalar_lea.sflag [#allocation3], %s287
          %s289 = sand.u32 %s31, 1
          %s290 = smul.addr %s289, 256
          %s291 = scalar_lea.vmem [#allocation2], %s290
          %s293 = ssub.s32 4096, 4096
          %294 = vsyncadd %s288, %s293
          %s295 = smul.addr %s21, 64
          %s296 = smul.addr %s295, 64
          %s297 = scalar_lea.hbm %s0, %s296
          %s298 = sshll.u32 %s291, 4
          %s299 = int_to_ptr.vmem [resolvable:$true] %s298
          %304 = dma.hbm_to_vmem [thread:$0]  %s297, 4096, %s299, %s288, 128, 128, 8
        $region40: #{tpu_custom_call.1} parent=35 // pred_fallthru
          _
        // Predicated region
        $region41: #{tpu_custom_call.1} parent=35 // pred_check
          %p305 = pneg %p67
        $region42: #{tpu_custom_call.1} parent=35 // pred_check_branch
          %307 = sbr.rel (%p305) target = $region44
        $region43: #{tpu_custom_call.1} parent=35 // pred_region
          %s308 = sand.u32 %s21, 1
          %s309 = scalar_lea.sflag [#allocation5], %s308
          %s310 = sand.u32 %s57, 1
          %s311 = smul.addr %s310, 8
          %s312 = scalar_lea.vmem [#allocation4], %s311
          %s314 = ssub.s32 128, 128
          %315 = vsyncadd %s309, %s314
          %s316 = smul.addr %s21, 2
          %s317 = smul.addr %s316, 64
          %s318 = scalar_lea.hbm %s1, %s317
          %s320 = sshll.u32 %s312, 4
          %s321 = int_to_ptr.vmem [resolvable:$true] %s320
          %323 = dma.hbm_to_vmem [thread:$0]  %s318, 128, %s321, %s309
        $region44: #{tpu_custom_call.1} parent=35 // pred_fallthru
          _
        // Predicated region
        $region45: #{tpu_custom_call.1} parent=35 // pred_check
          %p324 = pneg %p93
        $region46: #{tpu_custom_call.1} parent=35 // pred_check_branch
          %326 = sbr.rel (%p324) target = $region48
        $region47: #{tpu_custom_call.1} parent=35 // pred_region
          %p327 = scmp.lt.s32.totalorder %s21, 1
          %s328 = scalar_select %p327, %s21, 1
          %s329 = smul.addr %s328, 32
          %s330 = smul.addr %s329, 4
          %s331 = scalar_lea.vmem %s2, %s330
        $region48: #{tpu_custom_call.1} parent=35 // pred_fallthru
          _
      $region36: #{tpu_custom_call.1} parent=5 // pred_fallthru
        _
      %p332 = scmp.le.s32.totalorder 1, %s21
      %p333 = scmp.lt.s32.totalorder %s21, 3
      %p334 = pnand %p332, %p333
      %p335 = pneg %p334
      // Predicated region
      $region49: #{tpu_custom_call.1} parent=5 // pred_check
        _
      $region50: #{tpu_custom_call.1} parent=5 // pred_check_branch
        %337 = sbr.rel (%p334) target = $region52
      $region51: #{tpu_custom_call.1} parent=5 // pred_region
        %s338 = ssub.s32 %s21, 1
        %s339 = sand.u32 %s34, 1
        %s340 = scalar_lea.sflag [#allocation3], %s339
        %s341 = sand.u32 %s34, 1
        %s342 = smul.addr %s341, 256
        %s343 = scalar_lea.vmem [#allocation2], %s342
        // Predicated region
        $region53: #{tpu_custom_call.1} parent=51 // pred_check
          %p344 = pneg %p47
        $region54: #{tpu_custom_call.1} parent=51 // pred_check_branch
          %346 = sbr.rel (%p344) target = $region56
        $region55: #{tpu_custom_call.1} parent=51 // pred_region
          %347 = dma.done %s340, 4096
        $region56: #{tpu_custom_call.1} parent=51 // pred_fallthru
          _
        %s348 = sand.u32 %s26, 1
        %s349 = scalar_lea.sflag [#allocation5], %s348
        %s350 = sand.u32 %s60, 1
        %s351 = smul.addr %s350, 8
        %s352 = scalar_lea.vmem [#allocation4], %s351
        // Predicated region
        $region57: #{tpu_custom_call.1} parent=51 // pred_check
          %p353 = pneg %p73
        $region58: #{tpu_custom_call.1} parent=51 // pred_check_branch
          %355 = sbr.rel (%p353) target = $region60
        $region59: #{tpu_custom_call.1} parent=51 // pred_region
          %356 = dma.done %s349, 128
        $region60: #{tpu_custom_call.1} parent=51 // pred_fallthru
          _
        // Predicated region
        $region61: #{tpu_custom_call.1} parent=51 // pred_check
          %p357 = pneg %p162
        $region62: #{tpu_custom_call.1} parent=51 // pred_check_branch
          %359 = sbr.rel (%p357) target = $region64
        $region63: #{tpu_custom_call.1} parent=51 // pred_region
          %360 = dma.done [#allocation5], 1024
        $region64: #{tpu_custom_call.1} parent=51 // pred_fallthru
          _
        // Predicated region
        $region65: #{tpu_custom_call.1} parent=51 // pred_check
          %p361 = pneg %p183
        $region66: #{tpu_custom_call.1} parent=51 // pred_check_branch
          %363 = sbr.rel (%p361) target = $region68
        $region67: #{tpu_custom_call.1} parent=51 // pred_region
          %364 = dma.done [#allocation8], 512
        $region68: #{tpu_custom_call.1} parent=51 // pred_fallthru
          _
        %s365 = sand.u32 %s34, 1
        %s366 = scalar_lea.sflag [#allocation3], %s365
        %s367 = sand.u32 %s34, 1
        %s368 = smul.addr %s367, 256
        %s369 = scalar_lea.vmem [#allocation2], %s368
        %p370 = pneg %p47
        %p371 = pneg %p44
        %s372 = sand.u32 %s26, 1
        %s373 = scalar_lea.sflag [#allocation5], %s372
        %s374 = sand.u32 %s60, 1
        %s375 = smul.addr %s374, 8
        %s376 = scalar_lea.vmem [#allocation4], %s375
        %p377 = pneg %p73
        %p378 = pneg %p70
        %p379 = scmp.lt.s32.totalorder %s26, 1
        %s380 = scalar_select %p379, %s26, 1
        %s381 = smul.addr %s380, 32
        %s382 = smul.addr %s381, 4
        %s383 = scalar_lea.vmem %s2, %s382
        %p384 = pneg %p99
        %p385 = pneg %p96
        %p386 = pneg %p120
        %p387 = pneg %p117
        %p388 = pneg %p141
        %p389 = pneg %p138
        %p390 = pneg %p162
        %p391 = pneg %p159
        %p392 = pneg %p183
        %p393 = pneg %p180
        %p394 = pneg %p204
        %p395 = pneg %p201
        %p396 = pneg %p230
        %p397 = pneg %p227
        %p398 = scmp.lt.s32.totalorder %s26, 1
        %s399 = scalar_select %p398, %s26, 1
        %s400 = smul.addr %s399, 8
        %s401 = scalar_lea.vmem %s8, %s400
        %p402 = scmp.lt.s32.totalorder %s26, 1
        %s403 = scalar_select %p402, %s26, 1
        %s404 = smul.addr %s403, 32
        %s405 = smul.addr %s404, 4
        %s406 = scalar_lea.vmem %s2, %s405
        %p407 = scmp.lt.s32.totalorder %s26, 1
        %s408 = scalar_select %p407, %s26, 1
        %s409 = smul.addr %s408, 8
        %s410 = scalar_lea.vmem %s8, %s409
        %v412 = vld [vmem:[%s343] sm:$0xff]
        %v413 = vld [vmem:[%s343 + $0x8] sm:$0xff]
        %v414 = vld [vmem:[%s343 + $0x10] sm:$0xff]
        %v415 = vld [vmem:[%s343 + $0x18] sm:$0xff]
        %v416 = vld [vmem:[%s343 + $0x20] sm:$0xff]
        %v417 = vld [vmem:[%s343 + $0x28] sm:$0xff]
        %v418 = vld [vmem:[%s343 + $0x30] sm:$0xff]
        %v419 = vld [vmem:[%s343 + $0x38] sm:$0xff]
        %v420 = vld [vmem:[%s343 + $0x40] sm:$0xff]
        %v421 = vld [vmem:[%s343 + $0x48] sm:$0xff]
        %v422 = vld [vmem:[%s343 + $0x50] sm:$0xff]
        %v423 = vld [vmem:[%s343 + $0x58] sm:$0xff]
        %v424 = vld [vmem:[%s343 + $0x60] sm:$0xff]
        %v425 = vld [vmem:[%s343 + $0x68] sm:$0xff]
        %v426 = vld [vmem:[%s343 + $0x70] sm:$0xff]
        %v427 = vld [vmem:[%s343 + $0x78] sm:$0xff]
        %v428 = vld [vmem:[%s343 + $0x80] sm:$0xff]
        %v429 = vld [vmem:[%s343 + $0x88] sm:$0xff]
        %v430 = vld [vmem:[%s343 + $0x90] sm:$0xff]
        %v431 = vld [vmem:[%s343 + $0x98] sm:$0xff]
        %v432 = vld [vmem:[%s343 + $0xa0] sm:$0xff]
        %v433 = vld [vmem:[%s343 + $0xa8] sm:$0xff]
        %v434 = vld [vmem:[%s343 + $0xb0] sm:$0xff]
        %v435 = vld [vmem:[%s343 + $0xb8] sm:$0xff]
        %v436 = vld [vmem:[%s343 + $0xc0] sm:$0xff]
        %v437 = vld [vmem:[%s343 + $0xc8] sm:$0xff]
        %v438 = vld [vmem:[%s343 + $0xd0] sm:$0xff]
        %v439 = vld [vmem:[%s343 + $0xd8] sm:$0xff]
        %v440 = vld [vmem:[%s343 + $0xe0] sm:$0xff]
        %v441 = vld [vmem:[%s343 + $0xe8] sm:$0xff]
        %v442 = vld [vmem:[%s343 + $0xf0] sm:$0xff]
        %v443 = vld [vmem:[%s343 + $0xf8] sm:$0xff]
        %v444 = vld [vmem:[%s406] sm:$0xf]
        %v445 = vld [vmem:[%s406 + $0x4] sm:$0xf]
        %v446 = vld [vmem:[%s406 + $0x8] sm:$0xf]
        %v447 = vld [vmem:[%s406 + $0xc] sm:$0xf]
        %v448 = vld [vmem:[%s406 + $0x10] sm:$0xf]
        %v449 = vld [vmem:[%s406 + $0x14] sm:$0xf]
        %v450 = vld [vmem:[%s406 + $0x18] sm:$0xf]
        %v451 = vld [vmem:[%s406 + $0x1c] sm:$0xf]
        %v452 = vld [vmem:[%s406 + $0x20] sm:$0xf]
        %v453 = vld [vmem:[%s406 + $0x24] sm:$0xf]
        %v454 = vld [vmem:[%s406 + $0x28] sm:$0xf]
        %v455 = vld [vmem:[%s406 + $0x2c] sm:$0xf]
        %v456 = vld [vmem:[%s406 + $0x30] sm:$0xf]
        %v457 = vld [vmem:[%s406 + $0x34] sm:$0xf]
        %v458 = vld [vmem:[%s406 + $0x38] sm:$0xf]
        %v459 = vld [vmem:[%s406 + $0x3c] sm:$0xf]
        %v460 = vld [vmem:[%s406 + $0x40] sm:$0xf]
        %v461 = vld [vmem:[%s406 + $0x44] sm:$0xf]
        %v462 = vld [vmem:[%s406 + $0x48] sm:$0xf]
        %v463 = vld [vmem:[%s406 + $0x4c] sm:$0xf]
        %v464 = vld [vmem:[%s406 + $0x50] sm:$0xf]
        %v465 = vld [vmem:[%s406 + $0x54] sm:$0xf]
        %v466 = vld [vmem:[%s406 + $0x58] sm:$0xf]
        %v467 = vld [vmem:[%s406 + $0x5c] sm:$0xf]
        %v468 = vld [vmem:[%s406 + $0x60] sm:$0xf]
        %v469 = vld [vmem:[%s406 + $0x64] sm:$0xf]
        %v470 = vld [vmem:[%s406 + $0x68] sm:$0xf]
        %v471 = vld [vmem:[%s406 + $0x6c] sm:$0xf]
        %v472 = vld [vmem:[%s406 + $0x70] sm:$0xf]
        %v473 = vld [vmem:[%s406 + $0x74] sm:$0xf]
        %v474 = vld [vmem:[%s406 + $0x78] sm:$0xf]
        %v475 = vld [vmem:[%s406 + $0x7c] sm:$0xf]
        %v508 = vunpack.c.l.b16 %v412
        %v509 = vunpack.c.h.b16 %v412
        %v510 = vunpack.c.l.b16 %v413
        %v511 = vunpack.c.h.b16 %v413
        %v512 = vunpack.c.l.b16 %v414
        %v513 = vunpack.c.h.b16 %v414
        %v514 = vunpack.c.l.b16 %v415
        %v515 = vunpack.c.h.b16 %v415
        %v516 = vunpack.c.l.b16 %v416
        %v517 = vunpack.c.h.b16 %v416
        %v518 = vunpack.c.l.b16 %v417
        %v519 = vunpack.c.h.b16 %v417
        %v520 = vunpack.c.l.b16 %v418
        %v521 = vunpack.c.h.b16 %v418
        %v522 = vunpack.c.l.b16 %v419
        %v523 = vunpack.c.h.b16 %v419
        %v524 = vunpack.c.l.b16 %v420
        %v525 = vunpack.c.h.b16 %v420
        %v526 = vunpack.c.l.b16 %v421
        %v527 = vunpack.c.h.b16 %v421
        %v528 = vunpack.c.l.b16 %v422
        %v529 = vunpack.c.h.b16 %v422
        %v530 = vunpack.c.l.b16 %v423
        %v531 = vunpack.c.h.b16 %v423
        %v532 = vunpack.c.l.b16 %v424
        %v533 = vunpack.c.h.b16 %v424
        %v534 = vunpack.c.l.b16 %v425
        %v535 = vunpack.c.h.b16 %v425
        %v536 = vunpack.c.l.b16 %v426
        %v537 = vunpack.c.h.b16 %v426
        %v538 = vunpack.c.l.b16 %v427
        %v539 = vunpack.c.h.b16 %v427
        %v540 = vunpack.c.l.b16 %v428
        %v541 = vunpack.c.h.b16 %v428
        %v542 = vunpack.c.l.b16 %v429
        %v543 = vunpack.c.h.b16 %v429
        %v544 = vunpack.c.l.b16 %v430
        %v545 = vunpack.c.h.b16 %v430
        %v546 = vunpack.c.l.b16 %v431
        %v547 = vunpack.c.h.b16 %v431
        %v548 = vunpack.c.l.b16 %v432
        %v549 = vunpack.c.h.b16 %v432
        %v550 = vunpack.c.l.b16 %v433
        %v551 = vunpack.c.h.b16 %v433
        %v552 = vunpack.c.l.b16 %v434
        %v553 = vunpack.c.h.b16 %v434
        %v554 = vunpack.c.l.b16 %v435
        %v555 = vunpack.c.h.b16 %v435
        %v556 = vunpack.c.l.b16 %v436
        %v557 = vunpack.c.h.b16 %v436
        %v558 = vunpack.c.l.b16 %v437
        %v559 = vunpack.c.h.b16 %v437
        %v560 = vunpack.c.l.b16 %v438
        %v561 = vunpack.c.h.b16 %v438
        %v562 = vunpack.c.l.b16 %v439
        %v563 = vunpack.c.h.b16 %v439
        %v564 = vunpack.c.l.b16 %v440
        %v565 = vunpack.c.h.b16 %v440
        %v566 = vunpack.c.l.b16 %v441
        %v567 = vunpack.c.h.b16 %v441
        %v568 = vunpack.c.l.b16 %v442
        %v569 = vunpack.c.h.b16 %v442
        %v570 = vunpack.c.l.b16 %v443
        %v571 = vunpack.c.h.b16 %v443
        %v572 = vpack.c.b16 %v510, %v508
        %v573 = vpack.c.b16 %v511, %v509
        %v574 = vpack.c.b16 %v514, %v512
        %v575 = vpack.c.b16 %v515, %v513
        %v576 = vpack.c.b16 %v518, %v516
        %v577 = vpack.c.b16 %v519, %v517
        %v578 = vpack.c.b16 %v522, %v520
        %v579 = vpack.c.b16 %v523, %v521
        %v580 = vpack.c.b16 %v526, %v524
        %v581 = vpack.c.b16 %v527, %v525
        %v582 = vpack.c.b16 %v530, %v528
        %v583 = vpack.c.b16 %v531, %v529
        %v584 = vpack.c.b16 %v534, %v532
        %v585 = vpack.c.b16 %v535, %v533
        %v586 = vpack.c.b16 %v538, %v536
        %v587 = vpack.c.b16 %v539, %v537
        %v588 = vpack.c.b16 %v542, %v540
        %v589 = vpack.c.b16 %v543, %v541
        %v590 = vpack.c.b16 %v546, %v544
        %v591 = vpack.c.b16 %v547, %v545
        %v592 = vpack.c.b16 %v550, %v548
        %v593 = vpack.c.b16 %v551, %v549
        %v594 = vpack.c.b16 %v554, %v552
        %v595 = vpack.c.b16 %v555, %v553
        %v596 = vpack.c.b16 %v558, %v556
        %v597 = vpack.c.b16 %v559, %v557
        %v598 = vpack.c.b16 %v562, %v560
        %v599 = vpack.c.b16 %v563, %v561
        %v600 = vpack.c.b16 %v566, %v564
        %v601 = vpack.c.b16 %v567, %v565
        %v602 = vpack.c.b16 %v570, %v568
        %v603 = vpack.c.b16 %v571, %v569
        %v668 = vunpack.c.l.b16 %v444
        %v669 = vunpack.c.l.b16 %v445
        %v670 = vunpack.c.l.b16 %v446
        %v671 = vunpack.c.l.b16 %v447
        %v672 = vunpack.c.l.b16 %v448
        %v673 = vunpack.c.l.b16 %v449
        %v674 = vunpack.c.l.b16 %v450
        %v675 = vunpack.c.l.b16 %v451
        %v676 = vunpack.c.l.b16 %v452
        %v677 = vunpack.c.l.b16 %v453
        %v678 = vunpack.c.l.b16 %v454
        %v679 = vunpack.c.l.b16 %v455
        %v680 = vunpack.c.l.b16 %v456
        %v681 = vunpack.c.l.b16 %v457
        %v682 = vunpack.c.l.b16 %v458
        %v683 = vunpack.c.l.b16 %v459
        %v684 = vunpack.c.l.b16 %v460
        %v685 = vunpack.c.l.b16 %v461
        %v686 = vunpack.c.l.b16 %v462
        %v687 = vunpack.c.l.b16 %v463
        %v688 = vunpack.c.l.b16 %v464
        %v689 = vunpack.c.l.b16 %v465
        %v690 = vunpack.c.l.b16 %v466
        %v691 = vunpack.c.l.b16 %v467
        %v692 = vunpack.c.l.b16 %v468
        %v693 = vunpack.c.l.b16 %v469
        %v694 = vunpack.c.l.b16 %v470
        %v695 = vunpack.c.l.b16 %v471
        %v696 = vunpack.c.l.b16 %v472
        %v697 = vunpack.c.l.b16 %v473
        %v698 = vunpack.c.l.b16 %v474
        %v699 = vunpack.c.l.b16 %v475
        %v700 = vpack.c.b16 %v669, %v668
        %v701 = vpack.c.b16 %v671, %v670
        %v702 = vpack.c.b16 %v673, %v672
        %v703 = vpack.c.b16 %v675, %v674
        %v704 = vpack.c.b16 %v677, %v676
        %v705 = vpack.c.b16 %v679, %v678
        %v706 = vpack.c.b16 %v681, %v680
        %v707 = vpack.c.b16 %v683, %v682
        %v708 = vpack.c.b16 %v685, %v684
        %v709 = vpack.c.b16 %v687, %v686
        %v710 = vpack.c.b16 %v689, %v688
        %v711 = vpack.c.b16 %v691, %v690
        %v712 = vpack.c.b16 %v693, %v692
        %v713 = vpack.c.b16 %v695, %v694
        %v714 = vpack.c.b16 %v697, %v696
        %v715 = vpack.c.b16 %v699, %v698
        %732 = vmatprep.subr.bf16.mxu0 0
        %733 = vmatpush1.bf16.msra.mxu0 %v707
        %734 = vmatprep.subr.bf16.mxu0 0
        %735 = vmatpush1.bf16.msra.mxu0 %v706
        %736 = vmatprep.subr.bf16.mxu0 0
        %737 = vmatpush1.bf16.msra.mxu0 %v705
        %738 = vmatprep.subr.bf16.mxu0 0
        %739 = vmatpush1.bf16.msra.mxu0 %v704
        %740 = vmatprep.subr.bf16.mxu0 0
        %741 = vmatpush1.bf16.msra.mxu0 %v703
        %742 = vmatprep.subr.bf16.mxu0 0
        %743 = vmatpush1.bf16.msra.mxu0 %v702
        %744 = vmatprep.subr.bf16.mxu0 0
        %745 = vmatpush1.bf16.msra.mxu0 %v701
        %746 = vmatprep.subr.bf16.mxu0 0
        %747 = vmatpush1.bf16.msra.mxu0 %v700
        %748 = vmatprep.subr.bf16.mxu0 0
        %749 = vmatpush2.bf16.msra.mxu0 %v715
        %750 = vmatprep.subr.bf16.mxu0 0
        %751 = vmatpush2.bf16.msra.mxu0 %v714
        %752 = vmatprep.subr.bf16.mxu0 0
        %753 = vmatpush2.bf16.msra.mxu0 %v713
        %754 = vmatprep.subr.bf16.mxu0 0
        %755 = vmatpush2.bf16.msra.mxu0 %v712
        %756 = vmatprep.subr.bf16.mxu0 0
        %757 = vmatpush2.bf16.msra.mxu0 %v711
        %758 = vmatprep.subr.bf16.mxu0 0
        %759 = vmatpush2.bf16.msra.mxu0 %v710
        %760 = vmatprep.subr.bf16.mxu0 0
        %761 = vmatpush2.bf16.msra.mxu0 %v709
        %762 = vmatprep.subr.bf16.mxu0 0
        %763 = vmatpush2.bf16.msra.mxu0 %v708
        %764 = vmatprep.mubr.bf16.mxu0 %v573
        %765 = vmatmul.mubr.bf16.gmra.mxu0 %v572
        %v766 = vpop.f32.mrf.mxu0
        %v767 = vadd.f32 0.0, %v766
        %v768 = vpop.f32.mrf.mxu0
        %v769 = vpop.f32.mrf.mxu0
        %v770 = vadd.f32 0.0, %v769
        %v771 = vpop.f32.mrf.mxu0
        %772 = vmatprep.mubr.bf16.mxu0 %v575
        %773 = vmatmul.mubr.bf16.gmra.mxu0 %v574
        %v774 = vpop.f32.mrf.mxu0
        %v775 = vadd.f32 0.0, %v774
        %v776 = vpop.f32.mrf.mxu0
        %v777 = vpop.f32.mrf.mxu0
        %v778 = vadd.f32 0.0, %v777
        %v779 = vpop.f32.mrf.mxu0
        %780 = vmatprep.mubr.bf16.mxu0 %v577
        %781 = vmatmul.mubr.bf16.gmra.mxu0 %v576
        %v782 = vpop.f32.mrf.mxu0
        %v783 = vadd.f32 0.0, %v782
        %v784 = vpop.f32.mrf.mxu0
        %v785 = vpop.f32.mrf.mxu0
        %v786 = vadd.f32 0.0, %v785
        %v787 = vpop.f32.mrf.mxu0
        %788 = vmatprep.mubr.bf16.mxu0 %v579
        %789 = vmatmul.mubr.bf16.gmra.mxu0 %v578
        %v790 = vpop.f32.mrf.mxu0
        %v791 = vadd.f32 0.0, %v790
        %v792 = vpop.f32.mrf.mxu0
        %v793 = vpop.f32.mrf.mxu0
        %v794 = vadd.f32 0.0, %v793
        %v795 = vpop.f32.mrf.mxu0
        %796 = vmatprep.mubr.bf16.mxu0 %v581
        %797 = vmatmul.mubr.bf16.gmra.mxu0 %v580
        %v798 = vpop.f32.mrf.mxu0
        %v799 = vadd.f32 0.0, %v798
        %v800 = vpop.f32.mrf.mxu0
        %v801 = vpop.f32.mrf.mxu0
        %v802 = vadd.f32 0.0, %v801
        %v803 = vpop.f32.mrf.mxu0
        %804 = vmatprep.mubr.bf16.mxu0 %v583
        %805 = vmatmul.mubr.bf16.gmra.mxu0 %v582
        %v806 = vpop.f32.mrf.mxu0
        %v807 = vadd.f32 0.0, %v806
        %v808 = vpop.f32.mrf.mxu0
        %v809 = vpop.f32.mrf.mxu0
        %v810 = vadd.f32 0.0, %v809
        %v811 = vpop.f32.mrf.mxu0
        %812 = vmatprep.mubr.bf16.mxu0 %v585
        %813 = vmatmul.mubr.bf16.gmra.mxu0 %v584
        %v814 = vpop.f32.mrf.mxu0
        %v815 = vadd.f32 0.0, %v814
        %v816 = vpop.f32.mrf.mxu0
        %v817 = vpop.f32.mrf.mxu0
        %v818 = vadd.f32 0.0, %v817
        %v819 = vpop.f32.mrf.mxu0
        %820 = vmatprep.mubr.bf16.mxu0 %v587
        %821 = vmatmul.mubr.bf16.gmra.mxu0 %v586
        %v822 = vpop.f32.mrf.mxu0
        %v823 = vadd.f32 0.0, %v822
        %v824 = vpop.f32.mrf.mxu0
        %v825 = vpop.f32.mrf.mxu0
        %v826 = vadd.f32 0.0, %v825
        %v827 = vpop.f32.mrf.mxu0
        %828 = vmatprep.mubr.bf16.mxu0 %v589
        %829 = vmatmul.mubr.bf16.gmra.mxu0 %v588
        %v830 = vpop.f32.mrf.mxu0
        %v831 = vadd.f32 0.0, %v830
        %v832 = vpop.f32.mrf.mxu0
        %v833 = vpop.f32.mrf.mxu0
        %v834 = vadd.f32 0.0, %v833
        %v835 = vpop.f32.mrf.mxu0
        %836 = vmatprep.mubr.bf16.mxu0 %v591
        %837 = vmatmul.mubr.bf16.gmra.mxu0 %v590
        %v838 = vpop.f32.mrf.mxu0
        %v839 = vadd.f32 0.0, %v838
        %v840 = vpop.f32.mrf.mxu0
        %v841 = vpop.f32.mrf.mxu0
        %v842 = vadd.f32 0.0, %v841
        %v843 = vpop.f32.mrf.mxu0
        %844 = vmatprep.mubr.bf16.mxu0 %v593
        %845 = vmatmul.mubr.bf16.gmra.mxu0 %v592
        %v846 = vpop.f32.mrf.mxu0
        %v847 = vadd.f32 0.0, %v846
        %v848 = vpop.f32.mrf.mxu0
        %v849 = vpop.f32.mrf.mxu0
        %v850 = vadd.f32 0.0, %v849
        %v851 = vpop.f32.mrf.mxu0
        %852 = vmatprep.mubr.bf16.mxu0 %v595
        %853 = vmatmul.mubr.bf16.gmra.mxu0 %v594
        %v854 = vpop.f32.mrf.mxu0
        %v855 = vadd.f32 0.0, %v854
        %v856 = vpop.f32.mrf.mxu0
        %v857 = vpop.f32.mrf.mxu0
        %v858 = vadd.f32 0.0, %v857
        %v859 = vpop.f32.mrf.mxu0
        %860 = vmatprep.mubr.bf16.mxu0 %v597
        %861 = vmatmul.mubr.bf16.gmra.mxu0 %v596
        %v862 = vpop.f32.mrf.mxu0
        %v863 = vadd.f32 0.0, %v862
        %v864 = vpop.f32.mrf.mxu0
        %v865 = vpop.f32.mrf.mxu0
        %v866 = vadd.f32 0.0, %v865
        %v867 = vpop.f32.mrf.mxu0
        %868 = vmatprep.mubr.bf16.mxu0 %v599
        %869 = vmatmul.mubr.bf16.gmra.mxu0 %v598
        %v870 = vpop.f32.mrf.mxu0
        %v871 = vadd.f32 0.0, %v870
        %v872 = vpop.f32.mrf.mxu0
        %v873 = vpop.f32.mrf.mxu0
        %v874 = vadd.f32 0.0, %v873
        %v875 = vpop.f32.mrf.mxu0
        %876 = vmatprep.mubr.bf16.mxu0 %v601
        %877 = vmatmul.mubr.bf16.gmra.mxu0 %v600
        %v878 = vpop.f32.mrf.mxu0
        %v879 = vadd.f32 0.0, %v878
        %v880 = vpop.f32.mrf.mxu0
        %v881 = vpop.f32.mrf.mxu0
        %v882 = vadd.f32 0.0, %v881
        %v883 = vpop.f32.mrf.mxu0
        %884 = vmatprep.mubr.bf16.mxu0 %v603
        %885 = vmatmul.mubr.bf16.gmra.mxu0 %v602
        %v886 = vpop.f32.mrf.mxu0
        %v887 = vadd.f32 0.0, %v886
        %v888 = vpop.f32.mrf.mxu0
        %v889 = vpop.f32.mrf.mxu0
        %v890 = vadd.f32 0.0, %v889
        %v891 = vpop.f32.mrf.mxu0
        %892 = vdwg.mxu0
        %v893 = vpack.c.bf16 %v770, %v767
        %v894 = vpack.c.bf16 %v778, %v775
        %v895 = vpack.c.bf16 %v786, %v783
        %v896 = vpack.c.bf16 %v794, %v791
        %v897 = vpack.c.bf16 %v802, %v799
        %v898 = vpack.c.bf16 %v810, %v807
        %v899 = vpack.c.bf16 %v818, %v815
        %v900 = vpack.c.bf16 %v826, %v823
        %v901 = vpack.c.bf16 %v834, %v831
        %v902 = vpack.c.bf16 %v842, %v839
        %v903 = vpack.c.bf16 %v850, %v847
        %v904 = vpack.c.bf16 %v858, %v855
        %v905 = vpack.c.bf16 %v866, %v863
        %v906 = vpack.c.bf16 %v874, %v871
        %v907 = vpack.c.bf16 %v882, %v879
        %v908 = vpack.c.bf16 %v890, %v887
        %v909 = vld [vmem:[%s3] sm:$0xff]
        %v910 = vld [vmem:[%s3 + $0x8] sm:$0xff]
        %v911 = vld [vmem:[%s3 + $0x10] sm:$0xff]
        %v912 = vld [vmem:[%s3 + $0x18] sm:$0xff]
        %v913 = vld [vmem:[%s3 + $0x20] sm:$0xff]
        %v914 = vld [vmem:[%s3 + $0x28] sm:$0xff]
        %v915 = vld [vmem:[%s3 + $0x30] sm:$0xff]
        %v916 = vld [vmem:[%s3 + $0x38] sm:$0xff]
        %v921 = vunpack.c.l.b16 %v913
        %v922 = vunpack.c.h.b16 %v913
        %v923 = vunpack.c.l.b16 %v914
        %v924 = vunpack.c.h.b16 %v914
        %v925 = vunpack.c.l.b16 %v915
        %v926 = vunpack.c.h.b16 %v915
        %v927 = vunpack.c.l.b16 %v916
        %v928 = vunpack.c.h.b16 %v916
        %v929 = vpack.c.b16 %v923, %v921
        %v930 = vpack.c.b16 %v924, %v922
        %v931 = vpack.c.b16 %v927, %v925
        %v932 = vpack.c.b16 %v928, %v926
        %vm937 = vcmask 261120
        %v939 = vsel %vm937, %v700, 0
        %v942 = vsel %vm937, %v701, 0
        %v945 = vsel %vm937, %v702, 0
        %v948 = vsel %vm937, %v703, 0
        %v951 = vsel %vm937, %v704, 0
        %v954 = vsel %vm937, %v705, 0
        %v957 = vsel %vm937, %v706, 0
        %v960 = vsel %vm937, %v707, 0
        %v963 = vsel %vm937, %v708, 0
        %v966 = vsel %vm937, %v709, 0
        %v969 = vsel %vm937, %v710, 0
        %v972 = vsel %vm937, %v711, 0
        %v975 = vsel %vm937, %v712, 0
        %v978 = vsel %vm937, %v713, 0
        %v981 = vsel %vm937, %v714, 0
        %v984 = vsel %vm937, %v715, 0
        %986 = vmatprep.subr.bf16.mxu0 0
        %987 = vmatpush1.bf16.msra.mxu0 0
        %988 = vmatprep.subr.bf16.mxu0 0
        %989 = vmatpush1.bf16.msra.mxu0 0
        %990 = vmatprep.subr.bf16.mxu0 0
        %991 = vmatpush1.bf16.msra.mxu0 0
        %992 = vmatprep.subr.bf16.mxu0 0
        %993 = vmatpush1.bf16.msra.mxu0 0
        %994 = vmatprep.subr.bf16.mxu0 0
        %995 = vmatpush1.bf16.msra.mxu0 0
        %996 = vmatprep.subr.bf16.mxu0 0
        %997 = vmatpush1.bf16.msra.mxu0 0
        %998 = vmatprep.subr.bf16.mxu0 %v932
        %999 = vmatpush1.bf16.msra.mxu0 %v931
        %1000 = vmatprep.subr.bf16.mxu0 %v930
        %1001 = vmatpush1.bf16.msra.mxu0 %v929
        %1002 = vmatprep.subr.bf16.mxu0 0
        %1003 = vmatpush2.bf16.msra.mxu0 0
        %1004 = vmatprep.subr.bf16.mxu0 0
        %1005 = vmatpush2.bf16.msra.mxu0 0
        %1006 = vmatprep.subr.bf16.mxu0 0
        %1007 = vmatpush2.bf16.msra.mxu0 0
        %1008 = vmatprep.subr.bf16.mxu0 0
        %1009 = vmatpush2.bf16.msra.mxu0 0
        %1010 = vmatprep.subr.bf16.mxu0 0
        %1011 = vmatpush2.bf16.msra.mxu0 0
        %1012 = vmatprep.subr.bf16.mxu0 0
        %1013 = vmatpush2.bf16.msra.mxu0 0
        %1014 = vmatprep.subr.bf16.mxu0 0
        %1015 = vmatpush2.bf16.msra.mxu0 0
        %1016 = vmatprep.subr.bf16.mxu0 0
        %1017 = vmatpush2.bf16.msra.mxu0 0
        %1018 = vmatprep.mubr.bf16.mxu0 0
        %1019 = vmatmul.mubr.bf16.gmra.mxu0 %v939
        %v1020 = vpop.f32.mrf.mxu0
        %v1021 = vadd.f32 0.0, %v1020
        %v1022 = vpop.f32.mrf.mxu0
        %v1023 = vadd.f32 0.0, %v1022
        %v1024 = vpop.f32.mrf.mxu0
        %v1025 = vadd.f32 0.0, %v1024
        %v1026 = vpop.f32.mrf.mxu0
        %v1027 = vadd.f32 0.0, %v1026
        %1028 = vmatprep.mubr.bf16.mxu0 0
        %1029 = vmatmul.mubr.bf16.gmra.mxu0 %v942
        %v1030 = vpop.f32.mrf.mxu0
        %v1031 = vadd.f32 0.0, %v1030
        %v1032 = vpop.f32.mrf.mxu0
        %v1033 = vadd.f32 0.0, %v1032
        %v1034 = vpop.f32.mrf.mxu0
        %v1035 = vadd.f32 0.0, %v1034
        %v1036 = vpop.f32.mrf.mxu0
        %v1037 = vadd.f32 0.0, %v1036
        %1038 = vmatprep.mubr.bf16.mxu0 0
        %1039 = vmatmul.mubr.bf16.gmra.mxu0 %v945
        %v1040 = vpop.f32.mrf.mxu0
        %v1041 = vadd.f32 0.0, %v1040
        %v1042 = vpop.f32.mrf.mxu0
        %v1043 = vadd.f32 0.0, %v1042
        %v1044 = vpop.f32.mrf.mxu0
        %v1045 = vadd.f32 0.0, %v1044
        %v1046 = vpop.f32.mrf.mxu0
        %v1047 = vadd.f32 0.0, %v1046
        %1048 = vmatprep.mubr.bf16.mxu0 0
        %1049 = vmatmul.mubr.bf16.gmra.mxu0 %v948
        %v1050 = vpop.f32.mrf.mxu0
        %v1051 = vadd.f32 0.0, %v1050
        %v1052 = vpop.f32.mrf.mxu0
        %v1053 = vadd.f32 0.0, %v1052
        %v1054 = vpop.f32.mrf.mxu0
        %v1055 = vadd.f32 0.0, %v1054
        %v1056 = vpop.f32.mrf.mxu0
        %v1057 = vadd.f32 0.0, %v1056
        %1058 = vmatprep.mubr.bf16.mxu0 0
        %1059 = vmatmul.mubr.bf16.gmra.mxu0 %v951
        %v1060 = vpop.f32.mrf.mxu0
        %v1061 = vadd.f32 0.0, %v1060
        %v1062 = vpop.f32.mrf.mxu0
        %v1063 = vadd.f32 0.0, %v1062
        %v1064 = vpop.f32.mrf.mxu0
        %v1065 = vadd.f32 0.0, %v1064
        %v1066 = vpop.f32.mrf.mxu0
        %v1067 = vadd.f32 0.0, %v1066
        %1068 = vmatprep.mubr.bf16.mxu0 0
        %1069 = vmatmul.mubr.bf16.gmra.mxu0 %v954
        %v1070 = vpop.f32.mrf.mxu0
        %v1071 = vadd.f32 0.0, %v1070
        %v1072 = vpop.f32.mrf.mxu0
        %v1073 = vadd.f32 0.0, %v1072
        %v1074 = vpop.f32.mrf.mxu0
        %v1075 = vadd.f32 0.0, %v1074
        %v1076 = vpop.f32.mrf.mxu0
        %v1077 = vadd.f32 0.0, %v1076
        %1078 = vmatprep.mubr.bf16.mxu0 0
        %1079 = vmatmul.mubr.bf16.gmra.mxu0 %v957
        %v1080 = vpop.f32.mrf.mxu0
        %v1081 = vadd.f32 0.0, %v1080
        %v1082 = vpop.f32.mrf.mxu0
        %v1083 = vadd.f32 0.0, %v1082
        %v1084 = vpop.f32.mrf.mxu0
        %v1085 = vadd.f32 0.0, %v1084
        %v1086 = vpop.f32.mrf.mxu0
        %v1087 = vadd.f32 0.0, %v1086
        %1088 = vmatprep.mubr.bf16.mxu0 0
        %1089 = vmatmul.mubr.bf16.gmra.mxu0 %v960
        %v1090 = vpop.f32.mrf.mxu0
        %v1091 = vadd.f32 0.0, %v1090
        %v1092 = vpop.f32.mrf.mxu0
        %v1093 = vadd.f32 0.0, %v1092
        %v1094 = vpop.f32.mrf.mxu0
        %v1095 = vadd.f32 0.0, %v1094
        %v1096 = vpop.f32.mrf.mxu0
        %v1097 = vadd.f32 0.0, %v1096
        %1098 = vmatprep.mubr.bf16.mxu0 0
        %1099 = vmatmul.mubr.bf16.gmra.mxu0 %v963
        %v1100 = vpop.f32.mrf.mxu0
        %v1101 = vadd.f32 0.0, %v1100
        %v1102 = vpop.f32.mrf.mxu0
        %v1103 = vadd.f32 0.0, %v1102
        %v1104 = vpop.f32.mrf.mxu0
        %v1105 = vadd.f32 0.0, %v1104
        %v1106 = vpop.f32.mrf.mxu0
        %v1107 = vadd.f32 0.0, %v1106
        %1108 = vmatprep.mubr.bf16.mxu0 0
        %1109 = vmatmul.mubr.bf16.gmra.mxu0 %v966
        %v1110 = vpop.f32.mrf.mxu0
        %v1111 = vadd.f32 0.0, %v1110
        %v1112 = vpop.f32.mrf.mxu0
        %v1113 = vadd.f32 0.0, %v1112
        %v1114 = vpop.f32.mrf.mxu0
        %v1115 = vadd.f32 0.0, %v1114
        %v1116 = vpop.f32.mrf.mxu0
        %v1117 = vadd.f32 0.0, %v1116
        %1118 = vmatprep.mubr.bf16.mxu0 0
        %1119 = vmatmul.mubr.bf16.gmra.mxu0 %v969
        %v1120 = vpop.f32.mrf.mxu0
        %v1121 = vadd.f32 0.0, %v1120
        %v1122 = vpop.f32.mrf.mxu0
        %v1123 = vadd.f32 0.0, %v1122
        %v1124 = vpop.f32.mrf.mxu0
        %v1125 = vadd.f32 0.0, %v1124
        %v1126 = vpop.f32.mrf.mxu0
        %v1127 = vadd.f32 0.0, %v1126
        %1128 = vmatprep.mubr.bf16.mxu0 0
        %1129 = vmatmul.mubr.bf16.gmra.mxu0 %v972
        %v1130 = vpop.f32.mrf.mxu0
        %v1131 = vadd.f32 0.0, %v1130
        %v1132 = vpop.f32.mrf.mxu0
        %v1133 = vadd.f32 0.0, %v1132
        %v1134 = vpop.f32.mrf.mxu0
        %v1135 = vadd.f32 0.0, %v1134
        %v1136 = vpop.f32.mrf.mxu0
        %v1137 = vadd.f32 0.0, %v1136
        %1138 = vmatprep.mubr.bf16.mxu0 0
        %1139 = vmatmul.mubr.bf16.gmra.mxu0 %v975
        %v1140 = vpop.f32.mrf.mxu0
        %v1141 = vadd.f32 0.0, %v1140
        %v1142 = vpop.f32.mrf.mxu0
        %v1143 = vadd.f32 0.0, %v1142
        %v1144 = vpop.f32.mrf.mxu0
        %v1145 = vadd.f32 0.0, %v1144
        %v1146 = vpop.f32.mrf.mxu0
        %v1147 = vadd.f32 0.0, %v1146
        %1148 = vmatprep.mubr.bf16.mxu0 0
        %1149 = vmatmul.mubr.bf16.gmra.mxu0 %v978
        %v1150 = vpop.f32.mrf.mxu0
        %v1151 = vadd.f32 0.0, %v1150
        %v1152 = vpop.f32.mrf.mxu0
        %v1153 = vadd.f32 0.0, %v1152
        %v1154 = vpop.f32.mrf.mxu0
        %v1155 = vadd.f32 0.0, %v1154
        %v1156 = vpop.f32.mrf.mxu0
        %v1157 = vadd.f32 0.0, %v1156
        %1158 = vmatprep.mubr.bf16.mxu0 0
        %1159 = vmatmul.mubr.bf16.gmra.mxu0 %v981
        %v1160 = vpop.f32.mrf.mxu0
        %v1161 = vadd.f32 0.0, %v1160
        %v1162 = vpop.f32.mrf.mxu0
        %v1163 = vadd.f32 0.0, %v1162
        %v1164 = vpop.f32.mrf.mxu0
        %v1165 = vadd.f32 0.0, %v1164
        %v1166 = vpop.f32.mrf.mxu0
        %v1167 = vadd.f32 0.0, %v1166
        %1168 = vmatprep.mubr.bf16.mxu0 0
        %1169 = vmatmul.mubr.bf16.gmra.mxu0 %v984
        %v1170 = vpop.f32.mrf.mxu0
        %v1171 = vadd.f32 0.0, %v1170
        %v1172 = vpop.f32.mrf.mxu0
        %v1173 = vadd.f32 0.0, %v1172
        %v1174 = vpop.f32.mrf.mxu0
        %v1175 = vadd.f32 0.0, %v1174
        %v1176 = vpop.f32.mrf.mxu0
        %v1177 = vadd.f32 0.0, %v1176
        %1178 = vdwg.mxu0
        %v1183 = vunpack.c.l.b16 %v909
        %v1184 = vunpack.c.h.b16 %v909
        %v1185 = vunpack.c.l.b16 %v910
        %v1186 = vunpack.c.h.b16 %v910
        %v1187 = vunpack.c.l.b16 %v911
        %v1188 = vunpack.c.h.b16 %v911
        %v1189 = vunpack.c.l.b16 %v912
        %v1190 = vunpack.c.h.b16 %v912
        %v1191 = vpack.c.b16 %v1185, %v1183
        %v1192 = vpack.c.b16 %v1186, %v1184
        %v1193 = vpack.c.b16 %v1189, %v1187
        %v1194 = vpack.c.b16 %v1190, %v1188
        %v1200 = vsel %vm937, %v893, 0
        %v1203 = vsel %vm937, %v894, 0
        %v1206 = vsel %vm937, %v895, 0
        %v1209 = vsel %vm937, %v896, 0
        %v1212 = vsel %vm937, %v897, 0
        %v1215 = vsel %vm937, %v898, 0
        %v1218 = vsel %vm937, %v899, 0
        %v1221 = vsel %vm937, %v900, 0
        %v1224 = vsel %vm937, %v901, 0
        %v1227 = vsel %vm937, %v902, 0
        %v1230 = vsel %vm937, %v903, 0
        %v1233 = vsel %vm937, %v904, 0
        %v1236 = vsel %vm937, %v905, 0
        %v1239 = vsel %vm937, %v906, 0
        %v1242 = vsel %vm937, %v907, 0
        %v1245 = vsel %vm937, %v908, 0
        %1247 = vmatprep.subr.bf16.mxu0 0
        %1248 = vmatpush1.bf16.msra.mxu0 0
        %1249 = vmatprep.subr.bf16.mxu0 0
        %1250 = vmatpush1.bf16.msra.mxu0 0
        %1251 = vmatprep.subr.bf16.mxu0 0
        %1252 = vmatpush1.bf16.msra.mxu0 0
        %1253 = vmatprep.subr.bf16.mxu0 0
        %1254 = vmatpush1.bf16.msra.mxu0 0
        %1255 = vmatprep.subr.bf16.mxu0 0
        %1256 = vmatpush1.bf16.msra.mxu0 0
        %1257 = vmatprep.subr.bf16.mxu0 0
        %1258 = vmatpush1.bf16.msra.mxu0 0
        %1259 = vmatprep.subr.bf16.mxu0 %v1194
        %1260 = vmatpush1.bf16.msra.mxu0 %v1193
        %1261 = vmatprep.subr.bf16.mxu0 %v1192
        %1262 = vmatpush1.bf16.msra.mxu0 %v1191
        %1263 = vmatprep.subr.bf16.mxu0 0
        %1264 = vmatpush2.bf16.msra.mxu0 0
        %1265 = vmatprep.subr.bf16.mxu0 0
        %1266 = vmatpush2.bf16.msra.mxu0 0
        %1267 = vmatprep.subr.bf16.mxu0 0
        %1268 = vmatpush2.bf16.msra.mxu0 0
        %1269 = vmatprep.subr.bf16.mxu0 0
        %1270 = vmatpush2.bf16.msra.mxu0 0
        %1271 = vmatprep.subr.bf16.mxu0 0
        %1272 = vmatpush2.bf16.msra.mxu0 0
        %1273 = vmatprep.subr.bf16.mxu0 0
        %1274 = vmatpush2.bf16.msra.mxu0 0
        %1275 = vmatprep.subr.bf16.mxu0 0
        %1276 = vmatpush2.bf16.msra.mxu0 0
        %1277 = vmatprep.subr.bf16.mxu0 0
        %1278 = vmatpush2.bf16.msra.mxu0 0
        %1279 = vmatprep.mubr.bf16.mxu0 0
        %1280 = vmatmul.mubr.bf16.gmra.mxu0 %v1200
        %v1281 = vpop.f32.mrf.mxu0
        %v1282 = vadd.f32 %v1021, %v1281
        %v1283 = vpop.f32.mrf.mxu0
        %v1284 = vadd.f32 %v1023, %v1283
        %v1285 = vpop.f32.mrf.mxu0
        %v1286 = vadd.f32 %v1025, %v1285
        %v1287 = vpop.f32.mrf.mxu0
        %v1288 = vadd.f32 %v1027, %v1287
        %1289 = vmatprep.mubr.bf16.mxu0 0
        %1290 = vmatmul.mubr.bf16.gmra.mxu0 %v1203
        %v1291 = vpop.f32.mrf.mxu0
        %v1292 = vadd.f32 %v1031, %v1291
        %v1293 = vpop.f32.mrf.mxu0
        %v1294 = vadd.f32 %v1033, %v1293
        %v1295 = vpop.f32.mrf.mxu0
        %v1296 = vadd.f32 %v1035, %v1295
        %v1297 = vpop.f32.mrf.mxu0
        %v1298 = vadd.f32 %v1037, %v1297
        %1299 = vmatprep.mubr.bf16.mxu0 0
        %1300 = vmatmul.mubr.bf16.gmra.mxu0 %v1206
        %v1301 = vpop.f32.mrf.mxu0
        %v1302 = vadd.f32 %v1041, %v1301
        %v1303 = vpop.f32.mrf.mxu0
        %v1304 = vadd.f32 %v1043, %v1303
        %v1305 = vpop.f32.mrf.mxu0
        %v1306 = vadd.f32 %v1045, %v1305
        %v1307 = vpop.f32.mrf.mxu0
        %v1308 = vadd.f32 %v1047, %v1307
        %1309 = vmatprep.mubr.bf16.mxu0 0
        %1310 = vmatmul.mubr.bf16.gmra.mxu0 %v1209
        %v1311 = vpop.f32.mrf.mxu0
        %v1312 = vadd.f32 %v1051, %v1311
        %v1313 = vpop.f32.mrf.mxu0
        %v1314 = vadd.f32 %v1053, %v1313
        %v1315 = vpop.f32.mrf.mxu0
        %v1316 = vadd.f32 %v1055, %v1315
        %v1317 = vpop.f32.mrf.mxu0
        %v1318 = vadd.f32 %v1057, %v1317
        %1319 = vmatprep.mubr.bf16.mxu0 0
        %1320 = vmatmul.mubr.bf16.gmra.mxu0 %v1212
        %v1321 = vpop.f32.mrf.mxu0
        %v1322 = vadd.f32 %v1061, %v1321
        %v1323 = vpop.f32.mrf.mxu0
        %v1324 = vadd.f32 %v1063, %v1323
        %v1325 = vpop.f32.mrf.mxu0
        %v1326 = vadd.f32 %v1065, %v1325
        %v1327 = vpop.f32.mrf.mxu0
        %v1328 = vadd.f32 %v1067, %v1327
        %1329 = vmatprep.mubr.bf16.mxu0 0
        %1330 = vmatmul.mubr.bf16.gmra.mxu0 %v1215
        %v1331 = vpop.f32.mrf.mxu0
        %v1332 = vadd.f32 %v1071, %v1331
        %v1333 = vpop.f32.mrf.mxu0
        %v1334 = vadd.f32 %v1073, %v1333
        %v1335 = vpop.f32.mrf.mxu0
        %v1336 = vadd.f32 %v1075, %v1335
        %v1337 = vpop.f32.mrf.mxu0
        %v1338 = vadd.f32 %v1077, %v1337
        %1339 = vmatprep.mubr.bf16.mxu0 0
        %1340 = vmatmul.mubr.bf16.gmra.mxu0 %v1218
        %v1341 = vpop.f32.mrf.mxu0
        %v1342 = vadd.f32 %v1081, %v1341
        %v1343 = vpop.f32.mrf.mxu0
        %v1344 = vadd.f32 %v1083, %v1343
        %v1345 = vpop.f32.mrf.mxu0
        %v1346 = vadd.f32 %v1085, %v1345
        %v1347 = vpop.f32.mrf.mxu0
        %v1348 = vadd.f32 %v1087, %v1347
        %1349 = vmatprep.mubr.bf16.mxu0 0
        %1350 = vmatmul.mubr.bf16.gmra.mxu0 %v1221
        %v1351 = vpop.f32.mrf.mxu0
        %v1352 = vadd.f32 %v1091, %v1351
        %v1353 = vpop.f32.mrf.mxu0
        %v1354 = vadd.f32 %v1093, %v1353
        %v1355 = vpop.f32.mrf.mxu0
        %v1356 = vadd.f32 %v1095, %v1355
        %v1357 = vpop.f32.mrf.mxu0
        %v1358 = vadd.f32 %v1097, %v1357
        %1359 = vmatprep.mubr.bf16.mxu0 0
        %1360 = vmatmul.mubr.bf16.gmra.mxu0 %v1224
        %v1361 = vpop.f32.mrf.mxu0
        %v1362 = vadd.f32 %v1101, %v1361
        %v1363 = vpop.f32.mrf.mxu0
        %v1364 = vadd.f32 %v1103, %v1363
        %v1365 = vpop.f32.mrf.mxu0
        %v1366 = vadd.f32 %v1105, %v1365
        %v1367 = vpop.f32.mrf.mxu0
        %v1368 = vadd.f32 %v1107, %v1367
        %1369 = vmatprep.mubr.bf16.mxu0 0
        %1370 = vmatmul.mubr.bf16.gmra.mxu0 %v1227
        %v1371 = vpop.f32.mrf.mxu0
        %v1372 = vadd.f32 %v1111, %v1371
        %v1373 = vpop.f32.mrf.mxu0
        %v1374 = vadd.f32 %v1113, %v1373
        %v1375 = vpop.f32.mrf.mxu0
        %v1376 = vadd.f32 %v1115, %v1375
        %v1377 = vpop.f32.mrf.mxu0
        %v1378 = vadd.f32 %v1117, %v1377
        %1379 = vmatprep.mubr.bf16.mxu0 0
        %1380 = vmatmul.mubr.bf16.gmra.mxu0 %v1230
        %v1381 = vpop.f32.mrf.mxu0
        %v1382 = vadd.f32 %v1121, %v1381
        %v1383 = vpop.f32.mrf.mxu0
        %v1384 = vadd.f32 %v1123, %v1383
        %v1385 = vpop.f32.mrf.mxu0
        %v1386 = vadd.f32 %v1125, %v1385
        %v1387 = vpop.f32.mrf.mxu0
        %v1388 = vadd.f32 %v1127, %v1387
        %1389 = vmatprep.mubr.bf16.mxu0 0
        %1390 = vmatmul.mubr.bf16.gmra.mxu0 %v1233
        %v1391 = vpop.f32.mrf.mxu0
        %v1392 = vadd.f32 %v1131, %v1391
        %v1393 = vpop.f32.mrf.mxu0
        %v1394 = vadd.f32 %v1133, %v1393
        %v1395 = vpop.f32.mrf.mxu0
        %v1396 = vadd.f32 %v1135, %v1395
        %v1397 = vpop.f32.mrf.mxu0
        %v1398 = vadd.f32 %v1137, %v1397
        %1399 = vmatprep.mubr.bf16.mxu0 0
        %1400 = vmatmul.mubr.bf16.gmra.mxu0 %v1236
        %v1401 = vpop.f32.mrf.mxu0
        %v1402 = vadd.f32 %v1141, %v1401
        %v1403 = vpop.f32.mrf.mxu0
        %v1404 = vadd.f32 %v1143, %v1403
        %v1405 = vpop.f32.mrf.mxu0
        %v1406 = vadd.f32 %v1145, %v1405
        %v1407 = vpop.f32.mrf.mxu0
        %v1408 = vadd.f32 %v1147, %v1407
        %1409 = vmatprep.mubr.bf16.mxu0 0
        %1410 = vmatmul.mubr.bf16.gmra.mxu0 %v1239
        %v1411 = vpop.f32.mrf.mxu0
        %v1412 = vadd.f32 %v1151, %v1411
        %v1413 = vpop.f32.mrf.mxu0
        %v1414 = vadd.f32 %v1153, %v1413
        %v1415 = vpop.f32.mrf.mxu0
        %v1416 = vadd.f32 %v1155, %v1415
        %v1417 = vpop.f32.mrf.mxu0
        %v1418 = vadd.f32 %v1157, %v1417
        %1419 = vmatprep.mubr.bf16.mxu0 0
        %1420 = vmatmul.mubr.bf16.gmra.mxu0 %v1242
        %v1421 = vpop.f32.mrf.mxu0
        %v1422 = vadd.f32 %v1161, %v1421
        %v1423 = vpop.f32.mrf.mxu0
        %v1424 = vadd.f32 %v1163, %v1423
        %v1425 = vpop.f32.mrf.mxu0
        %v1426 = vadd.f32 %v1165, %v1425
        %v1427 = vpop.f32.mrf.mxu0
        %v1428 = vadd.f32 %v1167, %v1427
        %1429 = vmatprep.mubr.bf16.mxu0 0
        %1430 = vmatmul.mubr.bf16.gmra.mxu0 %v1245
        %v1431 = vpop.f32.mrf.mxu0
        %v1432 = vadd.f32 %v1171, %v1431
        %v1433 = vpop.f32.mrf.mxu0
        %v1434 = vadd.f32 %v1173, %v1433
        %v1435 = vpop.f32.mrf.mxu0
        %v1436 = vadd.f32 %v1175, %v1435
        %v1437 = vpop.f32.mrf.mxu0
        %v1438 = vadd.f32 %v1177, %v1437
        %1439 = vdwg.mxu0
        %v1440 = vld [vmem:[%s7] sm:$0x3]
        %v1442 = vlaneseq
        %v1443 = vshrl.u32 %v1442, 7
        %v1444 = vsub.s32 0, %v1443
        %v1445 = vrot.slane %v1440, %v1444
        %v1446 = vlaneseq
        %v1447 = vshrl.u32 %v1446, 7
        %v1448 = vsub.s32 1, %v1447
        %v1449 = vrot.slane %v1440, %v1448
        %v1452 = vadd.f32 %v1282, %v1445
        %v1453 = vadd.f32 %v1284, %v1449
        %v1454 = vadd.f32 %v1286, %v1445
        %v1455 = vadd.f32 %v1288, %v1449
        %v1456 = vadd.f32 %v1292, %v1445
        %v1457 = vadd.f32 %v1294, %v1449
        %v1458 = vadd.f32 %v1296, %v1445
        %v1459 = vadd.f32 %v1298, %v1449
        %v1460 = vadd.f32 %v1302, %v1445
        %v1461 = vadd.f32 %v1304, %v1449
        %v1462 = vadd.f32 %v1306, %v1445
        %v1463 = vadd.f32 %v1308, %v1449
        %v1464 = vadd.f32 %v1312, %v1445
        %v1465 = vadd.f32 %v1314, %v1449
        %v1466 = vadd.f32 %v1316, %v1445
        %v1467 = vadd.f32 %v1318, %v1449
        %v1468 = vadd.f32 %v1322, %v1445
        %v1469 = vadd.f32 %v1324, %v1449
        %v1470 = vadd.f32 %v1326, %v1445
        %v1471 = vadd.f32 %v1328, %v1449
        %v1472 = vadd.f32 %v1332, %v1445
        %v1473 = vadd.f32 %v1334, %v1449
        %v1474 = vadd.f32 %v1336, %v1445
        %v1475 = vadd.f32 %v1338, %v1449
        %v1476 = vadd.f32 %v1342, %v1445
        %v1477 = vadd.f32 %v1344, %v1449
        %v1478 = vadd.f32 %v1346, %v1445
        %v1479 = vadd.f32 %v1348, %v1449
        %v1480 = vadd.f32 %v1352, %v1445
        %v1481 = vadd.f32 %v1354, %v1449
        %v1482 = vadd.f32 %v1356, %v1445
        %v1483 = vadd.f32 %v1358, %v1449
        %v1484 = vadd.f32 %v1362, %v1445
        %v1485 = vadd.f32 %v1364, %v1449
        %v1486 = vadd.f32 %v1366, %v1445
        %v1487 = vadd.f32 %v1368, %v1449
        %v1488 = vadd.f32 %v1372, %v1445
        %v1489 = vadd.f32 %v1374, %v1449
        %v1490 = vadd.f32 %v1376, %v1445
        %v1491 = vadd.f32 %v1378, %v1449
        %v1492 = vadd.f32 %v1382, %v1445
        %v1493 = vadd.f32 %v1384, %v1449
        %v1494 = vadd.f32 %v1386, %v1445
        %v1495 = vadd.f32 %v1388, %v1449
        %v1496 = vadd.f32 %v1392, %v1445
        %v1497 = vadd.f32 %v1394, %v1449
        %v1498 = vadd.f32 %v1396, %v1445
        %v1499 = vadd.f32 %v1398, %v1449
        %v1500 = vadd.f32 %v1402, %v1445
        %v1501 = vadd.f32 %v1404, %v1449
        %v1502 = vadd.f32 %v1406, %v1445
        %v1503 = vadd.f32 %v1408, %v1449
        %v1504 = vadd.f32 %v1412, %v1445
        %v1505 = vadd.f32 %v1414, %v1449
        %v1506 = vadd.f32 %v1416, %v1445
        %v1507 = vadd.f32 %v1418, %v1449
        %v1508 = vadd.f32 %v1422, %v1445
        %v1509 = vadd.f32 %v1424, %v1449
        %v1510 = vadd.f32 %v1426, %v1445
        %v1511 = vadd.f32 %v1428, %v1449
        %v1512 = vadd.f32 %v1432, %v1445
        %v1513 = vadd.f32 %v1434, %v1449
        %v1514 = vadd.f32 %v1436, %v1445
        %v1515 = vadd.f32 %v1438, %v1449
        %v1516 = vmax.f32 %v1452, 0.0
        %v1517 = vmax.f32 %v1453, 0.0
        %v1518 = vmax.f32 %v1454, 0.0
        %v1519 = vmax.f32 %v1455, 0.0
        %v1520 = vmax.f32 %v1456, 0.0
        %v1521 = vmax.f32 %v1457, 0.0
        %v1522 = vmax.f32 %v1458, 0.0
        %v1523 = vmax.f32 %v1459, 0.0
        %v1524 = vmax.f32 %v1460, 0.0
        %v1525 = vmax.f32 %v1461, 0.0
        %v1526 = vmax.f32 %v1462, 0.0
        %v1527 = vmax.f32 %v1463, 0.0
        %v1528 = vmax.f32 %v1464, 0.0
        %v1529 = vmax.f32 %v1465, 0.0
        %v1530 = vmax.f32 %v1466, 0.0
        %v1531 = vmax.f32 %v1467, 0.0
        %v1532 = vmax.f32 %v1468, 0.0
        %v1533 = vmax.f32 %v1469, 0.0
        %v1534 = vmax.f32 %v1470, 0.0
        %v1535 = vmax.f32 %v1471, 0.0
        %v1536 = vmax.f32 %v1472, 0.0
        %v1537 = vmax.f32 %v1473, 0.0
        %v1538 = vmax.f32 %v1474, 0.0
        %v1539 = vmax.f32 %v1475, 0.0
        %v1540 = vmax.f32 %v1476, 0.0
        %v1541 = vmax.f32 %v1477, 0.0
        %v1542 = vmax.f32 %v1478, 0.0
        %v1543 = vmax.f32 %v1479, 0.0
        %v1544 = vmax.f32 %v1480, 0.0
        %v1545 = vmax.f32 %v1481, 0.0
        %v1546 = vmax.f32 %v1482, 0.0
        %v1547 = vmax.f32 %v1483, 0.0
        %v1548 = vmax.f32 %v1484, 0.0
        %v1549 = vmax.f32 %v1485, 0.0
        %v1550 = vmax.f32 %v1486, 0.0
        %v1551 = vmax.f32 %v1487, 0.0
        %v1552 = vmax.f32 %v1488, 0.0
        %v1553 = vmax.f32 %v1489, 0.0
        %v1554 = vmax.f32 %v1490, 0.0
        %v1555 = vmax.f32 %v1491, 0.0
        %v1556 = vmax.f32 %v1492, 0.0
        %v1557 = vmax.f32 %v1493, 0.0
        %v1558 = vmax.f32 %v1494, 0.0
        %v1559 = vmax.f32 %v1495, 0.0
        %v1560 = vmax.f32 %v1496, 0.0
        %v1561 = vmax.f32 %v1497, 0.0
        %v1562 = vmax.f32 %v1498, 0.0
        %v1563 = vmax.f32 %v1499, 0.0
        %v1564 = vmax.f32 %v1500, 0.0
        %v1565 = vmax.f32 %v1501, 0.0
        %v1566 = vmax.f32 %v1502, 0.0
        %v1567 = vmax.f32 %v1503, 0.0
        %v1568 = vmax.f32 %v1504, 0.0
        %v1569 = vmax.f32 %v1505, 0.0
        %v1570 = vmax.f32 %v1506, 0.0
        %v1571 = vmax.f32 %v1507, 0.0
        %v1572 = vmax.f32 %v1508, 0.0
        %v1573 = vmax.f32 %v1509, 0.0
        %v1574 = vmax.f32 %v1510, 0.0
        %v1575 = vmax.f32 %v1511, 0.0
        %v1576 = vmax.f32 %v1512, 0.0
        %v1577 = vmax.f32 %v1513, 0.0
        %v1578 = vmax.f32 %v1514, 0.0
        %v1579 = vmax.f32 %v1515, 0.0
        %v1580 = vld [vmem:[%s7 + $0x2] sm:$0x1]
        %v1581 = vpack.c.bf16 %v1518, %v1516
        %v1582 = vpack.c.bf16 %v1519, %v1517
        %v1583 = vpack.c.bf16 %v1522, %v1520
        %v1584 = vpack.c.bf16 %v1523, %v1521
        %v1585 = vpack.c.bf16 %v1526, %v1524
        %v1586 = vpack.c.bf16 %v1527, %v1525
        %v1587 = vpack.c.bf16 %v1530, %v1528
        %v1588 = vpack.c.bf16 %v1531, %v1529
        %v1589 = vpack.c.bf16 %v1534, %v1532
        %v1590 = vpack.c.bf16 %v1535, %v1533
        %v1591 = vpack.c.bf16 %v1538, %v1536
        %v1592 = vpack.c.bf16 %v1539, %v1537
        %v1593 = vpack.c.bf16 %v1542, %v1540
        %v1594 = vpack.c.bf16 %v1543, %v1541
        %v1595 = vpack.c.bf16 %v1546, %v1544
        %v1596 = vpack.c.bf16 %v1547, %v1545
        %v1597 = vpack.c.bf16 %v1550, %v1548
        %v1598 = vpack.c.bf16 %v1551, %v1549
        %v1599 = vpack.c.bf16 %v1554, %v1552
        %v1600 = vpack.c.bf16 %v1555, %v1553
        %v1601 = vpack.c.bf16 %v1558, %v1556
        %v1602 = vpack.c.bf16 %v1559, %v1557
        %v1603 = vpack.c.bf16 %v1562, %v1560
        %v1604 = vpack.c.bf16 %v1563, %v1561
        %v1605 = vpack.c.bf16 %v1566, %v1564
        %v1606 = vpack.c.bf16 %v1567, %v1565
        %v1607 = vpack.c.bf16 %v1570, %v1568
        %v1608 = vpack.c.bf16 %v1571, %v1569
        %v1609 = vpack.c.bf16 %v1574, %v1572
        %v1610 = vpack.c.bf16 %v1575, %v1573
        %v1611 = vpack.c.bf16 %v1578, %v1576
        %v1612 = vpack.c.bf16 %v1579, %v1577
        %v1613 = vld [vmem:[%s4] sm:$0xff]
        %v1614 = vld [vmem:[%s4 + $0x8] sm:$0xff]
        %v1615 = vld [vmem:[%s4 + $0x10] sm:$0xff]
        %v1616 = vld [vmem:[%s4 + $0x18] sm:$0xff]
        %v1617 = vld [vmem:[%s4 + $0x20] sm:$0xff]
        %v1618 = vld [vmem:[%s4 + $0x28] sm:$0xff]
        %v1619 = vld [vmem:[%s4 + $0x30] sm:$0xff]
        %v1620 = vld [vmem:[%s4 + $0x38] sm:$0xff]
        %v1621 = vld [vmem:[%s4 + $0x40] sm:$0xff]
        %v1622 = vld [vmem:[%s4 + $0x48] sm:$0xff]
        %v1623 = vld [vmem:[%s4 + $0x50] sm:$0xff]
        %v1624 = vld [vmem:[%s4 + $0x58] sm:$0xff]
        %v1625 = vld [vmem:[%s4 + $0x60] sm:$0xff]
        %v1626 = vld [vmem:[%s4 + $0x68] sm:$0xff]
        %v1627 = vld [vmem:[%s4 + $0x70] sm:$0xff]
        %v1628 = vld [vmem:[%s4 + $0x78] sm:$0xff]
        %v1629 = vld [vmem:[%s4 + $0x80] sm:$0xff]
        %v1630 = vld [vmem:[%s4 + $0x88] sm:$0xff]
        %v1631 = vld [vmem:[%s4 + $0x90] sm:$0xff]
        %v1632 = vld [vmem:[%s4 + $0x98] sm:$0xff]
        %v1633 = vld [vmem:[%s4 + $0xa0] sm:$0xff]
        %v1634 = vld [vmem:[%s4 + $0xa8] sm:$0xff]
        %v1635 = vld [vmem:[%s4 + $0xb0] sm:$0xff]
        %v1636 = vld [vmem:[%s4 + $0xb8] sm:$0xff]
        %v1637 = vld [vmem:[%s4 + $0xc0] sm:$0xff]
        %v1638 = vld [vmem:[%s4 + $0xc8] sm:$0xff]
        %v1639 = vld [vmem:[%s4 + $0xd0] sm:$0xff]
        %v1640 = vld [vmem:[%s4 + $0xd8] sm:$0xff]
        %v1641 = vld [vmem:[%s4 + $0xe0] sm:$0xff]
        %v1642 = vld [vmem:[%s4 + $0xe8] sm:$0xff]
        %v1643 = vld [vmem:[%s4 + $0xf0] sm:$0xff]
        %v1644 = vld [vmem:[%s4 + $0xf8] sm:$0xff]
        %v1677 = vunpack.c.l.b16 %v1613
        %v1678 = vunpack.c.h.b16 %v1613
        %v1679 = vunpack.c.l.b16 %v1614
        %v1680 = vunpack.c.h.b16 %v1614
        %v1681 = vunpack.c.l.b16 %v1615
        %v1682 = vunpack.c.h.b16 %v1615
        %v1683 = vunpack.c.l.b16 %v1616
        %v1684 = vunpack.c.h.b16 %v1616
        %v1685 = vunpack.c.l.b16 %v1617
        %v1686 = vunpack.c.h.b16 %v1617
        %v1687 = vunpack.c.l.b16 %v1618
        %v1688 = vunpack.c.h.b16 %v1618
        %v1689 = vunpack.c.l.b16 %v1619
        %v1690 = vunpack.c.h.b16 %v1619
        %v1691 = vunpack.c.l.b16 %v1620
        %v1692 = vunpack.c.h.b16 %v1620
        %v1693 = vunpack.c.l.b16 %v1621
        %v1694 = vunpack.c.h.b16 %v1621
        %v1695 = vunpack.c.l.b16 %v1622
        %v1696 = vunpack.c.h.b16 %v1622
        %v1697 = vunpack.c.l.b16 %v1623
        %v1698 = vunpack.c.h.b16 %v1623
        %v1699 = vunpack.c.l.b16 %v1624
        %v1700 = vunpack.c.h.b16 %v1624
        %v1701 = vunpack.c.l.b16 %v1625
        %v1702 = vunpack.c.h.b16 %v1625
        %v1703 = vunpack.c.l.b16 %v1626
        %v1704 = vunpack.c.h.b16 %v1626
        %v1705 = vunpack.c.l.b16 %v1627
        %v1706 = vunpack.c.h.b16 %v1627
        %v1707 = vunpack.c.l.b16 %v1628
        %v1708 = vunpack.c.h.b16 %v1628
        %v1709 = vunpack.c.l.b16 %v1629
        %v1710 = vunpack.c.h.b16 %v1629
        %v1711 = vunpack.c.l.b16 %v1630
        %v1712 = vunpack.c.h.b16 %v1630
        %v1713 = vunpack.c.l.b16 %v1631
        %v1714 = vunpack.c.h.b16 %v1631
        %v1715 = vunpack.c.l.b16 %v1632
        %v1716 = vunpack.c.h.b16 %v1632
        %v1717 = vunpack.c.l.b16 %v1633
        %v1718 = vunpack.c.h.b16 %v1633
        %v1719 = vunpack.c.l.b16 %v1634
        %v1720 = vunpack.c.h.b16 %v1634
        %v1721 = vunpack.c.l.b16 %v1635
        %v1722 = vunpack.c.h.b16 %v1635
        %v1723 = vunpack.c.l.b16 %v1636
        %v1724 = vunpack.c.h.b16 %v1636
        %v1725 = vunpack.c.l.b16 %v1637
        %v1726 = vunpack.c.h.b16 %v1637
        %v1727 = vunpack.c.l.b16 %v1638
        %v1728 = vunpack.c.h.b16 %v1638
        %v1729 = vunpack.c.l.b16 %v1639
        %v1730 = vunpack.c.h.b16 %v1639
        %v1731 = vunpack.c.l.b16 %v1640
        %v1732 = vunpack.c.h.b16 %v1640
        %v1733 = vunpack.c.l.b16 %v1641
        %v1734 = vunpack.c.h.b16 %v1641
        %v1735 = vunpack.c.l.b16 %v1642
        %v1736 = vunpack.c.h.b16 %v1642
        %v1737 = vunpack.c.l.b16 %v1643
        %v1738 = vunpack.c.h.b16 %v1643
        %v1739 = vunpack.c.l.b16 %v1644
        %v1740 = vunpack.c.h.b16 %v1644
        %v1741 = vpack.c.b16 %v1679, %v1677
        %v1742 = vpack.c.b16 %v1680, %v1678
        %v1743 = vpack.c.b16 %v1683, %v1681
        %v1744 = vpack.c.b16 %v1684, %v1682
        %v1745 = vpack.c.b16 %v1687, %v1685
        %v1746 = vpack.c.b16 %v1688, %v1686
        %v1747 = vpack.c.b16 %v1691, %v1689
        %v1748 = vpack.c.b16 %v1692, %v1690
        %v1749 = vpack.c.b16 %v1695, %v1693
        %v1750 = vpack.c.b16 %v1696, %v1694
        %v1751 = vpack.c.b16 %v1699, %v1697
        %v1752 = vpack.c.b16 %v1700, %v1698
        %v1753 = vpack.c.b16 %v1703, %v1701
        %v1754 = vpack.c.b16 %v1704, %v1702
        %v1755 = vpack.c.b16 %v1707, %v1705
        %v1756 = vpack.c.b16 %v1708, %v1706
        %v1757 = vpack.c.b16 %v1711, %v1709
        %v1758 = vpack.c.b16 %v1712, %v1710
        %v1759 = vpack.c.b16 %v1715, %v1713
        %v1760 = vpack.c.b16 %v1716, %v1714
        %v1761 = vpack.c.b16 %v1719, %v1717
        %v1762 = vpack.c.b16 %v1720, %v1718
        %v1763 = vpack.c.b16 %v1723, %v1721
        %v1764 = vpack.c.b16 %v1724, %v1722
        %v1765 = vpack.c.b16 %v1727, %v1725
        %v1766 = vpack.c.b16 %v1728, %v1726
        %v1767 = vpack.c.b16 %v1731, %v1729
        %v1768 = vpack.c.b16 %v1732, %v1730
        %v1769 = vpack.c.b16 %v1735, %v1733
        %v1770 = vpack.c.b16 %v1736, %v1734
        %v1771 = vpack.c.b16 %v1739, %v1737
        %v1772 = vpack.c.b16 %v1740, %v1738
        %1805 = vmatprep.subr.bf16.mxu0 %v1756
        %1806 = vmatpush1.bf16.msra.mxu0 %v1755
        %1807 = vmatprep.subr.bf16.mxu0 %v1754
        %1808 = vmatpush1.bf16.msra.mxu0 %v1753
        %1809 = vmatprep.subr.bf16.mxu0 %v1752
        %1810 = vmatpush1.bf16.msra.mxu0 %v1751
        %1811 = vmatprep.subr.bf16.mxu0 %v1750
        %1812 = vmatpush1.bf16.msra.mxu0 %v1749
        %1813 = vmatprep.subr.bf16.mxu0 %v1748
        %1814 = vmatpush1.bf16.msra.mxu0 %v1747
        %1815 = vmatprep.subr.bf16.mxu0 %v1746
        %1816 = vmatpush1.bf16.msra.mxu0 %v1745
        %1817 = vmatprep.subr.bf16.mxu0 %v1744
        %1818 = vmatpush1.bf16.msra.mxu0 %v1743
        %1819 = vmatprep.subr.bf16.mxu0 %v1742
        %1820 = vmatpush1.bf16.msra.mxu0 %v1741
        %1821 = vmatprep.subr.bf16.mxu0 %v1772
        %1822 = vmatpush2.bf16.msra.mxu0 %v1771
        %1823 = vmatprep.subr.bf16.mxu0 %v1770
        %1824 = vmatpush2.bf16.msra.mxu0 %v1769
        %1825 = vmatprep.subr.bf16.mxu0 %v1768
        %1826 = vmatpush2.bf16.msra.mxu0 %v1767
        %1827 = vmatprep.subr.bf16.mxu0 %v1766
        %1828 = vmatpush2.bf16.msra.mxu0 %v1765
        %1829 = vmatprep.subr.bf16.mxu0 %v1764
        %1830 = vmatpush2.bf16.msra.mxu0 %v1763
        %1831 = vmatprep.subr.bf16.mxu0 %v1762
        %1832 = vmatpush2.bf16.msra.mxu0 %v1761
        %1833 = vmatprep.subr.bf16.mxu0 %v1760
        %1834 = vmatpush2.bf16.msra.mxu0 %v1759
        %1835 = vmatprep.subr.bf16.mxu0 %v1758
        %1836 = vmatpush2.bf16.msra.mxu0 %v1757
        %1837 = vmatprep.mubr.bf16.mxu0 %v1582
        %1838 = vmatmul.mubr.bf16.gmra.mxu0 %v1581
        %v1839 = vpop.f32.mrf.mxu0
        %v1840 = vadd.f32 0.0, %v1839
        %v1841 = vpop.f32.mrf.mxu0
        %v1842 = vadd.f32 0.0, %v1841
        %v1843 = vpop.f32.mrf.mxu0
        %v1844 = vadd.f32 0.0, %v1843
        %v1845 = vpop.f32.mrf.mxu0
        %v1846 = vadd.f32 0.0, %v1845
        %1847 = vmatprep.mubr.bf16.mxu0 %v1584
        %1848 = vmatmul.mubr.bf16.gmra.mxu0 %v1583
        %v1849 = vpop.f32.mrf.mxu0
        %v1850 = vadd.f32 0.0, %v1849
        %v1851 = vpop.f32.mrf.mxu0
        %v1852 = vadd.f32 0.0, %v1851
        %v1853 = vpop.f32.mrf.mxu0
        %v1854 = vadd.f32 0.0, %v1853
        %v1855 = vpop.f32.mrf.mxu0
        %v1856 = vadd.f32 0.0, %v1855
        %1857 = vmatprep.mubr.bf16.mxu0 %v1586
        %1858 = vmatmul.mubr.bf16.gmra.mxu0 %v1585
        %v1859 = vpop.f32.mrf.mxu0
        %v1860 = vadd.f32 0.0, %v1859
        %v1861 = vpop.f32.mrf.mxu0
        %v1862 = vadd.f32 0.0, %v1861
        %v1863 = vpop.f32.mrf.mxu0
        %v1864 = vadd.f32 0.0, %v1863
        %v1865 = vpop.f32.mrf.mxu0
        %v1866 = vadd.f32 0.0, %v1865
        %1867 = vmatprep.mubr.bf16.mxu0 %v1588
        %1868 = vmatmul.mubr.bf16.gmra.mxu0 %v1587
        %v1869 = vpop.f32.mrf.mxu0
        %v1870 = vadd.f32 0.0, %v1869
        %v1871 = vpop.f32.mrf.mxu0
        %v1872 = vadd.f32 0.0, %v1871
        %v1873 = vpop.f32.mrf.mxu0
        %v1874 = vadd.f32 0.0, %v1873
        %v1875 = vpop.f32.mrf.mxu0
        %v1876 = vadd.f32 0.0, %v1875
        %1877 = vmatprep.mubr.bf16.mxu0 %v1590
        %1878 = vmatmul.mubr.bf16.gmra.mxu0 %v1589
        %v1879 = vpop.f32.mrf.mxu0
        %v1880 = vadd.f32 0.0, %v1879
        %v1881 = vpop.f32.mrf.mxu0
        %v1882 = vadd.f32 0.0, %v1881
        %v1883 = vpop.f32.mrf.mxu0
        %v1884 = vadd.f32 0.0, %v1883
        %v1885 = vpop.f32.mrf.mxu0
        %v1886 = vadd.f32 0.0, %v1885
        %1887 = vmatprep.mubr.bf16.mxu0 %v1592
        %1888 = vmatmul.mubr.bf16.gmra.mxu0 %v1591
        %v1889 = vpop.f32.mrf.mxu0
        %v1890 = vadd.f32 0.0, %v1889
        %v1891 = vpop.f32.mrf.mxu0
        %v1892 = vadd.f32 0.0, %v1891
        %v1893 = vpop.f32.mrf.mxu0
        %v1894 = vadd.f32 0.0, %v1893
        %v1895 = vpop.f32.mrf.mxu0
        %v1896 = vadd.f32 0.0, %v1895
        %1897 = vmatprep.mubr.bf16.mxu0 %v1594
        %1898 = vmatmul.mubr.bf16.gmra.mxu0 %v1593
        %v1899 = vpop.f32.mrf.mxu0
        %v1900 = vadd.f32 0.0, %v1899
        %v1901 = vpop.f32.mrf.mxu0
        %v1902 = vadd.f32 0.0, %v1901
        %v1903 = vpop.f32.mrf.mxu0
        %v1904 = vadd.f32 0.0, %v1903
        %v1905 = vpop.f32.mrf.mxu0
        %v1906 = vadd.f32 0.0, %v1905
        %1907 = vmatprep.mubr.bf16.mxu0 %v1596
        %1908 = vmatmul.mubr.bf16.gmra.mxu0 %v1595
        %v1909 = vpop.f32.mrf.mxu0
        %v1910 = vadd.f32 0.0, %v1909
        %v1911 = vpop.f32.mrf.mxu0
        %v1912 = vadd.f32 0.0, %v1911
        %v1913 = vpop.f32.mrf.mxu0
        %v1914 = vadd.f32 0.0, %v1913
        %v1915 = vpop.f32.mrf.mxu0
        %v1916 = vadd.f32 0.0, %v1915
        %1917 = vmatprep.mubr.bf16.mxu0 %v1598
        %1918 = vmatmul.mubr.bf16.gmra.mxu0 %v1597
        %v1919 = vpop.f32.mrf.mxu0
        %v1920 = vadd.f32 0.0, %v1919
        %v1921 = vpop.f32.mrf.mxu0
        %v1922 = vadd.f32 0.0, %v1921
        %v1923 = vpop.f32.mrf.mxu0
        %v1924 = vadd.f32 0.0, %v1923
        %v1925 = vpop.f32.mrf.mxu0
        %v1926 = vadd.f32 0.0, %v1925
        %1927 = vmatprep.mubr.bf16.mxu0 %v1600
        %1928 = vmatmul.mubr.bf16.gmra.mxu0 %v1599
        %v1929 = vpop.f32.mrf.mxu0
        %v1930 = vadd.f32 0.0, %v1929
        %v1931 = vpop.f32.mrf.mxu0
        %v1932 = vadd.f32 0.0, %v1931
        %v1933 = vpop.f32.mrf.mxu0
        %v1934 = vadd.f32 0.0, %v1933
        %v1935 = vpop.f32.mrf.mxu0
        %v1936 = vadd.f32 0.0, %v1935
        %1937 = vmatprep.mubr.bf16.mxu0 %v1602
        %1938 = vmatmul.mubr.bf16.gmra.mxu0 %v1601
        %v1939 = vpop.f32.mrf.mxu0
        %v1940 = vadd.f32 0.0, %v1939
        %v1941 = vpop.f32.mrf.mxu0
        %v1942 = vadd.f32 0.0, %v1941
        %v1943 = vpop.f32.mrf.mxu0
        %v1944 = vadd.f32 0.0, %v1943
        %v1945 = vpop.f32.mrf.mxu0
        %v1946 = vadd.f32 0.0, %v1945
        %1947 = vmatprep.mubr.bf16.mxu0 %v1604
        %1948 = vmatmul.mubr.bf16.gmra.mxu0 %v1603
        %v1949 = vpop.f32.mrf.mxu0
        %v1950 = vadd.f32 0.0, %v1949
        %v1951 = vpop.f32.mrf.mxu0
        %v1952 = vadd.f32 0.0, %v1951
        %v1953 = vpop.f32.mrf.mxu0
        %v1954 = vadd.f32 0.0, %v1953
        %v1955 = vpop.f32.mrf.mxu0
        %v1956 = vadd.f32 0.0, %v1955
        %1957 = vmatprep.mubr.bf16.mxu0 %v1606
        %1958 = vmatmul.mubr.bf16.gmra.mxu0 %v1605
        %v1959 = vpop.f32.mrf.mxu0
        %v1960 = vadd.f32 0.0, %v1959
        %v1961 = vpop.f32.mrf.mxu0
        %v1962 = vadd.f32 0.0, %v1961
        %v1963 = vpop.f32.mrf.mxu0
        %v1964 = vadd.f32 0.0, %v1963
        %v1965 = vpop.f32.mrf.mxu0
        %v1966 = vadd.f32 0.0, %v1965
        %1967 = vmatprep.mubr.bf16.mxu0 %v1608
        %1968 = vmatmul.mubr.bf16.gmra.mxu0 %v1607
        %v1969 = vpop.f32.mrf.mxu0
        %v1970 = vadd.f32 0.0, %v1969
        %v1971 = vpop.f32.mrf.mxu0
        %v1972 = vadd.f32 0.0, %v1971
        %v1973 = vpop.f32.mrf.mxu0
        %v1974 = vadd.f32 0.0, %v1973
        %v1975 = vpop.f32.mrf.mxu0
        %v1976 = vadd.f32 0.0, %v1975
        %1977 = vmatprep.mubr.bf16.mxu0 %v1610
        %1978 = vmatmul.mubr.bf16.gmra.mxu0 %v1609
        %v1979 = vpop.f32.mrf.mxu0
        %v1980 = vadd.f32 0.0, %v1979
        %v1981 = vpop.f32.mrf.mxu0
        %v1982 = vadd.f32 0.0, %v1981
        %v1983 = vpop.f32.mrf.mxu0
        %v1984 = vadd.f32 0.0, %v1983
        %v1985 = vpop.f32.mrf.mxu0
        %v1986 = vadd.f32 0.0, %v1985
        %1987 = vmatprep.mubr.bf16.mxu0 %v1612
        %1988 = vmatmul.mubr.bf16.gmra.mxu0 %v1611
        %v1989 = vpop.f32.mrf.mxu0
        %v1990 = vadd.f32 0.0, %v1989
        %v1991 = vpop.f32.mrf.mxu0
        %v1992 = vadd.f32 0.0, %v1991
        %v1993 = vpop.f32.mrf.mxu0
        %v1994 = vadd.f32 0.0, %v1993
        %v1995 = vpop.f32.mrf.mxu0
        %v1996 = vadd.f32 0.0, %v1995
        %1997 = vdwg.mxu0
        %v1998 = vpack.c.bf16 %v1844, %v1840
        %v1999 = vpack.c.bf16 %v1854, %v1850
        %v2000 = vpack.c.bf16 %v1864, %v1860
        %v2001 = vpack.c.bf16 %v1874, %v1870
        %v2002 = vpack.c.bf16 %v1884, %v1880
        %v2003 = vpack.c.bf16 %v1894, %v1890
        %v2004 = vpack.c.bf16 %v1904, %v1900
        %v2005 = vpack.c.bf16 %v1914, %v1910
        %v2006 = vpack.c.bf16 %v1924, %v1920
        %v2007 = vpack.c.bf16 %v1934, %v1930
        %v2008 = vpack.c.bf16 %v1944, %v1940
        %v2009 = vpack.c.bf16 %v1954, %v1950
        %v2010 = vpack.c.bf16 %v1964, %v1960
        %v2011 = vpack.c.bf16 %v1974, %v1970
        %v2012 = vpack.c.bf16 %v1984, %v1980
        %v2013 = vpack.c.bf16 %v1994, %v1990
        %2014 = vmatprep.subr.bf16.mxu0 0
        %2015 = vmatpush1.bf16.msra.mxu0 %v2005
        %2016 = vmatprep.subr.bf16.mxu0 0
        %2017 = vmatpush1.bf16.msra.mxu0 %v2004
        %2018 = vmatprep.subr.bf16.mxu0 0
        %2019 = vmatpush1.bf16.msra.mxu0 %v2003
        %2020 = vmatprep.subr.bf16.mxu0 0
        %2021 = vmatpush1.bf16.msra.mxu0 %v2002
        %2022 = vmatprep.subr.bf16.mxu0 0
        %2023 = vmatpush1.bf16.msra.mxu0 %v2001
        %2024 = vmatprep.subr.bf16.mxu0 0
        %2025 = vmatpush1.bf16.msra.mxu0 %v2000
        %2026 = vmatprep.subr.bf16.mxu0 0
        %2027 = vmatpush1.bf16.msra.mxu0 %v1999
        %2028 = vmatprep.subr.bf16.mxu0 0
        %2029 = vmatpush1.bf16.msra.mxu0 %v1998
        %2030 = vmatprep.subr.bf16.mxu0 0
        %2031 = vmatpush2.bf16.msra.mxu0 %v2013
        %2032 = vmatprep.subr.bf16.mxu0 0
        %2033 = vmatpush2.bf16.msra.mxu0 %v2012
        %2034 = vmatprep.subr.bf16.mxu0 0
        %2035 = vmatpush2.bf16.msra.mxu0 %v2011
        %2036 = vmatprep.subr.bf16.mxu0 0
        %2037 = vmatpush2.bf16.msra.mxu0 %v2010
        %2038 = vmatprep.subr.bf16.mxu0 0
        %2039 = vmatpush2.bf16.msra.mxu0 %v2009
        %2040 = vmatprep.subr.bf16.mxu0 0
        %2041 = vmatpush2.bf16.msra.mxu0 %v2008
        %2042 = vmatprep.subr.bf16.mxu0 0
        %2043 = vmatpush2.bf16.msra.mxu0 %v2007
        %2044 = vmatprep.subr.bf16.mxu0 0
        %2045 = vmatpush2.bf16.msra.mxu0 %v2006
        %2046 = vmatprep.mubr.bf16.mxu0 %v573
        %2047 = vmatmul.mubr.bf16.gmra.mxu0 %v572
        %v2048 = vpop.f32.mrf.mxu0
        %v2049 = vadd.f32 %v1842, %v2048
        %v2050 = vpop.f32.mrf.mxu0
        %v2051 = vpop.f32.mrf.mxu0
        %v2052 = vadd.f32 %v1846, %v2051
        %v2053 = vpop.f32.mrf.mxu0
        %2054 = vmatprep.mubr.bf16.mxu0 %v575
        %2055 = vmatmul.mubr.bf16.gmra.mxu0 %v574
        %v2056 = vpop.f32.mrf.mxu0
        %v2057 = vadd.f32 %v1852, %v2056
        %v2058 = vpop.f32.mrf.mxu0
        %v2059 = vpop.f32.mrf.mxu0
        %v2060 = vadd.f32 %v1856, %v2059
        %v2061 = vpop.f32.mrf.mxu0
        %2062 = vmatprep.mubr.bf16.mxu0 %v577
        %2063 = vmatmul.mubr.bf16.gmra.mxu0 %v576
        %v2064 = vpop.f32.mrf.mxu0
        %v2065 = vadd.f32 %v1862, %v2064
        %v2066 = vpop.f32.mrf.mxu0
        %v2067 = vpop.f32.mrf.mxu0
        %v2068 = vadd.f32 %v1866, %v2067
        %v2069 = vpop.f32.mrf.mxu0
        %2070 = vmatprep.mubr.bf16.mxu0 %v579
        %2071 = vmatmul.mubr.bf16.gmra.mxu0 %v578
        %v2072 = vpop.f32.mrf.mxu0
        %v2073 = vadd.f32 %v1872, %v2072
        %v2074 = vpop.f32.mrf.mxu0
        %v2075 = vpop.f32.mrf.mxu0
        %v2076 = vadd.f32 %v1876, %v2075
        %v2077 = vpop.f32.mrf.mxu0
        %2078 = vmatprep.mubr.bf16.mxu0 %v581
        %2079 = vmatmul.mubr.bf16.gmra.mxu0 %v580
        %v2080 = vpop.f32.mrf.mxu0
        %v2081 = vadd.f32 %v1882, %v2080
        %v2082 = vpop.f32.mrf.mxu0
        %v2083 = vpop.f32.mrf.mxu0
        %v2084 = vadd.f32 %v1886, %v2083
        %v2085 = vpop.f32.mrf.mxu0
        %2086 = vmatprep.mubr.bf16.mxu0 %v583
        %2087 = vmatmul.mubr.bf16.gmra.mxu0 %v582
        %v2088 = vpop.f32.mrf.mxu0
        %v2089 = vadd.f32 %v1892, %v2088
        %v2090 = vpop.f32.mrf.mxu0
        %v2091 = vpop.f32.mrf.mxu0
        %v2092 = vadd.f32 %v1896, %v2091
        %v2093 = vpop.f32.mrf.mxu0
        %2094 = vmatprep.mubr.bf16.mxu0 %v585
        %2095 = vmatmul.mubr.bf16.gmra.mxu0 %v584
        %v2096 = vpop.f32.mrf.mxu0
        %v2097 = vadd.f32 %v1902, %v2096
        %v2098 = vpop.f32.mrf.mxu0
        %v2099 = vpop.f32.mrf.mxu0
        %v2100 = vadd.f32 %v1906, %v2099
        %v2101 = vpop.f32.mrf.mxu0
        %2102 = vmatprep.mubr.bf16.mxu0 %v587
        %2103 = vmatmul.mubr.bf16.gmra.mxu0 %v586
        %v2104 = vpop.f32.mrf.mxu0
        %v2105 = vadd.f32 %v1912, %v2104
        %v2106 = vpop.f32.mrf.mxu0
        %v2107 = vpop.f32.mrf.mxu0
        %v2108 = vadd.f32 %v1916, %v2107
        %v2109 = vpop.f32.mrf.mxu0
        %2110 = vmatprep.mubr.bf16.mxu0 %v589
        %2111 = vmatmul.mubr.bf16.gmra.mxu0 %v588
        %v2112 = vpop.f32.mrf.mxu0
        %v2113 = vadd.f32 %v1922, %v2112
        %v2114 = vpop.f32.mrf.mxu0
        %v2115 = vpop.f32.mrf.mxu0
        %v2116 = vadd.f32 %v1926, %v2115
        %v2117 = vpop.f32.mrf.mxu0
        %2118 = vmatprep.mubr.bf16.mxu0 %v591
        %2119 = vmatmul.mubr.bf16.gmra.mxu0 %v590
        %v2120 = vpop.f32.mrf.mxu0
        %v2121 = vadd.f32 %v1932, %v2120
        %v2122 = vpop.f32.mrf.mxu0
        %v2123 = vpop.f32.mrf.mxu0
        %v2124 = vadd.f32 %v1936, %v2123
        %v2125 = vpop.f32.mrf.mxu0
        %2126 = vmatprep.mubr.bf16.mxu0 %v593
        %2127 = vmatmul.mubr.bf16.gmra.mxu0 %v592
        %v2128 = vpop.f32.mrf.mxu0
        %v2129 = vadd.f32 %v1942, %v2128
        %v2130 = vpop.f32.mrf.mxu0
        %v2131 = vpop.f32.mrf.mxu0
        %v2132 = vadd.f32 %v1946, %v2131
        %v2133 = vpop.f32.mrf.mxu0
        %2134 = vmatprep.mubr.bf16.mxu0 %v595
        %2135 = vmatmul.mubr.bf16.gmra.mxu0 %v594
        %v2136 = vpop.f32.mrf.mxu0
        %v2137 = vadd.f32 %v1952, %v2136
        %v2138 = vpop.f32.mrf.mxu0
        %v2139 = vpop.f32.mrf.mxu0
        %v2140 = vadd.f32 %v1956, %v2139
        %v2141 = vpop.f32.mrf.mxu0
        %2142 = vmatprep.mubr.bf16.mxu0 %v597
        %2143 = vmatmul.mubr.bf16.gmra.mxu0 %v596
        %v2144 = vpop.f32.mrf.mxu0
        %v2145 = vadd.f32 %v1962, %v2144
        %v2146 = vpop.f32.mrf.mxu0
        %v2147 = vpop.f32.mrf.mxu0
        %v2148 = vadd.f32 %v1966, %v2147
        %v2149 = vpop.f32.mrf.mxu0
        %2150 = vmatprep.mubr.bf16.mxu0 %v599
        %2151 = vmatmul.mubr.bf16.gmra.mxu0 %v598
        %v2152 = vpop.f32.mrf.mxu0
        %v2153 = vadd.f32 %v1972, %v2152
        %v2154 = vpop.f32.mrf.mxu0
        %v2155 = vpop.f32.mrf.mxu0
        %v2156 = vadd.f32 %v1976, %v2155
        %v2157 = vpop.f32.mrf.mxu0
        %2158 = vmatprep.mubr.bf16.mxu0 %v601
        %2159 = vmatmul.mubr.bf16.gmra.mxu0 %v600
        %v2160 = vpop.f32.mrf.mxu0
        %v2161 = vadd.f32 %v1982, %v2160
        %v2162 = vpop.f32.mrf.mxu0
        %v2163 = vpop.f32.mrf.mxu0
        %v2164 = vadd.f32 %v1986, %v2163
        %v2165 = vpop.f32.mrf.mxu0
        %2166 = vmatprep.mubr.bf16.mxu0 %v603
        %2167 = vmatmul.mubr.bf16.gmra.mxu0 %v602
        %v2168 = vpop.f32.mrf.mxu0
        %v2169 = vadd.f32 %v1992, %v2168
        %v2170 = vpop.f32.mrf.mxu0
        %v2171 = vpop.f32.mrf.mxu0
        %v2172 = vadd.f32 %v1996, %v2171
        %v2173 = vpop.f32.mrf.mxu0
        %2174 = vdwg.mxu0
        %v2176 = vlaneseq
        %v2177 = vshrl.u32 %v2176, 7
        %v2178 = vsub.s32 0, %v2177
        %v2179 = vrot.slane %v1580, %v2178
        %v2181 = vadd.f32 %v2049, %v2179
        %v2182 = vadd.f32 %v2052, %v2179
        %v2183 = vadd.f32 %v2057, %v2179
        %v2184 = vadd.f32 %v2060, %v2179
        %v2185 = vadd.f32 %v2065, %v2179
        %v2186 = vadd.f32 %v2068, %v2179
        %v2187 = vadd.f32 %v2073, %v2179
        %v2188 = vadd.f32 %v2076, %v2179
        %v2189 = vadd.f32 %v2081, %v2179
        %v2190 = vadd.f32 %v2084, %v2179
        %v2191 = vadd.f32 %v2089, %v2179
        %v2192 = vadd.f32 %v2092, %v2179
        %v2193 = vadd.f32 %v2097, %v2179
        %v2194 = vadd.f32 %v2100, %v2179
        %v2195 = vadd.f32 %v2105, %v2179
        %v2196 = vadd.f32 %v2108, %v2179
        %v2197 = vadd.f32 %v2113, %v2179
        %v2198 = vadd.f32 %v2116, %v2179
        %v2199 = vadd.f32 %v2121, %v2179
        %v2200 = vadd.f32 %v2124, %v2179
        %v2201 = vadd.f32 %v2129, %v2179
        %v2202 = vadd.f32 %v2132, %v2179
        %v2203 = vadd.f32 %v2137, %v2179
        %v2204 = vadd.f32 %v2140, %v2179
        %v2205 = vadd.f32 %v2145, %v2179
        %v2206 = vadd.f32 %v2148, %v2179
        %v2207 = vadd.f32 %v2153, %v2179
        %v2208 = vadd.f32 %v2156, %v2179
        %v2209 = vadd.f32 %v2161, %v2179
        %v2210 = vadd.f32 %v2164, %v2179
        %v2211 = vadd.f32 %v2169, %v2179
        %v2212 = vadd.f32 %v2172, %v2179
        %v2213 = vmax.f32 %v2181, 0.0
        %v2214 = vmax.f32 %v2182, 0.0
        %v2215 = vmax.f32 %v2183, 0.0
        %v2216 = vmax.f32 %v2184, 0.0
        %v2217 = vmax.f32 %v2185, 0.0
        %v2218 = vmax.f32 %v2186, 0.0
        %v2219 = vmax.f32 %v2187, 0.0
        %v2220 = vmax.f32 %v2188, 0.0
        %v2221 = vmax.f32 %v2189, 0.0
        %v2222 = vmax.f32 %v2190, 0.0
        %v2223 = vmax.f32 %v2191, 0.0
        %v2224 = vmax.f32 %v2192, 0.0
        %v2225 = vmax.f32 %v2193, 0.0
        %v2226 = vmax.f32 %v2194, 0.0
        %v2227 = vmax.f32 %v2195, 0.0
        %v2228 = vmax.f32 %v2196, 0.0
        %v2229 = vmax.f32 %v2197, 0.0
        %v2230 = vmax.f32 %v2198, 0.0
        %v2231 = vmax.f32 %v2199, 0.0
        %v2232 = vmax.f32 %v2200, 0.0
        %v2233 = vmax.f32 %v2201, 0.0
        %v2234 = vmax.f32 %v2202, 0.0
        %v2235 = vmax.f32 %v2203, 0.0
        %v2236 = vmax.f32 %v2204, 0.0
        %v2237 = vmax.f32 %v2205, 0.0
        %v2238 = vmax.f32 %v2206, 0.0
        %v2239 = vmax.f32 %v2207, 0.0
        %v2240 = vmax.f32 %v2208, 0.0
        %v2241 = vmax.f32 %v2209, 0.0
        %v2242 = vmax.f32 %v2210, 0.0
        %v2243 = vmax.f32 %v2211, 0.0
        %v2244 = vmax.f32 %v2212, 0.0
        %v2245 = vld [vmem:[%s7 + $0x3] sm:$0x1]
        %v2246 = vpack.c.bf16 %v2214, %v2213
        %v2247 = vpack.c.bf16 %v2216, %v2215
        %v2248 = vpack.c.bf16 %v2218, %v2217
        %v2249 = vpack.c.bf16 %v2220, %v2219
        %v2250 = vpack.c.bf16 %v2222, %v2221
        %v2251 = vpack.c.bf16 %v2224, %v2223
        %v2252 = vpack.c.bf16 %v2226, %v2225
        %v2253 = vpack.c.bf16 %v2228, %v2227
        %v2254 = vpack.c.bf16 %v2230, %v2229
        %v2255 = vpack.c.bf16 %v2232, %v2231
        %v2256 = vpack.c.bf16 %v2234, %v2233
        %v2257 = vpack.c.bf16 %v2236, %v2235
        %v2258 = vpack.c.bf16 %v2238, %v2237
        %v2259 = vpack.c.bf16 %v2240, %v2239
        %v2260 = vpack.c.bf16 %v2242, %v2241
        %v2261 = vpack.c.bf16 %v2244, %v2243
        %v2262 = vld [vmem:[#allocation6] sm:$0xf]
        %v2263 = vld [vmem:[#allocation6 + $0x4] sm:$0xf]
        %v2264 = vld [vmem:[#allocation6 + $0x8] sm:$0xf]
        %v2265 = vld [vmem:[#allocation6 + $0xc] sm:$0xf]
        %v2266 = vld [vmem:[#allocation6 + $0x10] sm:$0xf]
        %v2267 = vld [vmem:[#allocation6 + $0x14] sm:$0xf]
        %v2268 = vld [vmem:[#allocation6 + $0x18] sm:$0xf]
        %v2269 = vld [vmem:[#allocation6 + $0x1c] sm:$0xf]
        %v2270 = vld [vmem:[#allocation6 + $0x20] sm:$0xf]
        %v2271 = vld [vmem:[#allocation6 + $0x24] sm:$0xf]
        %v2272 = vld [vmem:[#allocation6 + $0x28] sm:$0xf]
        %v2273 = vld [vmem:[#allocation6 + $0x2c] sm:$0xf]
        %v2274 = vld [vmem:[#allocation6 + $0x30] sm:$0xf]
        %v2275 = vld [vmem:[#allocation6 + $0x34] sm:$0xf]
        %v2276 = vld [vmem:[#allocation6 + $0x38] sm:$0xf]
        %v2277 = vld [vmem:[#allocation6 + $0x3c] sm:$0xf]
        %v2294 = vunpack.c.l.b16 %v2262
        %v2295 = vunpack.c.l.b16 %v2263
        %v2296 = vunpack.c.l.b16 %v2264
        %v2297 = vunpack.c.l.b16 %v2265
        %v2298 = vunpack.c.l.b16 %v2266
        %v2299 = vunpack.c.l.b16 %v2267
        %v2300 = vunpack.c.l.b16 %v2268
        %v2301 = vunpack.c.l.b16 %v2269
        %v2302 = vunpack.c.l.b16 %v2270
        %v2303 = vunpack.c.l.b16 %v2271
        %v2304 = vunpack.c.l.b16 %v2272
        %v2305 = vunpack.c.l.b16 %v2273
        %v2306 = vunpack.c.l.b16 %v2274
        %v2307 = vunpack.c.l.b16 %v2275
        %v2308 = vunpack.c.l.b16 %v2276
        %v2309 = vunpack.c.l.b16 %v2277
        %v2310 = vpack.c.b16 %v2295, %v2294
        %v2311 = vpack.c.b16 %v2297, %v2296
        %v2312 = vpack.c.b16 %v2299, %v2298
        %v2313 = vpack.c.b16 %v2301, %v2300
        %v2314 = vpack.c.b16 %v2303, %v2302
        %v2315 = vpack.c.b16 %v2305, %v2304
        %v2316 = vpack.c.b16 %v2307, %v2306
        %v2317 = vpack.c.b16 %v2309, %v2308
        %2326 = vmatprep.subr.bf16.mxu0 0
        %2327 = vmatpush1.bf16.msra.mxu0 %v2317
        %2328 = vmatprep.subr.bf16.mxu0 0
        %2329 = vmatpush1.bf16.msra.mxu0 %v2316
        %2330 = vmatprep.subr.bf16.mxu0 0
        %2331 = vmatpush1.bf16.msra.mxu0 %v2315
        %2332 = vmatprep.subr.bf16.mxu0 0
        %2333 = vmatpush1.bf16.msra.mxu0 %v2314
        %2334 = vmatprep.subr.bf16.mxu0 0
        %2335 = vmatpush1.bf16.msra.mxu0 %v2313
        %2336 = vmatprep.subr.bf16.mxu0 0
        %2337 = vmatpush1.bf16.msra.mxu0 %v2312
        %2338 = vmatprep.subr.bf16.mxu0 0
        %2339 = vmatpush1.bf16.msra.mxu0 %v2311
        %2340 = vmatprep.subr.bf16.mxu0 0
        %2341 = vmatpush1.bf16.msra.mxu0 %v2310
        %2342 = vmatprep.subr.bf16.mxu0 0
        %2343 = vmatpush2.bf16.msra.mxu0 0
        %2344 = vmatprep.subr.bf16.mxu0 0
        %2345 = vmatpush2.bf16.msra.mxu0 0
        %2346 = vmatprep.subr.bf16.mxu0 0
        %2347 = vmatpush2.bf16.msra.mxu0 0
        %2348 = vmatprep.subr.bf16.mxu0 0
        %2349 = vmatpush2.bf16.msra.mxu0 0
        %2350 = vmatprep.subr.bf16.mxu0 0
        %2351 = vmatpush2.bf16.msra.mxu0 0
        %2352 = vmatprep.subr.bf16.mxu0 0
        %2353 = vmatpush2.bf16.msra.mxu0 0
        %2354 = vmatprep.subr.bf16.mxu0 0
        %2355 = vmatpush2.bf16.msra.mxu0 0
        %2356 = vmatprep.subr.bf16.mxu0 0
        %2357 = vmatpush2.bf16.msra.mxu0 0
        %2358 = vmatprep.mubr.bf16.mxu0 0
        %2359 = vmatmul.mubr.bf16.gmra.mxu0 %v2246
        %v2360 = vpop.f32.mrf.mxu0
        %v2361 = vadd.f32 0.0, %v2360
        %v2362 = vpop.f32.mrf.mxu0
        %v2363 = vpop.f32.mrf.mxu0
        %v2364 = vadd.f32 0.0, %v2363
        %v2365 = vpop.f32.mrf.mxu0
        %2366 = vmatprep.mubr.bf16.mxu0 0
        %2367 = vmatmul.mubr.bf16.gmra.mxu0 %v2247
        %v2368 = vpop.f32.mrf.mxu0
        %v2369 = vadd.f32 0.0, %v2368
        %v2370 = vpop.f32.mrf.mxu0
        %v2371 = vpop.f32.mrf.mxu0
        %v2372 = vadd.f32 0.0, %v2371
        %v2373 = vpop.f32.mrf.mxu0
        %2374 = vmatprep.mubr.bf16.mxu0 0
        %2375 = vmatmul.mubr.bf16.gmra.mxu0 %v2248
        %v2376 = vpop.f32.mrf.mxu0
        %v2377 = vadd.f32 0.0, %v2376
        %v2378 = vpop.f32.mrf.mxu0
        %v2379 = vpop.f32.mrf.mxu0
        %v2380 = vadd.f32 0.0, %v2379
        %v2381 = vpop.f32.mrf.mxu0
        %2382 = vmatprep.mubr.bf16.mxu0 0
        %2383 = vmatmul.mubr.bf16.gmra.mxu0 %v2249
        %v2384 = vpop.f32.mrf.mxu0
        %v2385 = vadd.f32 0.0, %v2384
        %v2386 = vpop.f32.mrf.mxu0
        %v2387 = vpop.f32.mrf.mxu0
        %v2388 = vadd.f32 0.0, %v2387
        %v2389 = vpop.f32.mrf.mxu0
        %2390 = vmatprep.mubr.bf16.mxu0 0
        %2391 = vmatmul.mubr.bf16.gmra.mxu0 %v2250
        %v2392 = vpop.f32.mrf.mxu0
        %v2393 = vadd.f32 0.0, %v2392
        %v2394 = vpop.f32.mrf.mxu0
        %v2395 = vpop.f32.mrf.mxu0
        %v2396 = vadd.f32 0.0, %v2395
        %v2397 = vpop.f32.mrf.mxu0
        %2398 = vmatprep.mubr.bf16.mxu0 0
        %2399 = vmatmul.mubr.bf16.gmra.mxu0 %v2251
        %v2400 = vpop.f32.mrf.mxu0
        %v2401 = vadd.f32 0.0, %v2400
        %v2402 = vpop.f32.mrf.mxu0
        %v2403 = vpop.f32.mrf.mxu0
        %v2404 = vadd.f32 0.0, %v2403
        %v2405 = vpop.f32.mrf.mxu0
        %2406 = vmatprep.mubr.bf16.mxu0 0
        %2407 = vmatmul.mubr.bf16.gmra.mxu0 %v2252
        %v2408 = vpop.f32.mrf.mxu0
        %v2409 = vadd.f32 0.0, %v2408
        %v2410 = vpop.f32.mrf.mxu0
        %v2411 = vpop.f32.mrf.mxu0
        %v2412 = vadd.f32 0.0, %v2411
        %v2413 = vpop.f32.mrf.mxu0
        %2414 = vmatprep.mubr.bf16.mxu0 0
        %2415 = vmatmul.mubr.bf16.gmra.mxu0 %v2253
        %v2416 = vpop.f32.mrf.mxu0
        %v2417 = vadd.f32 0.0, %v2416
        %v2418 = vpop.f32.mrf.mxu0
        %v2419 = vpop.f32.mrf.mxu0
        %v2420 = vadd.f32 0.0, %v2419
        %v2421 = vpop.f32.mrf.mxu0
        %2422 = vmatprep.mubr.bf16.mxu0 0
        %2423 = vmatmul.mubr.bf16.gmra.mxu0 %v2254
        %v2424 = vpop.f32.mrf.mxu0
        %v2425 = vadd.f32 0.0, %v2424
        %v2426 = vpop.f32.mrf.mxu0
        %v2427 = vpop.f32.mrf.mxu0
        %v2428 = vadd.f32 0.0, %v2427
        %v2429 = vpop.f32.mrf.mxu0
        %2430 = vmatprep.mubr.bf16.mxu0 0
        %2431 = vmatmul.mubr.bf16.gmra.mxu0 %v2255
        %v2432 = vpop.f32.mrf.mxu0
        %v2433 = vadd.f32 0.0, %v2432
        %v2434 = vpop.f32.mrf.mxu0
        %v2435 = vpop.f32.mrf.mxu0
        %v2436 = vadd.f32 0.0, %v2435
        %v2437 = vpop.f32.mrf.mxu0
        %2438 = vmatprep.mubr.bf16.mxu0 0
        %2439 = vmatmul.mubr.bf16.gmra.mxu0 %v2256
        %v2440 = vpop.f32.mrf.mxu0
        %v2441 = vadd.f32 0.0, %v2440
        %v2442 = vpop.f32.mrf.mxu0
        %v2443 = vpop.f32.mrf.mxu0
        %v2444 = vadd.f32 0.0, %v2443
        %v2445 = vpop.f32.mrf.mxu0
        %2446 = vmatprep.mubr.bf16.mxu0 0
        %2447 = vmatmul.mubr.bf16.gmra.mxu0 %v2257
        %v2448 = vpop.f32.mrf.mxu0
        %v2449 = vadd.f32 0.0, %v2448
        %v2450 = vpop.f32.mrf.mxu0
        %v2451 = vpop.f32.mrf.mxu0
        %v2452 = vadd.f32 0.0, %v2451
        %v2453 = vpop.f32.mrf.mxu0
        %2454 = vmatprep.mubr.bf16.mxu0 0
        %2455 = vmatmul.mubr.bf16.gmra.mxu0 %v2258
        %v2456 = vpop.f32.mrf.mxu0
        %v2457 = vadd.f32 0.0, %v2456
        %v2458 = vpop.f32.mrf.mxu0
        %v2459 = vpop.f32.mrf.mxu0
        %v2460 = vadd.f32 0.0, %v2459
        %v2461 = vpop.f32.mrf.mxu0
        %2462 = vmatprep.mubr.bf16.mxu0 0
        %2463 = vmatmul.mubr.bf16.gmra.mxu0 %v2259
        %v2464 = vpop.f32.mrf.mxu0
        %v2465 = vadd.f32 0.0, %v2464
        %v2466 = vpop.f32.mrf.mxu0
        %v2467 = vpop.f32.mrf.mxu0
        %v2468 = vadd.f32 0.0, %v2467
        %v2469 = vpop.f32.mrf.mxu0
        %2470 = vmatprep.mubr.bf16.mxu0 0
        %2471 = vmatmul.mubr.bf16.gmra.mxu0 %v2260
        %v2472 = vpop.f32.mrf.mxu0
        %v2473 = vadd.f32 0.0, %v2472
        %v2474 = vpop.f32.mrf.mxu0
        %v2475 = vpop.f32.mrf.mxu0
        %v2476 = vadd.f32 0.0, %v2475
        %v2477 = vpop.f32.mrf.mxu0
        %2478 = vmatprep.mubr.bf16.mxu0 0
        %2479 = vmatmul.mubr.bf16.gmra.mxu0 %v2261
        %v2480 = vpop.f32.mrf.mxu0
        %v2481 = vadd.f32 0.0, %v2480
        %v2482 = vpop.f32.mrf.mxu0
        %v2483 = vpop.f32.mrf.mxu0
        %v2484 = vadd.f32 0.0, %v2483
        %v2485 = vpop.f32.mrf.mxu0
        %2486 = vdwg.mxu0
        %v2487 = vpack.c.bf16 %v2364, %v2361
        %v2488 = vpack.c.bf16 %v2372, %v2369
        %v2489 = vpack.c.bf16 %v2380, %v2377
        %v2490 = vpack.c.bf16 %v2388, %v2385
        %v2491 = vpack.c.bf16 %v2396, %v2393
        %v2492 = vpack.c.bf16 %v2404, %v2401
        %v2493 = vpack.c.bf16 %v2412, %v2409
        %v2494 = vpack.c.bf16 %v2420, %v2417
        %v2495 = vpack.c.bf16 %v2428, %v2425
        %v2496 = vpack.c.bf16 %v2436, %v2433
        %v2497 = vpack.c.bf16 %v2444, %v2441
        %v2498 = vpack.c.bf16 %v2452, %v2449
        %v2499 = vpack.c.bf16 %v2460, %v2457
        %v2500 = vpack.c.bf16 %v2468, %v2465
        %v2501 = vpack.c.bf16 %v2476, %v2473
        %v2502 = vpack.c.bf16 %v2484, %v2481
        %2535 = vrot.lane.b32.xlu0 %v2361, 64
        %v2536 = vpop.permute.xlu0 %2535
        %2537 = vrot.lane.b32.xlu0 %v2364, 64
        %v2538 = vpop.permute.xlu0 %2537
        %2539 = vrot.lane.b32.xlu0 %v2369, 64
        %v2540 = vpop.permute.xlu0 %2539
        %2541 = vrot.lane.b32.xlu0 %v2372, 64
        %v2542 = vpop.permute.xlu0 %2541
        %2543 = vrot.lane.b32.xlu0 %v2377, 64
        %v2544 = vpop.permute.xlu0 %2543
        %2545 = vrot.lane.b32.xlu0 %v2380, 64
        %v2546 = vpop.permute.xlu0 %2545
        %2547 = vrot.lane.b32.xlu0 %v2385, 64
        %v2548 = vpop.permute.xlu0 %2547
        %2549 = vrot.lane.b32.xlu0 %v2388, 64
        %v2550 = vpop.permute.xlu0 %2549
        %2551 = vrot.lane.b32.xlu0 %v2393, 64
        %v2552 = vpop.permute.xlu0 %2551
        %2553 = vrot.lane.b32.xlu0 %v2396, 64
        %v2554 = vpop.permute.xlu0 %2553
        %2555 = vrot.lane.b32.xlu0 %v2401, 64
        %v2556 = vpop.permute.xlu0 %2555
        %2557 = vrot.lane.b32.xlu0 %v2404, 64
        %v2558 = vpop.permute.xlu0 %2557
        %2559 = vrot.lane.b32.xlu0 %v2409, 64
        %v2560 = vpop.permute.xlu0 %2559
        %2561 = vrot.lane.b32.xlu0 %v2412, 64
        %v2562 = vpop.permute.xlu0 %2561
        %2563 = vrot.lane.b32.xlu0 %v2417, 64
        %v2564 = vpop.permute.xlu0 %2563
        %2565 = vrot.lane.b32.xlu0 %v2420, 64
        %v2566 = vpop.permute.xlu0 %2565
        %2567 = vrot.lane.b32.xlu0 %v2425, 64
        %v2568 = vpop.permute.xlu0 %2567
        %2569 = vrot.lane.b32.xlu0 %v2428, 64
        %v2570 = vpop.permute.xlu0 %2569
        %2571 = vrot.lane.b32.xlu0 %v2433, 64
        %v2572 = vpop.permute.xlu0 %2571
        %2573 = vrot.lane.b32.xlu0 %v2436, 64
        %v2574 = vpop.permute.xlu0 %2573
        %2575 = vrot.lane.b32.xlu0 %v2441, 64
        %v2576 = vpop.permute.xlu0 %2575
        %2577 = vrot.lane.b32.xlu0 %v2444, 64
        %v2578 = vpop.permute.xlu0 %2577
        %2579 = vrot.lane.b32.xlu0 %v2449, 64
        %v2580 = vpop.permute.xlu0 %2579
        %2581 = vrot.lane.b32.xlu0 %v2452, 64
        %v2582 = vpop.permute.xlu0 %2581
        %2583 = vrot.lane.b32.xlu0 %v2457, 64
        %v2584 = vpop.permute.xlu0 %2583
        %2585 = vrot.lane.b32.xlu0 %v2460, 64
        %v2586 = vpop.permute.xlu0 %2585
        %2587 = vrot.lane.b32.xlu0 %v2465, 64
        %v2588 = vpop.permute.xlu0 %2587
        %2589 = vrot.lane.b32.xlu0 %v2468, 64
        %v2590 = vpop.permute.xlu0 %2589
        %2591 = vrot.lane.b32.xlu0 %v2473, 64
        %v2592 = vpop.permute.xlu0 %2591
        %2593 = vrot.lane.b32.xlu0 %v2476, 64
        %v2594 = vpop.permute.xlu0 %2593
        %2595 = vrot.lane.b32.xlu0 %v2481, 64
        %v2596 = vpop.permute.xlu0 %2595
        %2597 = vrot.lane.b32.xlu0 %v2484, 64
        %v2598 = vpop.permute.xlu0 %2597
        %2631 = vmatprep.subr.bf16.mxu0 0
        %2632 = vmatpush1.bf16.msra.mxu0 %v2494
        %2633 = vmatprep.subr.bf16.mxu0 0
        %2634 = vmatpush1.bf16.msra.mxu0 %v2493
        %2635 = vmatprep.subr.bf16.mxu0 0
        %2636 = vmatpush1.bf16.msra.mxu0 %v2492
        %2637 = vmatprep.subr.bf16.mxu0 0
        %2638 = vmatpush1.bf16.msra.mxu0 %v2491
        %2639 = vmatprep.subr.bf16.mxu0 0
        %2640 = vmatpush1.bf16.msra.mxu0 %v2490
        %2641 = vmatprep.subr.bf16.mxu0 0
        %2642 = vmatpush1.bf16.msra.mxu0 %v2489
        %2643 = vmatprep.subr.bf16.mxu0 0
        %2644 = vmatpush1.bf16.msra.mxu0 %v2488
        %2645 = vmatprep.subr.bf16.mxu0 0
        %2646 = vmatpush1.bf16.msra.mxu0 %v2487
        %2647 = vmatprep.subr.bf16.mxu0 0
        %2648 = vmatpush2.bf16.msra.mxu0 %v2502
        %2649 = vmatprep.subr.bf16.mxu0 0
        %2650 = vmatpush2.bf16.msra.mxu0 %v2501
        %2651 = vmatprep.subr.bf16.mxu0 0
        %2652 = vmatpush2.bf16.msra.mxu0 %v2500
        %2653 = vmatprep.subr.bf16.mxu0 0
        %2654 = vmatpush2.bf16.msra.mxu0 %v2499
        %2655 = vmatprep.subr.bf16.mxu0 0
        %2656 = vmatpush2.bf16.msra.mxu0 %v2498
        %2657 = vmatprep.subr.bf16.mxu0 0
        %2658 = vmatpush2.bf16.msra.mxu0 %v2497
        %2659 = vmatprep.subr.bf16.mxu0 0
        %2660 = vmatpush2.bf16.msra.mxu0 %v2496
        %2661 = vmatprep.subr.bf16.mxu0 0
        %2662 = vmatpush2.bf16.msra.mxu0 %v2495
        %2663 = vmatprep.mubr.bf16.mxu0 %v573
        %2664 = vmatmul.mubr.bf16.gmra.mxu0 %v572
        %v2665 = vpop.f32.mrf.mxu0
        %v2666 = vadd.f32 %v2536, %v2665
        %v2667 = vpop.f32.mrf.mxu0
        %v2668 = vpop.f32.mrf.mxu0
        %v2669 = vadd.f32 %v2538, %v2668
        %v2670 = vpop.f32.mrf.mxu0
        %2671 = vmatprep.mubr.bf16.mxu0 %v575
        %2672 = vmatmul.mubr.bf16.gmra.mxu0 %v574
        %v2673 = vpop.f32.mrf.mxu0
        %v2674 = vadd.f32 %v2540, %v2673
        %v2675 = vpop.f32.mrf.mxu0
        %v2676 = vpop.f32.mrf.mxu0
        %v2677 = vadd.f32 %v2542, %v2676
        %v2678 = vpop.f32.mrf.mxu0
        %2679 = vmatprep.mubr.bf16.mxu0 %v577
        %2680 = vmatmul.mubr.bf16.gmra.mxu0 %v576
        %v2681 = vpop.f32.mrf.mxu0
        %v2682 = vadd.f32 %v2544, %v2681
        %v2683 = vpop.f32.mrf.mxu0
        %v2684 = vpop.f32.mrf.mxu0
        %v2685 = vadd.f32 %v2546, %v2684
        %v2686 = vpop.f32.mrf.mxu0
        %2687 = vmatprep.mubr.bf16.mxu0 %v579
        %2688 = vmatmul.mubr.bf16.gmra.mxu0 %v578
        %v2689 = vpop.f32.mrf.mxu0
        %v2690 = vadd.f32 %v2548, %v2689
        %v2691 = vpop.f32.mrf.mxu0
        %v2692 = vpop.f32.mrf.mxu0
        %v2693 = vadd.f32 %v2550, %v2692
        %v2694 = vpop.f32.mrf.mxu0
        %2695 = vmatprep.mubr.bf16.mxu0 %v581
        %2696 = vmatmul.mubr.bf16.gmra.mxu0 %v580
        %v2697 = vpop.f32.mrf.mxu0
        %v2698 = vadd.f32 %v2552, %v2697
        %v2699 = vpop.f32.mrf.mxu0
        %v2700 = vpop.f32.mrf.mxu0
        %v2701 = vadd.f32 %v2554, %v2700
        %v2702 = vpop.f32.mrf.mxu0
        %2703 = vmatprep.mubr.bf16.mxu0 %v583
        %2704 = vmatmul.mubr.bf16.gmra.mxu0 %v582
        %v2705 = vpop.f32.mrf.mxu0
        %v2706 = vadd.f32 %v2556, %v2705
        %v2707 = vpop.f32.mrf.mxu0
        %v2708 = vpop.f32.mrf.mxu0
        %v2709 = vadd.f32 %v2558, %v2708
        %v2710 = vpop.f32.mrf.mxu0
        %2711 = vmatprep.mubr.bf16.mxu0 %v585
        %2712 = vmatmul.mubr.bf16.gmra.mxu0 %v584
        %v2713 = vpop.f32.mrf.mxu0
        %v2714 = vadd.f32 %v2560, %v2713
        %v2715 = vpop.f32.mrf.mxu0
        %v2716 = vpop.f32.mrf.mxu0
        %v2717 = vadd.f32 %v2562, %v2716
        %v2718 = vpop.f32.mrf.mxu0
        %2719 = vmatprep.mubr.bf16.mxu0 %v587
        %2720 = vmatmul.mubr.bf16.gmra.mxu0 %v586
        %v2721 = vpop.f32.mrf.mxu0
        %v2722 = vadd.f32 %v2564, %v2721
        %v2723 = vpop.f32.mrf.mxu0
        %v2724 = vpop.f32.mrf.mxu0
        %v2725 = vadd.f32 %v2566, %v2724
        %v2726 = vpop.f32.mrf.mxu0
        %2727 = vmatprep.mubr.bf16.mxu0 %v589
        %2728 = vmatmul.mubr.bf16.gmra.mxu0 %v588
        %v2729 = vpop.f32.mrf.mxu0
        %v2730 = vadd.f32 %v2568, %v2729
        %v2731 = vpop.f32.mrf.mxu0
        %v2732 = vpop.f32.mrf.mxu0
        %v2733 = vadd.f32 %v2570, %v2732
        %v2734 = vpop.f32.mrf.mxu0
        %2735 = vmatprep.mubr.bf16.mxu0 %v591
        %2736 = vmatmul.mubr.bf16.gmra.mxu0 %v590
        %v2737 = vpop.f32.mrf.mxu0
        %v2738 = vadd.f32 %v2572, %v2737
        %v2739 = vpop.f32.mrf.mxu0
        %v2740 = vpop.f32.mrf.mxu0
        %v2741 = vadd.f32 %v2574, %v2740
        %v2742 = vpop.f32.mrf.mxu0
        %2743 = vmatprep.mubr.bf16.mxu0 %v593
        %2744 = vmatmul.mubr.bf16.gmra.mxu0 %v592
        %v2745 = vpop.f32.mrf.mxu0
        %v2746 = vadd.f32 %v2576, %v2745
        %v2747 = vpop.f32.mrf.mxu0
        %v2748 = vpop.f32.mrf.mxu0
        %v2749 = vadd.f32 %v2578, %v2748
        %v2750 = vpop.f32.mrf.mxu0
        %2751 = vmatprep.mubr.bf16.mxu0 %v595
        %2752 = vmatmul.mubr.bf16.gmra.mxu0 %v594
        %v2753 = vpop.f32.mrf.mxu0
        %v2754 = vadd.f32 %v2580, %v2753
        %v2755 = vpop.f32.mrf.mxu0
        %v2756 = vpop.f32.mrf.mxu0
        %v2757 = vadd.f32 %v2582, %v2756
        %v2758 = vpop.f32.mrf.mxu0
        %2759 = vmatprep.mubr.bf16.mxu0 %v597
        %2760 = vmatmul.mubr.bf16.gmra.mxu0 %v596
        %v2761 = vpop.f32.mrf.mxu0
        %v2762 = vadd.f32 %v2584, %v2761
        %v2763 = vpop.f32.mrf.mxu0
        %v2764 = vpop.f32.mrf.mxu0
        %v2765 = vadd.f32 %v2586, %v2764
        %v2766 = vpop.f32.mrf.mxu0
        %2767 = vmatprep.mubr.bf16.mxu0 %v599
        %2768 = vmatmul.mubr.bf16.gmra.mxu0 %v598
        %v2769 = vpop.f32.mrf.mxu0
        %v2770 = vadd.f32 %v2588, %v2769
        %v2771 = vpop.f32.mrf.mxu0
        %v2772 = vpop.f32.mrf.mxu0
        %v2773 = vadd.f32 %v2590, %v2772
        %v2774 = vpop.f32.mrf.mxu0
        %2775 = vmatprep.mubr.bf16.mxu0 %v601
        %2776 = vmatmul.mubr.bf16.gmra.mxu0 %v600
        %v2777 = vpop.f32.mrf.mxu0
        %v2778 = vadd.f32 %v2592, %v2777
        %v2779 = vpop.f32.mrf.mxu0
        %v2780 = vpop.f32.mrf.mxu0
        %v2781 = vadd.f32 %v2594, %v2780
        %v2782 = vpop.f32.mrf.mxu0
        %2783 = vmatprep.mubr.bf16.mxu0 %v603
        %2784 = vmatmul.mubr.bf16.gmra.mxu0 %v602
        %v2785 = vpop.f32.mrf.mxu0
        %v2786 = vadd.f32 %v2596, %v2785
        %v2787 = vpop.f32.mrf.mxu0
        %v2788 = vpop.f32.mrf.mxu0
        %v2789 = vadd.f32 %v2598, %v2788
        %v2790 = vpop.f32.mrf.mxu0
        %2791 = vdwg.mxu0
        %v2793 = vlaneseq
        %v2794 = vshrl.u32 %v2793, 7
        %v2795 = vsub.s32 0, %v2794
        %v2796 = vrot.slane %v2245, %v2795
        %v2798 = vadd.f32 %v2666, %v2796
        %v2799 = vadd.f32 %v2669, %v2796
        %v2800 = vadd.f32 %v2674, %v2796
        %v2801 = vadd.f32 %v2677, %v2796
        %v2802 = vadd.f32 %v2682, %v2796
        %v2803 = vadd.f32 %v2685, %v2796
        %v2804 = vadd.f32 %v2690, %v2796
        %v2805 = vadd.f32 %v2693, %v2796
        %v2806 = vadd.f32 %v2698, %v2796
        %v2807 = vadd.f32 %v2701, %v2796
        %v2808 = vadd.f32 %v2706, %v2796
        %v2809 = vadd.f32 %v2709, %v2796
        %v2810 = vadd.f32 %v2714, %v2796
        %v2811 = vadd.f32 %v2717, %v2796
        %v2812 = vadd.f32 %v2722, %v2796
        %v2813 = vadd.f32 %v2725, %v2796
        %v2814 = vadd.f32 %v2730, %v2796
        %v2815 = vadd.f32 %v2733, %v2796
        %v2816 = vadd.f32 %v2738, %v2796
        %v2817 = vadd.f32 %v2741, %v2796
        %v2818 = vadd.f32 %v2746, %v2796
        %v2819 = vadd.f32 %v2749, %v2796
        %v2820 = vadd.f32 %v2754, %v2796
        %v2821 = vadd.f32 %v2757, %v2796
        %v2822 = vadd.f32 %v2762, %v2796
        %v2823 = vadd.f32 %v2765, %v2796
        %v2824 = vadd.f32 %v2770, %v2796
        %v2825 = vadd.f32 %v2773, %v2796
        %v2826 = vadd.f32 %v2778, %v2796
        %v2827 = vadd.f32 %v2781, %v2796
        %v2828 = vadd.f32 %v2786, %v2796
        %v2829 = vadd.f32 %v2789, %v2796
        %v2830 = vmax.f32 %v2798, 0.0
        %v2831 = vmax.f32 %v2799, 0.0
        %v2832 = vmax.f32 %v2800, 0.0
        %v2833 = vmax.f32 %v2801, 0.0
        %v2834 = vmax.f32 %v2802, 0.0
        %v2835 = vmax.f32 %v2803, 0.0
        %v2836 = vmax.f32 %v2804, 0.0
        %v2837 = vmax.f32 %v2805, 0.0
        %v2838 = vmax.f32 %v2806, 0.0
        %v2839 = vmax.f32 %v2807, 0.0
        %v2840 = vmax.f32 %v2808, 0.0
        %v2841 = vmax.f32 %v2809, 0.0
        %v2842 = vmax.f32 %v2810, 0.0
        %v2843 = vmax.f32 %v2811, 0.0
        %v2844 = vmax.f32 %v2812, 0.0
        %v2845 = vmax.f32 %v2813, 0.0
        %v2846 = vmax.f32 %v2814, 0.0
        %v2847 = vmax.f32 %v2815, 0.0
        %v2848 = vmax.f32 %v2816, 0.0
        %v2849 = vmax.f32 %v2817, 0.0
        %v2850 = vmax.f32 %v2818, 0.0
        %v2851 = vmax.f32 %v2819, 0.0
        %v2852 = vmax.f32 %v2820, 0.0
        %v2853 = vmax.f32 %v2821, 0.0
        %v2854 = vmax.f32 %v2822, 0.0
        %v2855 = vmax.f32 %v2823, 0.0
        %v2856 = vmax.f32 %v2824, 0.0
        %v2857 = vmax.f32 %v2825, 0.0
        %v2858 = vmax.f32 %v2826, 0.0
        %v2859 = vmax.f32 %v2827, 0.0
        %v2860 = vmax.f32 %v2828, 0.0
        %v2861 = vmax.f32 %v2829, 0.0
        %v2862 = vld [vmem:[%s7 + $0x4] sm:$0x1]
        %v2863 = vpack.c.bf16 %v2831, %v2830
        %v2864 = vpack.c.bf16 %v2833, %v2832
        %v2865 = vpack.c.bf16 %v2835, %v2834
        %v2866 = vpack.c.bf16 %v2837, %v2836
        %v2867 = vpack.c.bf16 %v2839, %v2838
        %v2868 = vpack.c.bf16 %v2841, %v2840
        %v2869 = vpack.c.bf16 %v2843, %v2842
        %v2870 = vpack.c.bf16 %v2845, %v2844
        %v2871 = vpack.c.bf16 %v2847, %v2846
        %v2872 = vpack.c.bf16 %v2849, %v2848
        %v2873 = vpack.c.bf16 %v2851, %v2850
        %v2874 = vpack.c.bf16 %v2853, %v2852
        %v2875 = vpack.c.bf16 %v2855, %v2854
        %v2876 = vpack.c.bf16 %v2857, %v2856
        %v2877 = vpack.c.bf16 %v2859, %v2858
        %v2878 = vpack.c.bf16 %v2861, %v2860
        %v2879 = vld [vmem:[#allocation7] sm:$0xf]
        %v2880 = vld [vmem:[#allocation7 + $0x4] sm:$0xf]
        %v2881 = vld [vmem:[#allocation7 + $0x8] sm:$0xf]
        %v2882 = vld [vmem:[#allocation7 + $0xc] sm:$0xf]
        %v2883 = vld [vmem:[#allocation7 + $0x10] sm:$0xf]
        %v2884 = vld [vmem:[#allocation7 + $0x14] sm:$0xf]
        %v2885 = vld [vmem:[#allocation7 + $0x18] sm:$0xf]
        %v2886 = vld [vmem:[#allocation7 + $0x1c] sm:$0xf]
        %v2895 = vunpack.c.l.b16 %v2879
        %v2896 = vunpack.c.l.b16 %v2880
        %v2897 = vunpack.c.l.b16 %v2881
        %v2898 = vunpack.c.l.b16 %v2882
        %v2899 = vunpack.c.l.b16 %v2883
        %v2900 = vunpack.c.l.b16 %v2884
        %v2901 = vunpack.c.l.b16 %v2885
        %v2902 = vunpack.c.l.b16 %v2886
        %v2903 = vpack.c.b16 %v2896, %v2895
        %v2904 = vpack.c.b16 %v2898, %v2897
        %v2905 = vpack.c.b16 %v2900, %v2899
        %v2906 = vpack.c.b16 %v2902, %v2901
        %vm2911 = vcmask 523264
        %v2913 = vsel %vm2911, %v2863, 0
        %v2916 = vsel %vm2911, %v2864, 0
        %v2919 = vsel %vm2911, %v2865, 0
        %v2922 = vsel %vm2911, %v2866, 0
        %v2925 = vsel %vm2911, %v2867, 0
        %v2928 = vsel %vm2911, %v2868, 0
        %v2931 = vsel %vm2911, %v2869, 0
        %v2934 = vsel %vm2911, %v2870, 0
        %v2937 = vsel %vm2911, %v2871, 0
        %v2940 = vsel %vm2911, %v2872, 0
        %v2943 = vsel %vm2911, %v2873, 0
        %v2946 = vsel %vm2911, %v2874, 0
        %v2949 = vsel %vm2911, %v2875, 0
        %v2952 = vsel %vm2911, %v2876, 0
        %v2955 = vsel %vm2911, %v2877, 0
        %v2958 = vsel %vm2911, %v2878, 0
        %2960 = vmatprep.subr.bf16.mxu0 0
        %2961 = vmatpush1.bf16.msra.mxu0 0
        %2962 = vmatprep.subr.bf16.mxu0 0
        %2963 = vmatpush1.bf16.msra.mxu0 0
        %2964 = vmatprep.subr.bf16.mxu0 0
        %2965 = vmatpush1.bf16.msra.mxu0 0
        %2966 = vmatprep.subr.bf16.mxu0 0
        %2967 = vmatpush1.bf16.msra.mxu0 0
        %2968 = vmatprep.subr.bf16.mxu0 0
        %2969 = vmatpush1.bf16.msra.mxu0 %v2906
        %2970 = vmatprep.subr.bf16.mxu0 0
        %2971 = vmatpush1.bf16.msra.mxu0 %v2905
        %2972 = vmatprep.subr.bf16.mxu0 0
        %2973 = vmatpush1.bf16.msra.mxu0 %v2904
        %2974 = vmatprep.subr.bf16.mxu0 0
        %2975 = vmatpush1.bf16.msra.mxu0 %v2903
        %2976 = vmatprep.subr.bf16.mxu0 0
        %2977 = vmatpush2.bf16.msra.mxu0 0
        %2978 = vmatprep.subr.bf16.mxu0 0
        %2979 = vmatpush2.bf16.msra.mxu0 0
        %2980 = vmatprep.subr.bf16.mxu0 0
        %2981 = vmatpush2.bf16.msra.mxu0 0
        %2982 = vmatprep.subr.bf16.mxu0 0
        %2983 = vmatpush2.bf16.msra.mxu0 0
        %2984 = vmatprep.subr.bf16.mxu0 0
        %2985 = vmatpush2.bf16.msra.mxu0 0
        %2986 = vmatprep.subr.bf16.mxu0 0
        %2987 = vmatpush2.bf16.msra.mxu0 0
        %2988 = vmatprep.subr.bf16.mxu0 0
        %2989 = vmatpush2.bf16.msra.mxu0 0
        %2990 = vmatprep.subr.bf16.mxu0 0
        %2991 = vmatpush2.bf16.msra.mxu0 0
        %2992 = vmatprep.mubr.bf16.mxu0 0
        %2993 = vmatmul.mubr.bf16.gmra.mxu0 %v2913
        %v2994 = vpop.f32.mrf.mxu0
        %v2995 = vadd.f32 0.0, %v2994
        %v2996 = vpop.f32.mrf.mxu0
        %v2997 = vpop.f32.mrf.mxu0
        %v2998 = vadd.f32 0.0, %v2997
        %v2999 = vpop.f32.mrf.mxu0
        %3000 = vmatprep.mubr.bf16.mxu0 0
        %3001 = vmatmul.mubr.bf16.gmra.mxu0 %v2916
        %v3002 = vpop.f32.mrf.mxu0
        %v3003 = vadd.f32 0.0, %v3002
        %v3004 = vpop.f32.mrf.mxu0
        %v3005 = vpop.f32.mrf.mxu0
        %v3006 = vadd.f32 0.0, %v3005
        %v3007 = vpop.f32.mrf.mxu0
        %3008 = vmatprep.mubr.bf16.mxu0 0
        %3009 = vmatmul.mubr.bf16.gmra.mxu0 %v2919
        %v3010 = vpop.f32.mrf.mxu0
        %v3011 = vadd.f32 0.0, %v3010
        %v3012 = vpop.f32.mrf.mxu0
        %v3013 = vpop.f32.mrf.mxu0
        %v3014 = vadd.f32 0.0, %v3013
        %v3015 = vpop.f32.mrf.mxu0
        %3016 = vmatprep.mubr.bf16.mxu0 0
        %3017 = vmatmul.mubr.bf16.gmra.mxu0 %v2922
        %v3018 = vpop.f32.mrf.mxu0
        %v3019 = vadd.f32 0.0, %v3018
        %v3020 = vpop.f32.mrf.mxu0
        %v3021 = vpop.f32.mrf.mxu0
        %v3022 = vadd.f32 0.0, %v3021
        %v3023 = vpop.f32.mrf.mxu0
        %3024 = vmatprep.mubr.bf16.mxu0 0
        %3025 = vmatmul.mubr.bf16.gmra.mxu0 %v2925
        %v3026 = vpop.f32.mrf.mxu0
        %v3027 = vadd.f32 0.0, %v3026
        %v3028 = vpop.f32.mrf.mxu0
        %v3029 = vpop.f32.mrf.mxu0
        %v3030 = vadd.f32 0.0, %v3029
        %v3031 = vpop.f32.mrf.mxu0
        %3032 = vmatprep.mubr.bf16.mxu0 0
        %3033 = vmatmul.mubr.bf16.gmra.mxu0 %v2928
        %v3034 = vpop.f32.mrf.mxu0
        %v3035 = vadd.f32 0.0, %v3034
        %v3036 = vpop.f32.mrf.mxu0
        %v3037 = vpop.f32.mrf.mxu0
        %v3038 = vadd.f32 0.0, %v3037
        %v3039 = vpop.f32.mrf.mxu0
        %3040 = vmatprep.mubr.bf16.mxu0 0
        %3041 = vmatmul.mubr.bf16.gmra.mxu0 %v2931
        %v3042 = vpop.f32.mrf.mxu0
        %v3043 = vadd.f32 0.0, %v3042
        %v3044 = vpop.f32.mrf.mxu0
        %v3045 = vpop.f32.mrf.mxu0
        %v3046 = vadd.f32 0.0, %v3045
        %v3047 = vpop.f32.mrf.mxu0
        %3048 = vmatprep.mubr.bf16.mxu0 0
        %3049 = vmatmul.mubr.bf16.gmra.mxu0 %v2934
        %v3050 = vpop.f32.mrf.mxu0
        %v3051 = vadd.f32 0.0, %v3050
        %v3052 = vpop.f32.mrf.mxu0
        %v3053 = vpop.f32.mrf.mxu0
        %v3054 = vadd.f32 0.0, %v3053
        %v3055 = vpop.f32.mrf.mxu0
        %3056 = vmatprep.mubr.bf16.mxu0 0
        %3057 = vmatmul.mubr.bf16.gmra.mxu0 %v2937
        %v3058 = vpop.f32.mrf.mxu0
        %v3059 = vadd.f32 0.0, %v3058
        %v3060 = vpop.f32.mrf.mxu0
        %v3061 = vpop.f32.mrf.mxu0
        %v3062 = vadd.f32 0.0, %v3061
        %v3063 = vpop.f32.mrf.mxu0
        %3064 = vmatprep.mubr.bf16.mxu0 0
        %3065 = vmatmul.mubr.bf16.gmra.mxu0 %v2940
        %v3066 = vpop.f32.mrf.mxu0
        %v3067 = vadd.f32 0.0, %v3066
        %v3068 = vpop.f32.mrf.mxu0
        %v3069 = vpop.f32.mrf.mxu0
        %v3070 = vadd.f32 0.0, %v3069
        %v3071 = vpop.f32.mrf.mxu0
        %3072 = vmatprep.mubr.bf16.mxu0 0
        %3073 = vmatmul.mubr.bf16.gmra.mxu0 %v2943
        %v3074 = vpop.f32.mrf.mxu0
        %v3075 = vadd.f32 0.0, %v3074
        %v3076 = vpop.f32.mrf.mxu0
        %v3077 = vpop.f32.mrf.mxu0
        %v3078 = vadd.f32 0.0, %v3077
        %v3079 = vpop.f32.mrf.mxu0
        %3080 = vmatprep.mubr.bf16.mxu0 0
        %3081 = vmatmul.mubr.bf16.gmra.mxu0 %v2946
        %v3082 = vpop.f32.mrf.mxu0
        %v3083 = vadd.f32 0.0, %v3082
        %v3084 = vpop.f32.mrf.mxu0
        %v3085 = vpop.f32.mrf.mxu0
        %v3086 = vadd.f32 0.0, %v3085
        %v3087 = vpop.f32.mrf.mxu0
        %3088 = vmatprep.mubr.bf16.mxu0 0
        %3089 = vmatmul.mubr.bf16.gmra.mxu0 %v2949
        %v3090 = vpop.f32.mrf.mxu0
        %v3091 = vadd.f32 0.0, %v3090
        %v3092 = vpop.f32.mrf.mxu0
        %v3093 = vpop.f32.mrf.mxu0
        %v3094 = vadd.f32 0.0, %v3093
        %v3095 = vpop.f32.mrf.mxu0
        %3096 = vmatprep.mubr.bf16.mxu0 0
        %3097 = vmatmul.mubr.bf16.gmra.mxu0 %v2952
        %v3098 = vpop.f32.mrf.mxu0
        %v3099 = vadd.f32 0.0, %v3098
        %v3100 = vpop.f32.mrf.mxu0
        %v3101 = vpop.f32.mrf.mxu0
        %v3102 = vadd.f32 0.0, %v3101
        %v3103 = vpop.f32.mrf.mxu0
        %3104 = vmatprep.mubr.bf16.mxu0 0
        %3105 = vmatmul.mubr.bf16.gmra.mxu0 %v2955
        %v3106 = vpop.f32.mrf.mxu0
        %v3107 = vadd.f32 0.0, %v3106
        %v3108 = vpop.f32.mrf.mxu0
        %v3109 = vpop.f32.mrf.mxu0
        %v3110 = vadd.f32 0.0, %v3109
        %v3111 = vpop.f32.mrf.mxu0
        %3112 = vmatprep.mubr.bf16.mxu0 0
        %3113 = vmatmul.mubr.bf16.gmra.mxu0 %v2958
        %v3114 = vpop.f32.mrf.mxu0
        %v3115 = vadd.f32 0.0, %v3114
        %v3116 = vpop.f32.mrf.mxu0
        %v3117 = vpop.f32.mrf.mxu0
        %v3118 = vadd.f32 0.0, %v3117
        %v3119 = vpop.f32.mrf.mxu0
        %3120 = vdwg.mxu0
        %v3121 = vpack.c.bf16 %v2998, %v2995
        %v3122 = vpack.c.bf16 %v3006, %v3003
        %v3123 = vpack.c.bf16 %v3014, %v3011
        %v3124 = vpack.c.bf16 %v3022, %v3019
        %v3125 = vpack.c.bf16 %v3030, %v3027
        %v3126 = vpack.c.bf16 %v3038, %v3035
        %v3127 = vpack.c.bf16 %v3046, %v3043
        %v3128 = vpack.c.bf16 %v3054, %v3051
        %v3129 = vpack.c.bf16 %v3062, %v3059
        %v3130 = vpack.c.bf16 %v3070, %v3067
        %v3131 = vpack.c.bf16 %v3078, %v3075
        %v3132 = vpack.c.bf16 %v3086, %v3083
        %v3133 = vpack.c.bf16 %v3094, %v3091
        %v3134 = vpack.c.bf16 %v3102, %v3099
        %v3135 = vpack.c.bf16 %v3110, %v3107
        %v3136 = vpack.c.bf16 %v3118, %v3115
        %3169 = vrot.lane.b32.xlu0 %v2995, 96
        %v3170 = vpop.permute.xlu0 %3169
        %3171 = vrot.lane.b32.xlu0 %v2998, 96
        %v3172 = vpop.permute.xlu0 %3171
        %3173 = vrot.lane.b32.xlu0 %v3003, 96
        %v3174 = vpop.permute.xlu0 %3173
        %3175 = vrot.lane.b32.xlu0 %v3006, 96
        %v3176 = vpop.permute.xlu0 %3175
        %3177 = vrot.lane.b32.xlu0 %v3011, 96
        %v3178 = vpop.permute.xlu0 %3177
        %3179 = vrot.lane.b32.xlu0 %v3014, 96
        %v3180 = vpop.permute.xlu0 %3179
        %3181 = vrot.lane.b32.xlu0 %v3019, 96
        %v3182 = vpop.permute.xlu0 %3181
        %3183 = vrot.lane.b32.xlu0 %v3022, 96
        %v3184 = vpop.permute.xlu0 %3183
        %3185 = vrot.lane.b32.xlu0 %v3027, 96
        %v3186 = vpop.permute.xlu0 %3185
        %3187 = vrot.lane.b32.xlu0 %v3030, 96
        %v3188 = vpop.permute.xlu0 %3187
        %3189 = vrot.lane.b32.xlu0 %v3035, 96
        %v3190 = vpop.permute.xlu0 %3189
        %3191 = vrot.lane.b32.xlu0 %v3038, 96
        %v3192 = vpop.permute.xlu0 %3191
        %3193 = vrot.lane.b32.xlu0 %v3043, 96
        %v3194 = vpop.permute.xlu0 %3193
        %3195 = vrot.lane.b32.xlu0 %v3046, 96
        %v3196 = vpop.permute.xlu0 %3195
        %3197 = vrot.lane.b32.xlu0 %v3051, 96
        %v3198 = vpop.permute.xlu0 %3197
        %3199 = vrot.lane.b32.xlu0 %v3054, 96
        %v3200 = vpop.permute.xlu0 %3199
        %3201 = vrot.lane.b32.xlu0 %v3059, 96
        %v3202 = vpop.permute.xlu0 %3201
        %3203 = vrot.lane.b32.xlu0 %v3062, 96
        %v3204 = vpop.permute.xlu0 %3203
        %3205 = vrot.lane.b32.xlu0 %v3067, 96
        %v3206 = vpop.permute.xlu0 %3205
        %3207 = vrot.lane.b32.xlu0 %v3070, 96
        %v3208 = vpop.permute.xlu0 %3207
        %3209 = vrot.lane.b32.xlu0 %v3075, 96
        %v3210 = vpop.permute.xlu0 %3209
        %3211 = vrot.lane.b32.xlu0 %v3078, 96
        %v3212 = vpop.permute.xlu0 %3211
        %3213 = vrot.lane.b32.xlu0 %v3083, 96
        %v3214 = vpop.permute.xlu0 %3213
        %3215 = vrot.lane.b32.xlu0 %v3086, 96
        %v3216 = vpop.permute.xlu0 %3215
        %3217 = vrot.lane.b32.xlu0 %v3091, 96
        %v3218 = vpop.permute.xlu0 %3217
        %3219 = vrot.lane.b32.xlu0 %v3094, 96
        %v3220 = vpop.permute.xlu0 %3219
        %3221 = vrot.lane.b32.xlu0 %v3099, 96
        %v3222 = vpop.permute.xlu0 %3221
        %3223 = vrot.lane.b32.xlu0 %v3102, 96
        %v3224 = vpop.permute.xlu0 %3223
        %3225 = vrot.lane.b32.xlu0 %v3107, 96
        %v3226 = vpop.permute.xlu0 %3225
        %3227 = vrot.lane.b32.xlu0 %v3110, 96
        %v3228 = vpop.permute.xlu0 %3227
        %3229 = vrot.lane.b32.xlu0 %v3115, 96
        %v3230 = vpop.permute.xlu0 %3229
        %3231 = vrot.lane.b32.xlu0 %v3118, 96
        %v3232 = vpop.permute.xlu0 %3231
        %3265 = vmatprep.subr.bf16.mxu0 0
        %3266 = vmatpush1.bf16.msra.mxu0 %v3128
        %3267 = vmatprep.subr.bf16.mxu0 0
        %3268 = vmatpush1.bf16.msra.mxu0 %v3127
        %3269 = vmatprep.subr.bf16.mxu0 0
        %3270 = vmatpush1.bf16.msra.mxu0 %v3126
        %3271 = vmatprep.subr.bf16.mxu0 0
        %3272 = vmatpush1.bf16.msra.mxu0 %v3125
        %3273 = vmatprep.subr.bf16.mxu0 0
        %3274 = vmatpush1.bf16.msra.mxu0 %v3124
        %3275 = vmatprep.subr.bf16.mxu0 0
        %3276 = vmatpush1.bf16.msra.mxu0 %v3123
        %3277 = vmatprep.subr.bf16.mxu0 0
        %3278 = vmatpush1.bf16.msra.mxu0 %v3122
        %3279 = vmatprep.subr.bf16.mxu0 0
        %3280 = vmatpush1.bf16.msra.mxu0 %v3121
        %3281 = vmatprep.subr.bf16.mxu0 0
        %3282 = vmatpush2.bf16.msra.mxu0 %v3136
        %3283 = vmatprep.subr.bf16.mxu0 0
        %3284 = vmatpush2.bf16.msra.mxu0 %v3135
        %3285 = vmatprep.subr.bf16.mxu0 0
        %3286 = vmatpush2.bf16.msra.mxu0 %v3134
        %3287 = vmatprep.subr.bf16.mxu0 0
        %3288 = vmatpush2.bf16.msra.mxu0 %v3133
        %3289 = vmatprep.subr.bf16.mxu0 0
        %3290 = vmatpush2.bf16.msra.mxu0 %v3132
        %3291 = vmatprep.subr.bf16.mxu0 0
        %3292 = vmatpush2.bf16.msra.mxu0 %v3131
        %3293 = vmatprep.subr.bf16.mxu0 0
        %3294 = vmatpush2.bf16.msra.mxu0 %v3130
        %3295 = vmatprep.subr.bf16.mxu0 0
        %3296 = vmatpush2.bf16.msra.mxu0 %v3129
        %3297 = vmatprep.mubr.bf16.mxu0 %v573
        %3298 = vmatmul.mubr.bf16.gmra.mxu0 %v572
        %v3299 = vpop.f32.mrf.mxu0
        %v3300 = vadd.f32 %v3170, %v3299
        %v3301 = vpop.f32.mrf.mxu0
        %v3302 = vpop.f32.mrf.mxu0
        %v3303 = vadd.f32 %v3172, %v3302
        %v3304 = vpop.f32.mrf.mxu0
        %3305 = vmatprep.mubr.bf16.mxu0 %v575
        %3306 = vmatmul.mubr.bf16.gmra.mxu0 %v574
        %v3307 = vpop.f32.mrf.mxu0
        %v3308 = vadd.f32 %v3174, %v3307
        %v3309 = vpop.f32.mrf.mxu0
        %v3310 = vpop.f32.mrf.mxu0
        %v3311 = vadd.f32 %v3176, %v3310
        %v3312 = vpop.f32.mrf.mxu0
        %3313 = vmatprep.mubr.bf16.mxu0 %v577
        %3314 = vmatmul.mubr.bf16.gmra.mxu0 %v576
        %v3315 = vpop.f32.mrf.mxu0
        %v3316 = vadd.f32 %v3178, %v3315
        %v3317 = vpop.f32.mrf.mxu0
        %v3318 = vpop.f32.mrf.mxu0
        %v3319 = vadd.f32 %v3180, %v3318
        %v3320 = vpop.f32.mrf.mxu0
        %3321 = vmatprep.mubr.bf16.mxu0 %v579
        %3322 = vmatmul.mubr.bf16.gmra.mxu0 %v578
        %v3323 = vpop.f32.mrf.mxu0
        %v3324 = vadd.f32 %v3182, %v3323
        %v3325 = vpop.f32.mrf.mxu0
        %v3326 = vpop.f32.mrf.mxu0
        %v3327 = vadd.f32 %v3184, %v3326
        %v3328 = vpop.f32.mrf.mxu0
        %3329 = vmatprep.mubr.bf16.mxu0 %v581
        %3330 = vmatmul.mubr.bf16.gmra.mxu0 %v580
        %v3331 = vpop.f32.mrf.mxu0
        %v3332 = vadd.f32 %v3186, %v3331
        %v3333 = vpop.f32.mrf.mxu0
        %v3334 = vpop.f32.mrf.mxu0
        %v3335 = vadd.f32 %v3188, %v3334
        %v3336 = vpop.f32.mrf.mxu0
        %3337 = vmatprep.mubr.bf16.mxu0 %v583
        %3338 = vmatmul.mubr.bf16.gmra.mxu0 %v582
        %v3339 = vpop.f32.mrf.mxu0
        %v3340 = vadd.f32 %v3190, %v3339
        %v3341 = vpop.f32.mrf.mxu0
        %v3342 = vpop.f32.mrf.mxu0
        %v3343 = vadd.f32 %v3192, %v3342
        %v3344 = vpop.f32.mrf.mxu0
        %3345 = vmatprep.mubr.bf16.mxu0 %v585
        %3346 = vmatmul.mubr.bf16.gmra.mxu0 %v584
        %v3347 = vpop.f32.mrf.mxu0
        %v3348 = vadd.f32 %v3194, %v3347
        %v3349 = vpop.f32.mrf.mxu0
        %v3350 = vpop.f32.mrf.mxu0
        %v3351 = vadd.f32 %v3196, %v3350
        %v3352 = vpop.f32.mrf.mxu0
        %3353 = vmatprep.mubr.bf16.mxu0 %v587
        %3354 = vmatmul.mubr.bf16.gmra.mxu0 %v586
        %v3355 = vpop.f32.mrf.mxu0
        %v3356 = vadd.f32 %v3198, %v3355
        %v3357 = vpop.f32.mrf.mxu0
        %v3358 = vpop.f32.mrf.mxu0
        %v3359 = vadd.f32 %v3200, %v3358
        %v3360 = vpop.f32.mrf.mxu0
        %3361 = vmatprep.mubr.bf16.mxu0 %v589
        %3362 = vmatmul.mubr.bf16.gmra.mxu0 %v588
        %v3363 = vpop.f32.mrf.mxu0
        %v3364 = vadd.f32 %v3202, %v3363
        %v3365 = vpop.f32.mrf.mxu0
        %v3366 = vpop.f32.mrf.mxu0
        %v3367 = vadd.f32 %v3204, %v3366
        %v3368 = vpop.f32.mrf.mxu0
        %3369 = vmatprep.mubr.bf16.mxu0 %v591
        %3370 = vmatmul.mubr.bf16.gmra.mxu0 %v590
        %v3371 = vpop.f32.mrf.mxu0
        %v3372 = vadd.f32 %v3206, %v3371
        %v3373 = vpop.f32.mrf.mxu0
        %v3374 = vpop.f32.mrf.mxu0
        %v3375 = vadd.f32 %v3208, %v3374
        %v3376 = vpop.f32.mrf.mxu0
        %3377 = vmatprep.mubr.bf16.mxu0 %v593
        %3378 = vmatmul.mubr.bf16.gmra.mxu0 %v592
        %v3379 = vpop.f32.mrf.mxu0
        %v3380 = vadd.f32 %v3210, %v3379
        %v3381 = vpop.f32.mrf.mxu0
        %v3382 = vpop.f32.mrf.mxu0
        %v3383 = vadd.f32 %v3212, %v3382
        %v3384 = vpop.f32.mrf.mxu0
        %3385 = vmatprep.mubr.bf16.mxu0 %v595
        %3386 = vmatmul.mubr.bf16.gmra.mxu0 %v594
        %v3387 = vpop.f32.mrf.mxu0
        %v3388 = vadd.f32 %v3214, %v3387
        %v3389 = vpop.f32.mrf.mxu0
        %v3390 = vpop.f32.mrf.mxu0
        %v3391 = vadd.f32 %v3216, %v3390
        %v3392 = vpop.f32.mrf.mxu0
        %3393 = vmatprep.mubr.bf16.mxu0 %v597
        %3394 = vmatmul.mubr.bf16.gmra.mxu0 %v596
        %v3395 = vpop.f32.mrf.mxu0
        %v3396 = vadd.f32 %v3218, %v3395
        %v3397 = vpop.f32.mrf.mxu0
        %v3398 = vpop.f32.mrf.mxu0
        %v3399 = vadd.f32 %v3220, %v3398
        %v3400 = vpop.f32.mrf.mxu0
        %3401 = vmatprep.mubr.bf16.mxu0 %v599
        %3402 = vmatmul.mubr.bf16.gmra.mxu0 %v598
        %v3403 = vpop.f32.mrf.mxu0
        %v3404 = vadd.f32 %v3222, %v3403
        %v3405 = vpop.f32.mrf.mxu0
        %v3406 = vpop.f32.mrf.mxu0
        %v3407 = vadd.f32 %v3224, %v3406
        %v3408 = vpop.f32.mrf.mxu0
        %3409 = vmatprep.mubr.bf16.mxu0 %v601
        %3410 = vmatmul.mubr.bf16.gmra.mxu0 %v600
        %v3411 = vpop.f32.mrf.mxu0
        %v3412 = vadd.f32 %v3226, %v3411
        %v3413 = vpop.f32.mrf.mxu0
        %v3414 = vpop.f32.mrf.mxu0
        %v3415 = vadd.f32 %v3228, %v3414
        %v3416 = vpop.f32.mrf.mxu0
        %3417 = vmatprep.mubr.bf16.mxu0 %v603
        %3418 = vmatmul.mubr.bf16.gmra.mxu0 %v602
        %v3419 = vpop.f32.mrf.mxu0
        %v3420 = vadd.f32 %v3230, %v3419
        %v3421 = vpop.f32.mrf.mxu0
        %v3422 = vpop.f32.mrf.mxu0
        %v3423 = vadd.f32 %v3232, %v3422
        %v3424 = vpop.f32.mrf.mxu0
        %3425 = vdwg.mxu0
        %v3427 = vlaneseq
        %v3428 = vshrl.u32 %v3427, 7
        %v3429 = vsub.s32 0, %v3428
        %v3430 = vrot.slane %v2862, %v3429
        %v3432 = vadd.f32 %v3300, %v3430
        %v3433 = vadd.f32 %v3303, %v3430
        %v3434 = vadd.f32 %v3308, %v3430
        %v3435 = vadd.f32 %v3311, %v3430
        %v3436 = vadd.f32 %v3316, %v3430
        %v3437 = vadd.f32 %v3319, %v3430
        %v3438 = vadd.f32 %v3324, %v3430
        %v3439 = vadd.f32 %v3327, %v3430
        %v3440 = vadd.f32 %v3332, %v3430
        %v3441 = vadd.f32 %v3335, %v3430
        %v3442 = vadd.f32 %v3340, %v3430
        %v3443 = vadd.f32 %v3343, %v3430
        %v3444 = vadd.f32 %v3348, %v3430
        %v3445 = vadd.f32 %v3351, %v3430
        %v3446 = vadd.f32 %v3356, %v3430
        %v3447 = vadd.f32 %v3359, %v3430
        %v3448 = vadd.f32 %v3364, %v3430
        %v3449 = vadd.f32 %v3367, %v3430
        %v3450 = vadd.f32 %v3372, %v3430
        %v3451 = vadd.f32 %v3375, %v3430
        %v3452 = vadd.f32 %v3380, %v3430
        %v3453 = vadd.f32 %v3383, %v3430
        %v3454 = vadd.f32 %v3388, %v3430
        %v3455 = vadd.f32 %v3391, %v3430
        %v3456 = vadd.f32 %v3396, %v3430
        %v3457 = vadd.f32 %v3399, %v3430
        %v3458 = vadd.f32 %v3404, %v3430
        %v3459 = vadd.f32 %v3407, %v3430
        %v3460 = vadd.f32 %v3412, %v3430
        %v3461 = vadd.f32 %v3415, %v3430
        %v3462 = vadd.f32 %v3420, %v3430
        %v3463 = vadd.f32 %v3423, %v3430
        %v3464 = vmax.f32 %v3432, 0.0
        %v3465 = vmax.f32 %v3433, 0.0
        %v3466 = vmax.f32 %v3434, 0.0
        %v3467 = vmax.f32 %v3435, 0.0
        %v3468 = vmax.f32 %v3436, 0.0
        %v3469 = vmax.f32 %v3437, 0.0
        %v3470 = vmax.f32 %v3438, 0.0
        %v3471 = vmax.f32 %v3439, 0.0
        %v3472 = vmax.f32 %v3440, 0.0
        %v3473 = vmax.f32 %v3441, 0.0
        %v3474 = vmax.f32 %v3442, 0.0
        %v3475 = vmax.f32 %v3443, 0.0
        %v3476 = vmax.f32 %v3444, 0.0
        %v3477 = vmax.f32 %v3445, 0.0
        %v3478 = vmax.f32 %v3446, 0.0
        %v3479 = vmax.f32 %v3447, 0.0
        %v3480 = vmax.f32 %v3448, 0.0
        %v3481 = vmax.f32 %v3449, 0.0
        %v3482 = vmax.f32 %v3450, 0.0
        %v3483 = vmax.f32 %v3451, 0.0
        %v3484 = vmax.f32 %v3452, 0.0
        %v3485 = vmax.f32 %v3453, 0.0
        %v3486 = vmax.f32 %v3454, 0.0
        %v3487 = vmax.f32 %v3455, 0.0
        %v3488 = vmax.f32 %v3456, 0.0
        %v3489 = vmax.f32 %v3457, 0.0
        %v3490 = vmax.f32 %v3458, 0.0
        %v3491 = vmax.f32 %v3459, 0.0
        %v3492 = vmax.f32 %v3460, 0.0
        %v3493 = vmax.f32 %v3461, 0.0
        %v3494 = vmax.f32 %v3462, 0.0
        %v3495 = vmax.f32 %v3463, 0.0
        %v3496 = vld [vmem:[%s352] sm:$0xff]
        %v3497 = vpack.c.bf16 %v3465, %v3464
        %v3498 = vpack.c.bf16 %v3467, %v3466
        %v3499 = vpack.c.bf16 %v3469, %v3468
        %v3500 = vpack.c.bf16 %v3471, %v3470
        %v3501 = vpack.c.bf16 %v3473, %v3472
        %v3502 = vpack.c.bf16 %v3475, %v3474
        %v3503 = vpack.c.bf16 %v3477, %v3476
        %v3504 = vpack.c.bf16 %v3479, %v3478
        %v3505 = vpack.c.bf16 %v3481, %v3480
        %v3506 = vpack.c.bf16 %v3483, %v3482
        %v3507 = vpack.c.bf16 %v3485, %v3484
        %v3508 = vpack.c.bf16 %v3487, %v3486
        %v3509 = vpack.c.bf16 %v3489, %v3488
        %v3510 = vpack.c.bf16 %v3491, %v3490
        %v3511 = vpack.c.bf16 %v3493, %v3492
        %v3512 = vpack.c.bf16 %v3495, %v3494
        %v3514 = vunpack.c.l.b16 %v3496
        %v3515 = vunpack.c.h.b16 %v3496
        %v3516 = vpack.c.b16 %v3514, %v3514
        %v3517 = vpack.c.b16 %v3515, %v3515
        %3520 = vmatprep.subr.bf16.mxu0 0
        %3521 = vmatpush1.bf16.msra.mxu0 %v3504
        %3522 = vmatprep.subr.bf16.mxu0 0
        %3523 = vmatpush1.bf16.msra.mxu0 %v3503
        %3524 = vmatprep.subr.bf16.mxu0 0
        %3525 = vmatpush1.bf16.msra.mxu0 %v3502
        %3526 = vmatprep.subr.bf16.mxu0 0
        %3527 = vmatpush1.bf16.msra.mxu0 %v3501
        %3528 = vmatprep.subr.bf16.mxu0 0
        %3529 = vmatpush1.bf16.msra.mxu0 %v3500
        %3530 = vmatprep.subr.bf16.mxu0 0
        %3531 = vmatpush1.bf16.msra.mxu0 %v3499
        %3532 = vmatprep.subr.bf16.mxu0 0
        %3533 = vmatpush1.bf16.msra.mxu0 %v3498
        %3534 = vmatprep.subr.bf16.mxu0 0
        %3535 = vmatpush1.bf16.msra.mxu0 %v3497
        %3536 = vmatprep.subr.bf16.mxu0 0
        %3537 = vmatpush2.bf16.msra.mxu0 %v3512
        %3538 = vmatprep.subr.bf16.mxu0 0
        %3539 = vmatpush2.bf16.msra.mxu0 %v3511
        %3540 = vmatprep.subr.bf16.mxu0 0
        %3541 = vmatpush2.bf16.msra.mxu0 %v3510
        %3542 = vmatprep.subr.bf16.mxu0 0
        %3543 = vmatpush2.bf16.msra.mxu0 %v3509
        %3544 = vmatprep.subr.bf16.mxu0 0
        %3545 = vmatpush2.bf16.msra.mxu0 %v3508
        %3546 = vmatprep.subr.bf16.mxu0 0
        %3547 = vmatpush2.bf16.msra.mxu0 %v3507
        %3548 = vmatprep.subr.bf16.mxu0 0
        %3549 = vmatpush2.bf16.msra.mxu0 %v3506
        %3550 = vmatprep.subr.bf16.mxu0 0
        %3551 = vmatpush2.bf16.msra.mxu0 %v3505
        %3552 = vmatprep.mubr.bf16.mxu0 %v3517
        %3553 = vmatmul.mubr.bf16.gmra.mxu0 %v3516
        %v3554 = vpop.f32.mrf.mxu0
        %v3555 = vadd.f32 0.0, %v3554
        %v3556 = vpop.f32.mrf.mxu0
        %v3557 = vpop.f32.mrf.mxu0
        %v3558 = vpop.f32.mrf.mxu0
        %3559 = vdwg.mxu0
        %v3560 = vld [vmem:[%s7 + $0x5] sm:$0x1]
        %v3561 = vld [vmem:[%s7 + $0x6] sm:$0x1]
        %v3563 = vlaneseq
        %v3564 = vshrl.u32 %v3563, 7
        %v3565 = vsub.s32 0, %v3564
        %v3566 = vrot.slane %v3560, %v3565
        %v3568 = vmul.f32 %v3555, %v3566
        %v3569 = vsel %vm937, %v3568, 0.0
        %3570 = vadd.xlane.f32.xlu0 %v3569
        %v3571 = vpop.xlane.xlu0 %3570
        %v3573 = vlaneseq
        %v3574 = vshrl.u32 %v3573, 7
        %v3575 = vsub.s32 0, %v3574
        %v3576 = vrot.slane %v3561, %v3575
        %v3578 = vadd.f32 %v3571, %v3576
        %v3579 = vsub.f32 0.0, %v3578
        %v3580 = vmul.f32 %v3579, 1.442695
        %v3581 = vpow.pop %v3580
        %v3582 = vadd.f32 %v3581, 1.0
        %v3583 = vrcp.pop %v3582
        %vm3584 = vcmask 7168
        %3585 = vst.msk [vmem:[%s410] sm:$0xff] %vm3584, %v3583
        %p3586 = scmp.lt.s32.totalorder %s26, 1
        %s3587 = scalar_select %p3586, %s26, 1
        %s3588 = smul.addr %s3587, 8
        %s3589 = scalar_lea.vmem %s8, %s3588
        // Predicated region
        $region69: #{tpu_custom_call.1} parent=51 // pred_check
          %p3590 = pneg %p227
        $region70: #{tpu_custom_call.1} parent=51 // pred_check_branch
          %3592 = sbr.rel (%p3590) target = $region72
        $region71: #{tpu_custom_call.1} parent=51 // pred_region
          _
        $region72: #{tpu_custom_call.1} parent=51 // pred_fallthru
          _
      $region52: #{tpu_custom_call.1} parent=5 // pred_fallthru
        _
      %p3593 = scmp.le.s32.totalorder 2, %s21
      // Predicated region
      $region73: #{tpu_custom_call.1} parent=5 // pred_check
        %p3594 = pneg %p3593
      $region74: #{tpu_custom_call.1} parent=5 // pred_check_branch
        %3596 = sbr.rel (%p3594) target = $region76
      $region75: #{tpu_custom_call.1} parent=5 // pred_region
        %s3597 = ssub.s32 %s21, 2
        // Predicated region
        $region77: #{tpu_custom_call.1} parent=75 // pred_check
          %p3598 = pneg %p233
        $region78: #{tpu_custom_call.1} parent=75 // pred_check_branch
          %3600 = sbr.rel (%p3598) target = $region80
        $region79: #{tpu_custom_call.1} parent=75 // pred_region
          %p3601 = scmp.lt.s32.totalorder %s27, 1
          %s3602 = scalar_select %p3601, %s27, 1
          %s3603 = smul.addr %s3602, 8
          %s3604 = scalar_lea.vmem %s8, %s3603
        $region80: #{tpu_custom_call.1} parent=75 // pred_fallthru
          _
      $region76: #{tpu_custom_call.1} parent=5 // pred_fallthru
        _
    $region6: #{tpu_custom_call.1} parent=1 // loop_footer
      %s25 = sadd.s32 1, %s21
    $region7: #{tpu_custom_call.1} parent=1 // loop_footer_branch
      %20 = sbr.rel target = $region3
    $region8: #{tpu_custom_call.1} parent=1 // loop_exit
      _
    %3605 = vsyncpa [#allocation3], 1
    %s3606 = scalar_lea.sflag [#allocation3], 1
    %3607 = vsyncpa %s3606, 1
    %3608 = vsyncpa [#allocation5], 1
    %s3609 = scalar_lea.sflag [#allocation5], 1
    %3610 = vsyncpa %s3609, 1
    %3611 = vsyncpa [#allocation8], 1

</llo_original>
